<compile_context>
chip_gen: v5e
topology: v5e:2x2
jax: 0.10.0
libtpu: 0.0.40
codegen_flags: <defaults>
</compile_context>

<pallas_src>
import functools

import jax
import jax.numpy as jnp
from jax.experimental import pallas as pl
from jax.experimental.pallas import tpu as pltpu

EPS = 1e-5
EXPANSION = 4
LANE = 128
MAX_TM_MM = 1024     # row tile cap for MXU matmul kernels
MAX_TM_EW = 1024     # row tile cap for elementwise (BN / residual) kernels


def _round_up(x, m):
    return (x + m - 1) // m * m


def _pick_tm(m, cap):
    """Largest row tile <= cap (multiple of 8) that divides m (no wrapper-side pad);
    fall back to a padded tiling only when m has no suitable divisor."""
    cap8 = max(8, min(cap, _round_up(m, 8)) // 8 * 8)
    for tm in range(cap8, 7, -8):
        if m % tm == 0:
            return tm, m
    tm = min(cap8, _round_up(m, 8))
    return tm, _round_up(m, tm)


@functools.lru_cache(maxsize=None)
def _vmem_limit_bytes():
    try:
        kind = jax.devices()[0].device_kind.lower()
    except Exception:
        return None
    if "v7" in kind:
        return 40 * 1024 * 1024        # 64 MiB physical on v7x: stay conservative
    if "v5" in kind or "v6" in kind:
        return 64 * 1024 * 1024        # 128 MiB physical: use it
    return None                        # older / unknown chips: keep compiler default


def _cparams(n_axes=1):
    kw = dict(dimension_semantics=("parallel",) * n_axes)
    vl = _vmem_limit_bytes()
    if vl is not None:
        kw["vmem_limit_bytes"] = vl
    return pltpu.CompilerParams(**kw)


def _pad_mat(w, rows, cols):
    return jnp.pad(w, ((0, rows - w.shape[0]), (0, cols - w.shape[1])))


# --------------------------------------------------------------------------- #
# Pallas kernels
# --------------------------------------------------------------------------- #
def _matmul_stats_kernel(*refs, pre_affine):
    """y = x @ w on the MXU (bf16 operands, f32 accumulation); y stored as bf16.
    When pre_affine: applies per-channel scale/bias + relu to x first (fuses the
    previous stage's BN+ReLU into this matmul).  Emits per-tile per-channel
    (sum, sumsq) of the f32 result for BatchNorm."""
    if pre_affine:
        x_ref, sb_ref, w_ref, y_ref, stats_ref = refs
        x = jnp.maximum(x_ref[...] * sb_ref[0:1, :] + sb_ref[1:2, :], 0.0)
        x = x.astype(jnp.bfloat16)
    else:
        x_ref, w_ref, y_ref, stats_ref = refs
        x = x_ref[...]
    y = jnp.dot(x, w_ref[...], preferred_element_type=jnp.float32)
    y_ref[...] = y.astype(y_ref.dtype)
    s1 = jnp.sum(y, axis=0, keepdims=True)
    s2 = jnp.sum(y * y, axis=0, keepdims=True)
    stats_ref[0] = jnp.concatenate([s1, s2], axis=0)


def _conv3x3_stats_kernel(xph_ref, w_ref, y_ref, stats_ref, *, stride, ho, wo):
    """3x3/stride conv for one image: the 9 shifted taps are concatenated along the
    contraction dimension (lane-aligned 128-channel segments) and contracted with the
    (9*Cin, Cout) weight in a single wide-K MXU matmul.  Also emits (sum, sumsq)."""
    cin = xph_ref.shape[-1]
    taps = []
    for dy in range(3):
        for dx in range(3):
            ph = (dy % stride) * stride + (dx % stride)
            qy, qx = dy // stride, dx // stride
            p = xph_ref[0, ph, qy:qy + ho, qx:qx + wo, :]
            taps.append(p.reshape(ho * wo, cin))
    panel = jnp.concatenate(taps, axis=-1)                      # (ho*wo, 9*cin) bf16
    y = jnp.dot(panel, w_ref[...], preferred_element_type=jnp.float32)
    y_ref[0] = y.astype(y_ref.dtype)
    s1 = jnp.sum(y, axis=0, keepdims=True)
    s2 = jnp.sum(y * y, axis=0, keepdims=True)
    stats_ref[0] = jnp.concatenate([s1, s2], axis=0)


def _bn_relu_kernel(y_ref, sb_ref, o_ref):
    """o = relu(y * scale + bias) (per channel), stored bf16."""
    o = jnp.maximum(y_ref[...] * sb_ref[0:1, :] + sb_ref[1:2, :], 0.0)
    o_ref[...] = o.astype(o_ref.dtype)


def _bn_residual_kernel(*refs, identity, is_last):
    """pre = BN(y3) + (BN(shortcut) | identity shortcut); out = relu(pre).
    preact is written only when is_last (compile-time)."""
    if identity:
        y_ref, sb_ref, r_ref = refs[:3]
        rest = refs[3:]
        res = r_ref[...].astype(jnp.float32)
    else:
        y_ref, sb_ref, r_ref, sbr_ref = refs[:4]
        rest = refs[4:]
        res = r_ref[...] * sbr_ref[0:1, :] + sbr_ref[1:2, :]
    pre = y_ref[...] * sb_ref[0:1, :] + sb_ref[1:2, :] + res
    if is_last:
        out_ref, pre_ref = rest
        pre_ref[...] = pre
    else:
        (out_ref,) = rest
    out_ref[...] = jnp.maximum(pre, 0.0)


# --------------------------------------------------------------------------- #
# pallas_call wrappers (row-tiled, lane-dense channels)
# --------------------------------------------------------------------------- #
def matmul_stats(x, w, sb=None):
    """x: (M, K) bf16, w: (K, C) bf16, optional sb: (2, K) f32 pre-affine (BN+ReLU fused
    on the input side).  Returns y (M, C) bf16 and stats (2, C) f32 (sum, sumsq)."""
    m, k = x.shape
    c = w.shape[1]
    tm, mp = _pick_tm(m, MAX_TM_MM)
    if sb is not None and mp != m:
        # Padded rows would pollute the BN stats after the fused affine+relu; rare
        # fallback: apply the affine in a separate pass instead.
        x = bn_relu(x, sb)
        sb = None
    if mp != m:
        x = jnp.pad(x, ((0, mp - m), (0, 0)))   # zero rows do not affect the stats
    nblk = mp // tm
    pre_affine = sb is not None

    in_specs = [pl.BlockSpec((tm, k), lambda i: (i, 0))]
    args = [x]
    if pre_affine:
        in_specs.append(pl.BlockSpec((2, k), lambda i: (0, 0)))
        args.append(sb)
    in_specs.append(pl.BlockSpec((k, c), lambda i: (0, 0)))
    args.append(w)

    y, stats = pl.pallas_call(
        functools.partial(_matmul_stats_kernel, pre_affine=pre_affine),
        grid=(nblk,),
        in_specs=in_specs,
        out_specs=(pl.BlockSpec((tm, c), lambda i: (i, 0)),
                   pl.BlockSpec((1, 2, c), lambda i: (i, 0, 0))),
        out_shape=(jax.ShapeDtypeStruct((mp, c), jnp.bfloat16),
                   jax.ShapeDtypeStruct((nblk, 2, c), jnp.float32)),
        compiler_params=_cparams(),
    )(*args)
    if mp != m:
        y = y[:m]
    return y, jnp.sum(stats, axis=0)


def conv3x3_stats(xph, w2, ho, wo, stride):
    """xph: (N, s*s, Hph, Wph, Cin) stride-phase-split padded activation (bf16).
    w2: (9*Cin, Cout) bf16.  Returns y (N*Ho*Wo, Cout) bf16 and stats (2, Cout) f32."""
    # TODO(synk): tile the grid over output-row blocks as well for large feature maps
    # (one image per grid step is fine at MedMNIST-scale spatial dims but is the first
    # thing to pressure v7x's 64 MiB VMEM on big images).
    n, nph, hph, wph, cin = xph.shape
    cout = w2.shape[1]
    y, stats = pl.pallas_call(
        functools.partial(_conv3x3_stats_kernel, stride=stride, ho=ho, wo=wo),
        grid=(n,),
        in_specs=[pl.BlockSpec((1, nph, hph, wph, cin), lambda i: (i, 0, 0, 0, 0)),
                  pl.BlockSpec((9 * cin, cout), lambda i: (0, 0))],
        out_specs=(pl.BlockSpec((1, ho * wo, cout), lambda i: (i, 0, 0)),
                   pl.BlockSpec((1, 2, cout), lambda i: (i, 0, 0))),
        out_shape=(jax.ShapeDtypeStruct((n, ho * wo, cout), jnp.bfloat16),
                   jax.ShapeDtypeStruct((n, 2, cout), jnp.float32)),
        compiler_params=_cparams(),
    )(xph, w2)
    return y.reshape(n * ho * wo, cout), jnp.sum(stats, axis=0)


def bn_relu(y, sb):
    m, c = y.shape
    tm, mp = _pick_tm(m, MAX_TM_EW)
    if mp != m:
        y = jnp.pad(y, ((0, mp - m), (0, 0)))
    o = pl.pallas_call(
        _bn_relu_kernel,
        grid=(mp // tm,),
        in_specs=[pl.BlockSpec((tm, c), lambda i: (i, 0)),
                  pl.BlockSpec((2, c), lambda i: (0, 0))],
        out_specs=pl.BlockSpec((tm, c), lambda i: (i, 0)),
        out_shape=jax.ShapeDtypeStruct((mp, c), jnp.bfloat16),
        compiler_params=_cparams(),
    )(y, sb)
    return o[:m] if mp != m else o


def bn_residual(y, sb, r, sbr, *, identity, is_last):
    m, c = y.shape
    tm, mp = _pick_tm(m, MAX_TM_EW)
    if mp != m:
        y = jnp.pad(y, ((0, mp - m), (0, 0)))
        r = jnp.pad(r, ((0, mp - m), (0, 0)))

    args = [y, sb, r]
    in_specs = [pl.BlockSpec((tm, c), lambda i: (i, 0)),
                pl.BlockSpec((2, c), lambda i: (0, 0)),
                pl.BlockSpec((tm, c), lambda i: (i, 0))]
    if not identity:
        args.append(sbr)
        in_specs.append(pl.BlockSpec((2, c), lambda i: (0, 0)))

    out_shape = [jax.ShapeDtypeStruct((mp, c), jnp.float32)]
    out_specs = [pl.BlockSpec((tm, c), lambda i: (i, 0))]
    if is_last:
        out_shape.append(jax.ShapeDtypeStruct((mp, c), jnp.float32))
        out_specs.append(pl.BlockSpec((tm, c), lambda i: (i, 0)))

    res = pl.pallas_call(
        functools.partial(_bn_residual_kernel, identity=identity, is_last=is_last),
        grid=(mp // tm,),
        in_specs=in_specs,
        out_specs=tuple(out_specs),
        out_shape=tuple(out_shape),
        compiler_params=_cparams(),
    )(*args)

    if is_last:
        out, pre = res
        if mp != m:
            out, pre = out[:m], pre[:m]
        return out, pre
    (out,) = res
    return out[:m] if mp != m else out


# --------------------------------------------------------------------------- #
# Glue: BN finalize, parameter init, full forward
# --------------------------------------------------------------------------- #
def _bn_scale_bias(stats, count, gamma, beta, c_pad):
    """Turn accumulated (sum, sumsq) into the per-channel affine of train-mode BN."""
    mean = stats[0] / count
    var = jnp.maximum(stats[1] / count - mean * mean, 0.0)
    g = jnp.pad(gamma, (0, c_pad - gamma.shape[0]), constant_values=1.0)
    b = jnp.pad(beta, (0, c_pad - beta.shape[0]))
    scale = g * jax.lax.rsqrt(var + EPS)
    bias = b - mean * scale
    return jnp.stack([scale, bias], axis=0)               # (2, c_pad) f32


def init_params(key, in_planes, planes, stride):
    """Deterministic synthetic params, PyTorch shapes (OIHW convs, per-channel BN)."""
    keys = jax.random.split(key, 4)
    out_planes = EXPANSION * planes
    p = {
        "w1": 0.2 * jax.random.normal(keys[0], (planes, in_planes, 1, 1), jnp.float32),
        "g1": jnp.ones((planes,), jnp.float32), "b1": jnp.zeros((planes,), jnp.float32),
        "w2": 0.2 * jax.random.normal(keys[1], (planes, planes, 3, 3), jnp.float32),
        "g2": jnp.ones((planes,), jnp.float32), "b2": jnp.zeros((planes,), jnp.float32),
        "w3": 0.2 * jax.random.normal(keys[2], (out_planes, planes, 1, 1), jnp.float32),
        "g3": jnp.ones((out_planes,), jnp.float32), "b3": jnp.zeros((out_planes,), jnp.float32),
    }
    if stride != 1 or in_planes != out_planes:
        p["ws"] = 0.2 * jax.random.normal(keys[3], (out_planes, in_planes, 1, 1), jnp.float32)
        p["gs"] = jnp.ones((out_planes,), jnp.float32)
        p["bs"] = jnp.zeros((out_planes,), jnp.float32)
    return p


def bottleneck_forward(x_nchw, params, *, stride, is_last):
    x = jnp.transpose(x_nchw, (0, 2, 3, 1))                 # NCHW -> NHWC
    N, H, W, Cin = x.shape
    planes = params["w1"].shape[0]
    out_planes = EXPANSION * planes
    cp_in = _round_up(Cin, LANE)
    cp_mid = _round_up(planes, LANE)
    cp_out = _round_up(out_planes, LANE)

    x_p = x if cp_in == Cin else jnp.pad(x, ((0, 0), (0, 0), (0, 0), (0, cp_in - Cin)))
    x_p = x_p.astype(jnp.bfloat16)

    # ---- stage 1: 1x1 conv + BN + relu ------------------------------------- #
    m1 = N * H * W
    w1 = _pad_mat(params["w1"][:, :, 0, 0].T, cp_in, cp_mid).astype(jnp.bfloat16)
    y1, st1 = matmul_stats(x_p.reshape(m1, cp_in), w1)
    sb1 = _bn_scale_bias(st1, m1, params["g1"], params["b1"], cp_mid)
    o1 = bn_relu(y1, sb1).reshape(N, H, W, cp_mid)
    # TODO(synk): write o1 directly into the spatially padded / phase-split layout via
    # the bn_relu out_spec index_map to drop the jnp.pad (+reshape/transpose) below.

    # ---- stage 2: 3x3 conv (stride, pad=1); BN2+relu is fused into stage 3 -- #
    s = stride
    ho = (H + 2 - 3) // s + 1
    wo = (W + 2 - 3) // s + 1
    pad_h = (-(H + 2)) % s
    pad_w = (-(W + 2)) % s
    xpp = jnp.pad(o1, ((0, 0), (1, 1 + pad_h), (1, 1 + pad_w), (0, 0)))
    if s == 1:
        xph = xpp[:, None]                                   # no phase split needed
    else:
        hpp, wpp = xpp.shape[1], xpp.shape[2]
        xph = xpp.reshape(N, hpp // s, s, wpp // s, s, cp_mid)
        xph = jnp.transpose(xph, (0, 2, 4, 1, 3, 5)).reshape(
            N, s * s, hpp // s, wpp // s, cp_mid)
    w2 = jnp.transpose(params["w2"], (2, 3, 1, 0))           # (3,3,Cin,Cout)
    w2 = jnp.pad(w2, ((0, 0), (0, 0), (0, cp_mid - planes), (0, cp_mid - planes)))
    w2 = w2.reshape(9 * cp_mid, cp_mid).astype(jnp.bfloat16)  # wide-K weight panel
    m2 = N * ho * wo
    y2, st2 = conv3x3_stats(xph, w2, ho, wo, s)
    sb2 = _bn_scale_bias(st2, m2, params["g2"], params["b2"], cp_mid)

    # ---- stage 3: relu(BN2(y2)) @ w3, fused in one kernel ------------------- #
    w3 = _pad_mat(params["w3"][:, :, 0, 0].T, cp_mid, cp_out).astype(jnp.bfloat16)
    y3, st3 = matmul_stats(y2, w3, sb=sb2)
    sb3 = _bn_scale_bias(st3, m2, params["g3"], params["b3"], cp_out)

    # ---- shortcut ----------------------------------------------------------- #
    if "ws" in params:
        xs = x_p[:, ::s, ::s, :].reshape(m2, cp_in)
        ws = _pad_mat(params["ws"][:, :, 0, 0].T, cp_in, cp_out).astype(jnp.bfloat16)
        ysc, stsc = matmul_stats(xs, ws)
        sbsc = _bn_scale_bias(stsc, m2, params["gs"], params["bs"], cp_out)
        identity = False
    else:
        assert s == 1 and cp_in == cp_out, "identity shortcut requires matching shapes"
        ysc = x_p.reshape(m2, cp_out)                        # bf16, no copy / convert
        sbsc = None
        identity = True

    # ---- fused BN(y3) + shortcut + add + relu (+ preact only if is_last) ---- #
    res = bn_residual(y3, sb3, ysc, sbsc, identity=identity, is_last=is_last)

    def to_nchw(t):
        return jnp.transpose(t.reshape(N, ho, wo, cp_out)[..., :out_planes], (0, 3, 1, 2))

    if is_last:
        return to_nchw(res[0]), to_nchw(res[1])
    return to_nchw(res)


bottleneck_forward_jit = jax.jit(bottleneck_forward, static_argnames=("stride", "is_last"))


# --------------------------------------------------------------------------- #
# Pure-JAX reference (lax.conv, training-mode BN) for a correctness cross-check
# --------------------------------------------------------------------------- #
def _bn_train_ref(x, g, b):
    mean = jnp.mean(x, axis=(0, 2, 3), keepdims=True)
    var = jnp.mean((x - mean) ** 2, axis=(0, 2, 3), keepdims=True)
    return (x - mean) * jax.lax.rsqrt(var + EPS) * g.reshape(1, -1, 1, 1) + b.reshape(1, -1, 1, 1)


def reference_forward(x, p, stride):
    conv = lambda x, w, s, pad: jax.lax.conv_general_dilated(
        x, w, (s, s), pad, dimension_numbers=("NCHW", "OIHW", "NCHW"),
        precision=jax.lax.Precision.HIGHEST)
    o = jax.nn.relu(_bn_train_ref(conv(x, p["w1"], 1, "VALID"), p["g1"], p["b1"]))
    o = jax.nn.relu(_bn_train_ref(conv(o, p["w2"], stride, ((1, 1), (1, 1))), p["g2"], p["b2"]))
    o = _bn_train_ref(conv(o, p["w3"], 1, "VALID"), p["g3"], p["b3"])
    sc = _bn_train_ref(conv(x, p["ws"], stride, "VALID"), p["gs"], p["bs"]) if "ws" in p else x
    pre = o + sc
    return jax.nn.relu(pre), pre


# --------------------------------------------------------------------------- #
if __name__ == "__main__":
    # Inputs / weights are pre-rounded to bf16-representable values so the bf16 MXU
    # path and the f32 reference see identical operands; the remaining difference is
    # the bf16 storage of intermediate activations (tolerance below covers it).
    def _r(t):
        return t.astype(jnp.bfloat16).astype(jnp.float32)

    TOL = dict(atol=5e-2, rtol=5e-2)

    # ---- config 1: conv shortcut (stride=2, channel expansion), is_last=True ---- #
    N, Cin, H, W = 2, 8, 16, 16
    planes, stride = 4, 2
    x = _r(jax.random.normal(jax.random.PRNGKey(0), (N, Cin, H, W), jnp.float32))
    params = init_params(jax.random.PRNGKey(1), Cin, planes, stride)
    params = {k: (_r(v) if k.startswith("w") else v) for k, v in params.items()}

    out, preact = bottleneck_forward_jit(x, params, stride=stride, is_last=True)
    jax.block_until_ready(out)
    jax.block_until_ready(preact)

    ref_out, ref_pre = reference_forward(x, params, stride)
    assert out.shape == (N, EXPANSION * planes, H // stride, W // stride)
    assert jnp.allclose(out, ref_out, **TOL), \
        f"max |diff| = {float(jnp.max(jnp.abs(out - ref_out)))}"
    assert jnp.allclose(preact, ref_pre, **TOL), \
        f"max |diff| = {float(jnp.max(jnp.abs(preact - ref_pre)))}"

    # ---- config 2: identity shortcut (stride=1), is_last=False ------------------ #
    Cin2 = EXPANSION * planes
    x2 = _r(jax.random.normal(jax.random.PRNGKey(2), (N, Cin2, H, W), jnp.float32))
    params2 = init_params(jax.random.PRNGKey(3), Cin2, planes, 1)
    params2 = {k: (_r(v) if k.startswith("w") else v) for k, v in params2.items()}

    out2 = bottleneck_forward_jit(x2, params2, stride=1, is_last=False)
    jax.block_until_ready(out2)
    ref_out2, _ = reference_forward(x2, params2, 1)
    assert out2.shape == (N, EXPANSION * planes, H, W)
    assert jnp.allclose(out2, ref_out2, **TOL), \
        f"max |diff| = {float(jnp.max(jnp.abs(out2 - ref_out2)))}"

    print("KERNEL_OK")
</pallas_src>

<mosaic_0001>
module attributes {stable_mosaic.version = 11 : i64} {
  func.func @_matmul_stats_kernel(%arg0: i32, %arg1: memref<512x128xbf16, #tpu.memory_space<vmem>>, %arg2: memref<128x128xbf16, #tpu.memory_space<vmem>>, %arg3: memref<512x128xbf16, #tpu.memory_space<vmem>>, %arg4: memref<1x2x128xf32, #tpu.memory_space<vmem>>) attributes {dimension_semantics = [#tpu.dimension_semantics<parallel>], iteration_bounds = array<i64: 1>, scalar_prefetch = 0 : i64, scratch_operands = 0 : i64, tpu.core_type = #tpu.core_type<tc>, window_params = [{transform_indices = @transform_0, window_bounds = array<i64: 512, 128>}, {pipeline_mode = #tpu.pipeline_mode<synchronous>, transform_indices = @transform_1, window_bounds = array<i64: 128, 128>}, {transform_indices = @transform_2, window_bounds = array<i64: 512, 128>}, {transform_indices = @transform_3, window_bounds = array<i64: 1, 2, 128>}]} {
    %c0 = arith.constant 0 : index
    %c0_0 = arith.constant 0 : index
    %0 = vector.load %arg1[%c0, %c0_0] : memref<512x128xbf16, #tpu.memory_space<vmem>>, vector<512x128xbf16>
    %c0_1 = arith.constant 0 : index
    %c0_2 = arith.constant 0 : index
    %1 = vector.load %arg2[%c0_1, %c0_2] : memref<128x128xbf16, #tpu.memory_space<vmem>>, vector<128x128xbf16>
    %cst = arith.constant dense<0.000000e+00> : vector<512x128xf32>
    %2 = tpu.matmul %0, %1, %cst {dimension_numbers = #tpu.dot_dimension_numbers<[1], [0], [0], [1], [0, 0, 1, 1], [], []>} : vector<512x128xbf16>, vector<128x128xbf16>, vector<512x128xf32> -> vector<512x128xf32>
    %3 = arith.truncf %2 : vector<512x128xf32> to vector<512x128xbf16>
    %c0_3 = arith.constant 0 : index
    %c0_4 = arith.constant 0 : index
    %4 = vector.load %arg3[%c0_3, %c0_4] : memref<512x128xbf16, #tpu.memory_space<vmem>>, vector<512x128xbf16>
    tpu.vector_store %arg3[%c0_3, %c0_4], %3 {strides = array<i32>} : memref<512x128xbf16, #tpu.memory_space<vmem>>, vector<512x128xbf16>,
    %cst_5 = arith.constant dense<0.000000e+00> : vector<128xf32>
    %5 = vector.multi_reduction <add>, %2, %cst_5 [0] : vector<512x128xf32> to vector<128xf32>
    %6 = vector.shape_cast %5 : vector<128xf32> to vector<1x128xf32>
    %7 = arith.mulf %2, %2 : vector<512x128xf32>
    %cst_6 = arith.constant dense<0.000000e+00> : vector<128xf32>
    %8 = vector.multi_reduction <add>, %7, %cst_6 [0] : vector<512x128xf32> to vector<128xf32>
    %9 = vector.shape_cast %8 : vector<128xf32> to vector<1x128xf32>
    %10 = tpu.concatenate %6, %9 in 0 : vector<1x128xf32>, vector<1x128xf32> -> vector<2x128xf32>
    %c0_7 = arith.constant 0 : index
    %c0_8 = arith.constant 0 : index
    %c0_9 = arith.constant 0 : index
    %11 = vector.load %arg4[%c0_7, %c0_8, %c0_9] : memref<1x2x128xf32, #tpu.memory_space<vmem>>, vector<1x2x128xf32>
    %12 = vector.shape_cast %11 : vector<1x2x128xf32> to vector<2x128xf32>
    %13 = vector.shape_cast %10 : vector<2x128xf32> to vector<1x2x128xf32>
    tpu.vector_store %arg4[%c0_7, %c0_8, %c0_9], %13 {strides = array<i32>} : memref<1x2x128xf32, #tpu.memory_space<vmem>>, vector<1x2x128xf32>,
    return
  }
  func.func @transform_0(%arg0: i32) -> (i32, i32) {
    %c0_i32 = arith.constant 0 : i32
    %c0_i32_0 = arith.constant 0 : i32
    return %arg0, %c0_i32 : i32, i32
  }
  func.func @transform_1(%arg0: i32) -> (i32, i32) {
    %c0_i32 = arith.constant 0 : i32
    %c0_i32_0 = arith.constant 0 : i32
    %c0_i32_1 = arith.constant 0 : i32
    return %c0_i32, %c0_i32_0 : i32, i32
  }
  func.func @transform_2(%arg0: i32) -> (i32, i32) {
    %c0_i32 = arith.constant 0 : i32
    %c0_i32_0 = arith.constant 0 : i32
    return %arg0, %c0_i32 : i32, i32
  }
  func.func @transform_3(%arg0: i32) -> (i32, i32, i32) {
    %c0_i32 = arith.constant 0 : i32
    %c0_i32_0 = arith.constant 0 : i32
    %c0_i32_1 = arith.constant 0 : i32
    return %arg0, %c0_i32, %c0_i32_0 : i32, i32, i32
  }
}

module attributes {stable_mosaic.version = 11 : i64} {
  func.func @_bn_relu_kernel(%arg0: i32, %arg1: memref<512x128xbf16, #tpu.memory_space<vmem>>, %arg2: memref<2x128xf32, #tpu.memory_space<vmem>>, %arg3: memref<512x128xbf16, #tpu.memory_space<vmem>>) attributes {dimension_semantics = [#tpu.dimension_semantics<parallel>], iteration_bounds = array<i64: 1>, scalar_prefetch = 0 : i64, scratch_operands = 0 : i64, tpu.core_type = #tpu.core_type<tc>, window_params = [{transform_indices = @transform_0, window_bounds = array<i64: 512, 128>}, {pipeline_mode = #tpu.pipeline_mode<synchronous>, transform_indices = @transform_1, window_bounds = array<i64: 2, 128>}, {transform_indices = @transform_2, window_bounds = array<i64: 512, 128>}]} {
    %c0 = arith.constant 0 : index
    %c0_0 = arith.constant 0 : index
    %0 = vector.load %arg1[%c0, %c0_0] : memref<512x128xbf16, #tpu.memory_space<vmem>>, vector<512x128xbf16>
    %c0_1 = arith.constant 0 : index
    %c0_2 = arith.constant 0 : index
    %1 = vector.load %arg2[%c0_1, %c0_2] : memref<2x128xf32, #tpu.memory_space<vmem>>, vector<1x128xf32>
    %2 = arith.extf %0 : vector<512x128xbf16> to vector<512x128xf32>
    %3 = vector.broadcast %1 : vector<1x128xf32> to vector<512x128xf32>
    %4 = arith.mulf %2, %3 : vector<512x128xf32>
    %c1 = arith.constant 1 : index
    %c0_3 = arith.constant 0 : index
    %5 = vector.load %arg2[%c1, %c0_3] : memref<2x128xf32, #tpu.memory_space<vmem>>, vector<1x128xf32>
    %6 = vector.broadcast %5 : vector<1x128xf32> to vector<512x128xf32>
    %7 = arith.addf %4, %6 : vector<512x128xf32>
    %cst = arith.constant 0.000000e+00 : f32
    %8 = vector.broadcast %cst : f32 to vector<512x128xf32>
    %9 = arith.maximumf %7, %8 : vector<512x128xf32>
    %10 = arith.truncf %9 : vector<512x128xf32> to vector<512x128xbf16>
    %c0_4 = arith.constant 0 : index
    %c0_5 = arith.constant 0 : index
    %11 = vector.load %arg3[%c0_4, %c0_5] : memref<512x128xbf16, #tpu.memory_space<vmem>>, vector<512x128xbf16>
    tpu.vector_store %arg3[%c0_4, %c0_5], %10 {strides = array<i32>} : memref<512x128xbf16, #tpu.memory_space<vmem>>, vector<512x128xbf16>,
    return
  }
  func.func @transform_0(%arg0: i32) -> (i32, i32) {
    %c0_i32 = arith.constant 0 : i32
    %c0_i32_0 = arith.constant 0 : i32
    return %arg0, %c0_i32 : i32, i32
  }
  func.func @transform_1(%arg0: i32) -> (i32, i32) {
    %c0_i32 = arith.constant 0 : i32
    %c0_i32_0 = arith.constant 0 : i32
    %c0_i32_1 = arith.constant 0 : i32
    return %c0_i32, %c0_i32_0 : i32, i32
  }
  func.func @transform_2(%arg0: i32) -> (i32, i32) {
    %c0_i32 = arith.constant 0 : i32
    %c0_i32_0 = arith.constant 0 : i32
    return %arg0, %c0_i32 : i32, i32
  }
}

module attributes {stable_mosaic.version = 11 : i64} {
  func.func @_conv3x3_stats_kernel(%arg0: i32, %arg1: memref<1x4x9x9x128xbf16, #tpu.memory_space<vmem>>, %arg2: memref<1152x128xbf16, #tpu.memory_space<vmem>>, %arg3: memref<1x64x128xbf16, #tpu.memory_space<vmem>>, %arg4: memref<1x2x128xf32, #tpu.memory_space<vmem>>) attributes {dimension_semantics = [#tpu.dimension_semantics<parallel>], iteration_bounds = array<i64: 2>, scalar_prefetch = 0 : i64, scratch_operands = 0 : i64, tpu.core_type = #tpu.core_type<tc>, window_params = [{transform_indices = @transform_0, window_bounds = array<i64: 1, 4, 9, 9, 128>}, {pipeline_mode = #tpu.pipeline_mode<synchronous>, transform_indices = @transform_1, window_bounds = array<i64: 1152, 128>}, {transform_indices = @transform_2, window_bounds = array<i64: 1, 64, 128>}, {transform_indices = @transform_3, window_bounds = array<i64: 1, 2, 128>}]} {
    %c0 = arith.constant 0 : index
    %c0_0 = arith.constant 0 : index
    %c0_1 = arith.constant 0 : index
    %c0_2 = arith.constant 0 : index
    %c0_3 = arith.constant 0 : index
    %0 = vector.load %arg1[%c0, %c0_0, %c0_1, %c0_2, %c0_3] : memref<1x4x9x9x128xbf16, #tpu.memory_space<vmem>>, vector<1x1x8x8x128xbf16>
    %1 = vector.shape_cast %0 : vector<1x1x8x8x128xbf16> to vector<8x8x128xbf16>
    %2 = vector.shape_cast %1 : vector<8x8x128xbf16> to vector<64x128xbf16>
    %c0_4 = arith.constant 0 : index
    %c1 = arith.constant 1 : index
    %c0_5 = arith.constant 0 : index
    %c0_6 = arith.constant 0 : index
    %c0_7 = arith.constant 0 : index
    %3 = vector.load %arg1[%c0_4, %c1, %c0_5, %c0_6, %c0_7] : memref<1x4x9x9x128xbf16, #tpu.memory_space<vmem>>, vector<1x1x8x8x128xbf16>
    %4 = vector.shape_cast %3 : vector<1x1x8x8x128xbf16> to vector<8x8x128xbf16>
    %5 = vector.shape_cast %4 : vector<8x8x128xbf16> to vector<64x128xbf16>
    %c0_8 = arith.constant 0 : index
    %c0_9 = arith.constant 0 : index
    %c0_10 = arith.constant 0 : index
    %c1_11 = arith.constant 1 : index
    %c0_12 = arith.constant 0 : index
    %6 = vector.load %arg1[%c0_8, %c0_9, %c0_10, %c1_11, %c0_12] : memref<1x4x9x9x128xbf16, #tpu.memory_space<vmem>>, vector<1x1x8x8x128xbf16>
    %7 = vector.shape_cast %6 : vector<1x1x8x8x128xbf16> to vector<8x8x128xbf16>
    %8 = vector.shape_cast %7 : vector<8x8x128xbf16> to vector<64x128xbf16>
    %c0_13 = arith.constant 0 : index
    %c2 = arith.constant 2 : index
    %c0_14 = arith.constant 0 : index
    %c0_15 = arith.constant 0 : index
    %c0_16 = arith.constant 0 : index
    %9 = vector.load %arg1[%c0_13, %c2, %c0_14, %c0_15, %c0_16] : memref<1x4x9x9x128xbf16, #tpu.memory_space<vmem>>, vector<1x1x8x8x128xbf16>
    %10 = vector.shape_cast %9 : vector<1x1x8x8x128xbf16> to vector<8x8x128xbf16>
    %11 = vector.shape_cast %10 : vector<8x8x128xbf16> to vector<64x128xbf16>
    %c0_17 = arith.constant 0 : index
    %c3 = arith.constant 3 : index
    %c0_18 = arith.constant 0 : index
    %c0_19 = arith.constant 0 : index
    %c0_20 = arith.constant 0 : index
    %12 = vector.load %arg1[%c0_17, %c3, %c0_18, %c0_19, %c0_20] : memref<1x4x9x9x128xbf16, #tpu.memory_space<vmem>>, vector<1x1x8x8x128xbf16>
    %13 = vector.shape_cast %12 : vector<1x1x8x8x128xbf16> to vector<8x8x128xbf16>
    %14 = vector.shape_cast %13 : vector<8x8x128xbf16> to vector<64x128xbf16>
    %c0_21 = arith.constant 0 : index
    %c2_22 = arith.constant 2 : index
    %c0_23 = arith.constant 0 : index
    %c1_24 = arith.constant 1 : index
    %c0_25 = arith.constant 0 : index
    %15 = vector.load %arg1[%c0_21, %c2_22, %c0_23, %c1_24, %c0_25] : memref<1x4x9x9x128xbf16, #tpu.memory_space<vmem>>, vector<1x1x8x8x128xbf16>
    %16 = vector.shape_cast %15 : vector<1x1x8x8x128xbf16> to vector<8x8x128xbf16>
    %17 = vector.shape_cast %16 : vector<8x8x128xbf16> to vector<64x128xbf16>
    %c0_26 = arith.constant 0 : index
    %c0_27 = arith.constant 0 : index
    %c1_28 = arith.constant 1 : index
    %c0_29 = arith.constant 0 : index
    %c0_30 = arith.constant 0 : index
    %18 = vector.load %arg1[%c0_26, %c0_27, %c1_28, %c0_29, %c0_30] : memref<1x4x9x9x128xbf16, #tpu.memory_space<vmem>>, vector<1x1x8x8x128xbf16>
    %19 = vector.shape_cast %18 : vector<1x1x8x8x128xbf16> to vector<8x8x128xbf16>
    %20 = vector.shape_cast %19 : vector<8x8x128xbf16> to vector<64x128xbf16>
    %c0_31 = arith.constant 0 : index
    %c1_32 = arith.constant 1 : index
    %c1_33 = arith.constant 1 : index
    %c0_34 = arith.constant 0 : index
    %c0_35 = arith.constant 0 : index
    %21 = vector.load %arg1[%c0_31, %c1_32, %c1_33, %c0_34, %c0_35] : memref<1x4x9x9x128xbf16, #tpu.memory_space<vmem>>, vector<1x1x8x8x128xbf16>
    %22 = vector.shape_cast %21 : vector<1x1x8x8x128xbf16> to vector<8x8x128xbf16>
    %23 = vector.shape_cast %22 : vector<8x8x128xbf16> to vector<64x128xbf16>
    %c0_36 = arith.constant 0 : index
    %c0_37 = arith.constant 0 : index
    %c1_38 = arith.constant 1 : index
    %c1_39 = arith.constant 1 : index
    %c0_40 = arith.constant 0 : index
    %24 = vector.load %arg1[%c0_36, %c0_37, %c1_38, %c1_39, %c0_40] : memref<1x4x9x9x128xbf16, #tpu.memory_space<vmem>>, vector<1x1x8x8x128xbf16>
    %25 = vector.shape_cast %24 : vector<1x1x8x8x128xbf16> to vector<8x8x128xbf16>
    %26 = vector.shape_cast %25 : vector<8x8x128xbf16> to vector<64x128xbf16>
    %27 = tpu.concatenate %2, %5, %8, %11, %14, %17, %20, %23, %26 in 1 : vector<64x128xbf16>, vector<64x128xbf16>, vector<64x128xbf16>, vector<64x128xbf16>, vector<64x128xbf16>, vector<64x128xbf16>, vector<64x128xbf16>, vector<64x128xbf16>, vector<64x128xbf16> -> vector<64x1152xbf16>
    %c0_41 = arith.constant 0 : index
    %c0_42 = arith.constant 0 : index
    %28 = vector.load %arg2[%c0_41, %c0_42] : memref<1152x128xbf16, #tpu.memory_space<vmem>>, vector<1152x128xbf16>
    %cst = arith.constant dense<0.000000e+00> : vector<64x128xf32>
    %29 = tpu.matmul %27, %28, %cst {dimension_numbers = #tpu.dot_dimension_numbers<[1], [0], [0], [1], [0, 0, 1, 1], [], []>} : vector<64x1152xbf16>, vector<1152x128xbf16>, vector<64x128xf32> -> vector<64x128xf32>
    %30 = arith.truncf %29 : vector<64x128xf32> to vector<64x128xbf16>
    %c0_43 = arith.constant 0 : index
    %c0_44 = arith.constant 0 : index
    %c0_45 = arith.constant 0 : index
    %31 = vector.load %arg3[%c0_43, %c0_44, %c0_45] : memref<1x64x128xbf16, #tpu.memory_space<vmem>>, vector<1x64x128xbf16>
    %32 = vector.shape_cast %31 : vector<1x64x128xbf16> to vector<64x128xbf16>
    %33 = vector.shape_cast %30 : vector<64x128xbf16> to vector<1x64x128xbf16>
    tpu.vector_store %arg3[%c0_43, %c0_44, %c0_45], %33 {strides = array<i32>} : memref<1x64x128xbf16, #tpu.memory_space<vmem>>, vector<1x64x128xbf16>,
    %cst_46 = arith.constant dense<0.000000e+00> : vector<128xf32>
    %34 = vector.multi_reduction <add>, %29, %cst_46 [0] : vector<64x128xf32> to vector<128xf32>
    %35 = vector.shape_cast %34 : vector<128xf32> to vector<1x128xf32>
    %36 = arith.mulf %29, %29 : vector<64x128xf32>
    %cst_47 = arith.constant dense<0.000000e+00> : vector<128xf32>
    %37 = vector.multi_reduction <add>, %36, %cst_47 [0] : vector<64x128xf32> to vector<128xf32>
    %38 = vector.shape_cast %37 : vector<128xf32> to vector<1x128xf32>
    %39 = tpu.concatenate %35, %38 in 0 : vector<1x128xf32>, vector<1x128xf32> -> vector<2x128xf32>
    %c0_48 = arith.constant 0 : index
    %c0_49 = arith.constant 0 : index
    %c0_50 = arith.constant 0 : index
    %40 = vector.load %arg4[%c0_48, %c0_49, %c0_50] : memref<1x2x128xf32, #tpu.memory_space<vmem>>, vector<1x2x128xf32>
    %41 = vector.shape_cast %40 : vector<1x2x128xf32> to vector<2x128xf32>
    %42 = vector.shape_cast %39 : vector<2x128xf32> to vector<1x2x128xf32>
    tpu.vector_store %arg4[%c0_48, %c0_49, %c0_50], %42 {strides = array<i32>} : memref<1x2x128xf32, #tpu.memory_space<vmem>>, vector<1x2x128xf32>,
    return
  }
  func.func @transform_0(%arg0: i32) -> (i32, i32, i32, i32, i32) {
    %c0_i32 = arith.constant 0 : i32
    %c0_i32_0 = arith.constant 0 : i32
    %c0_i32_1 = arith.constant 0 : i32
    %c0_i32_2 = arith.constant 0 : i32
    %c0_i32_3 = arith.constant 0 : i32
    return %arg0, %c0_i32, %c0_i32_0, %c0_i32_1, %c0_i32_2 : i32, i32, i32, i32, i32
  }
  func.func @transform_1(%arg0: i32) -> (i32, i32) {
    %c0_i32 = arith.constant 0 : i32
    %c0_i32_0 = arith.constant 0 : i32
    %c0_i32_1 = arith.constant 0 : i32
    return %c0_i32, %c0_i32_0 : i32, i32
  }
  func.func @transform_2(%arg0: i32) -> (i32, i32, i32) {
    %c0_i32 = arith.constant 0 : i32
    %c0_i32_0 = arith.constant 0 : i32
    %c0_i32_1 = arith.constant 0 : i32
    return %arg0, %c0_i32, %c0_i32_0 : i32, i32, i32
  }
  func.func @transform_3(%arg0: i32) -> (i32, i32, i32) {
    %c0_i32 = arith.constant 0 : i32
    %c0_i32_0 = arith.constant 0 : i32
    %c0_i32_1 = arith.constant 0 : i32
    return %arg0, %c0_i32, %c0_i32_0 : i32, i32, i32
  }
}

module attributes {stable_mosaic.version = 11 : i64} {
  func.func @_matmul_stats_kernel(%arg0: i32, %arg1: memref<128x128xbf16, #tpu.memory_space<vmem>>, %arg2: memref<2x128xf32, #tpu.memory_space<vmem>>, %arg3: memref<128x128xbf16, #tpu.memory_space<vmem>>, %arg4: memref<128x128xbf16, #tpu.memory_space<vmem>>, %arg5: memref<1x2x128xf32, #tpu.memory_space<vmem>>) attributes {dimension_semantics = [#tpu.dimension_semantics<parallel>], iteration_bounds = array<i64: 1>, scalar_prefetch = 0 : i64, scratch_operands = 0 : i64, tpu.core_type = #tpu.core_type<tc>, window_params = [{transform_indices = @transform_0, window_bounds = array<i64: 128, 128>}, {pipeline_mode = #tpu.pipeline_mode<synchronous>, transform_indices = @transform_1, window_bounds = array<i64: 2, 128>}, {pipeline_mode = #tpu.pipeline_mode<synchronous>, transform_indices = @transform_2, window_bounds = array<i64: 128, 128>}, {transform_indices = @transform_3, window_bounds = array<i64: 128, 128>}, {transform_indices = @transform_4, window_bounds = array<i64: 1, 2, 128>}]} {
    %c0 = arith.constant 0 : index
    %c0_0 = arith.constant 0 : index
    %0 = vector.load %arg1[%c0, %c0_0] : memref<128x128xbf16, #tpu.memory_space<vmem>>, vector<128x128xbf16>
    %c0_1 = arith.constant 0 : index
    %c0_2 = arith.constant 0 : index
    %1 = vector.load %arg2[%c0_1, %c0_2] : memref<2x128xf32, #tpu.memory_space<vmem>>, vector<1x128xf32>
    %2 = arith.extf %0 : vector<128x128xbf16> to vector<128x128xf32>
    %3 = vector.broadcast %1 : vector<1x128xf32> to vector<128x128xf32>
    %4 = arith.mulf %2, %3 : vector<128x128xf32>
    %c1 = arith.constant 1 : index
    %c0_3 = arith.constant 0 : index
    %5 = vector.load %arg2[%c1, %c0_3] : memref<2x128xf32, #tpu.memory_space<vmem>>, vector<1x128xf32>
    %6 = vector.broadcast %5 : vector<1x128xf32> to vector<128x128xf32>
    %7 = arith.addf %4, %6 : vector<128x128xf32>
    %cst = arith.constant 0.000000e+00 : f32
    %8 = vector.broadcast %cst : f32 to vector<128x128xf32>
    %9 = arith.maximumf %7, %8 : vector<128x128xf32>
    %10 = arith.truncf %9 : vector<128x128xf32> to vector<128x128xbf16>
    %c0_4 = arith.constant 0 : index
    %c0_5 = arith.constant 0 : index
    %11 = vector.load %arg3[%c0_4, %c0_5] : memref<128x128xbf16, #tpu.memory_space<vmem>>, vector<128x128xbf16>
    %cst_6 = arith.constant dense<0.000000e+00> : vector<128x128xf32>
    %12 = tpu.matmul %10, %11, %cst_6 {dimension_numbers = #tpu.dot_dimension_numbers<[1], [0], [0], [1], [0, 0, 1, 1], [], []>} : vector<128x128xbf16>, vector<128x128xbf16>, vector<128x128xf32> -> vector<128x128xf32>
    %13 = arith.truncf %12 : vector<128x128xf32> to vector<128x128xbf16>
    %c0_7 = arith.constant 0 : index
    %c0_8 = arith.constant 0 : index
    %14 = vector.load %arg4[%c0_7, %c0_8] : memref<128x128xbf16, #tpu.memory_space<vmem>>, vector<128x128xbf16>
    tpu.vector_store %arg4[%c0_7, %c0_8], %13 {strides = array<i32>} : memref<128x128xbf16, #tpu.memory_space<vmem>>, vector<128x128xbf16>,
    %cst_9 = arith.constant dense<0.000000e+00> : vector<128xf32>
    %15 = vector.multi_reduction <add>, %12, %cst_9 [0] : vector<128x128xf32> to vector<128xf32>
    %16 = vector.shape_cast %15 : vector<128xf32> to vector<1x128xf32>
    %17 = arith.mulf %12, %12 : vector<128x128xf32>
    %cst_10 = arith.constant dense<0.000000e+00> : vector<128xf32>
    %18 = vector.multi_reduction <add>, %17, %cst_10 [0] : vector<128x128xf32> to vector<128xf32>
    %19 = vector.shape_cast %18 : vector<128xf32> to vector<1x128xf32>
    %20 = tpu.concatenate %16, %19 in 0 : vector<1x128xf32>, vector<1x128xf32> -> vector<2x128xf32>
    %c0_11 = arith.constant 0 : index
    %c0_12 = arith.constant 0 : index
    %c0_13 = arith.constant 0 : index
    %21 = vector.load %arg5[%c0_11, %c0_12, %c0_13] : memref<1x2x128xf32, #tpu.memory_space<vmem>>, vector<1x2x128xf32>
    %22 = vector.shape_cast %21 : vector<1x2x128xf32> to vector<2x128xf32>
    %23 = vector.shape_cast %20 : vector<2x128xf32> to vector<1x2x128xf32>
    tpu.vector_store %arg5[%c0_11, %c0_12, %c0_13], %23 {strides = array<i32>} : memref<1x2x128xf32, #tpu.memory_space<vmem>>, vector<1x2x128xf32>,
    return
  }
  func.func @transform_0(%arg0: i32) -> (i32, i32) {
    %c0_i32 = arith.constant 0 : i32
    %c0_i32_0 = arith.constant 0 : i32
    return %arg0, %c0_i32 : i32, i32
  }
  func.func @transform_1(%arg0: i32) -> (i32, i32) {
    %c0_i32 = arith.constant 0 : i32
    %c0_i32_0 = arith.constant 0 : i32
    %c0_i32_1 = arith.constant 0 : i32
    return %c0_i32, %c0_i32_0 : i32, i32
  }
  func.func @transform_2(%arg0: i32) -> (i32, i32) {
    %c0_i32 = arith.constant 0 : i32
    %c0_i32_0 = arith.constant 0 : i32
    %c0_i32_1 = arith.constant 0 : i32
    return %c0_i32, %c0_i32_0 : i32, i32
  }
  func.func @transform_3(%arg0: i32) -> (i32, i32) {
    %c0_i32 = arith.constant 0 : i32
    %c0_i32_0 = arith.constant 0 : i32
    return %arg0, %c0_i32 : i32, i32
  }
  func.func @transform_4(%arg0: i32) -> (i32, i32, i32) {
    %c0_i32 = arith.constant 0 : i32
    %c0_i32_0 = arith.constant 0 : i32
    %c0_i32_1 = arith.constant 0 : i32
    return %arg0, %c0_i32, %c0_i32_0 : i32, i32, i32
  }
}

module attributes {stable_mosaic.version = 11 : i64} {
  func.func @_matmul_stats_kernel(%arg0: i32, %arg1: memref<128x128xbf16, #tpu.memory_space<vmem>>, %arg2: memref<128x128xbf16, #tpu.memory_space<vmem>>, %arg3: memref<128x128xbf16, #tpu.memory_space<vmem>>, %arg4: memref<1x2x128xf32, #tpu.memory_space<vmem>>) attributes {dimension_semantics = [#tpu.dimension_semantics<parallel>], iteration_bounds = array<i64: 1>, scalar_prefetch = 0 : i64, scratch_operands = 0 : i64, tpu.core_type = #tpu.core_type<tc>, window_params = [{transform_indices = @transform_0, window_bounds = array<i64: 128, 128>}, {pipeline_mode = #tpu.pipeline_mode<synchronous>, transform_indices = @transform_1, window_bounds = array<i64: 128, 128>}, {transform_indices = @transform_2, window_bounds = array<i64: 128, 128>}, {transform_indices = @transform_3, window_bounds = array<i64: 1, 2, 128>}]} {
    %c0 = arith.constant 0 : index
    %c0_0 = arith.constant 0 : index
    %0 = vector.load %arg1[%c0, %c0_0] : memref<128x128xbf16, #tpu.memory_space<vmem>>, vector<128x128xbf16>
    %c0_1 = arith.constant 0 : index
    %c0_2 = arith.constant 0 : index
    %1 = vector.load %arg2[%c0_1, %c0_2] : memref<128x128xbf16, #tpu.memory_space<vmem>>, vector<128x128xbf16>
    %cst = arith.constant dense<0.000000e+00> : vector<128x128xf32>
    %2 = tpu.matmul %0, %1, %cst {dimension_numbers = #tpu.dot_dimension_numbers<[1], [0], [0], [1], [0, 0, 1, 1], [], []>} : vector<128x128xbf16>, vector<128x128xbf16>, vector<128x128xf32> -> vector<128x128xf32>
    %3 = arith.truncf %2 : vector<128x128xf32> to vector<128x128xbf16>
    %c0_3 = arith.constant 0 : index
    %c0_4 = arith.constant 0 : index
    %4 = vector.load %arg3[%c0_3, %c0_4] : memref<128x128xbf16, #tpu.memory_space<vmem>>, vector<128x128xbf16>
    tpu.vector_store %arg3[%c0_3, %c0_4], %3 {strides = array<i32>} : memref<128x128xbf16, #tpu.memory_space<vmem>>, vector<128x128xbf16>,
    %cst_5 = arith.constant dense<0.000000e+00> : vector<128xf32>
    %5 = vector.multi_reduction <add>, %2, %cst_5 [0] : vector<128x128xf32> to vector<128xf32>
    %6 = vector.shape_cast %5 : vector<128xf32> to vector<1x128xf32>
    %7 = arith.mulf %2, %2 : vector<128x128xf32>
    %cst_6 = arith.constant dense<0.000000e+00> : vector<128xf32>
    %8 = vector.multi_reduction <add>, %7, %cst_6 [0] : vector<128x128xf32> to vector<128xf32>
    %9 = vector.shape_cast %8 : vector<128xf32> to vector<1x128xf32>
    %10 = tpu.concatenate %6, %9 in 0 : vector<1x128xf32>, vector<1x128xf32> -> vector<2x128xf32>
    %c0_7 = arith.constant 0 : index
    %c0_8 = arith.constant 0 : index
    %c0_9 = arith.constant 0 : index
    %11 = vector.load %arg4[%c0_7, %c0_8, %c0_9] : memref<1x2x128xf32, #tpu.memory_space<vmem>>, vector<1x2x128xf32>
    %12 = vector.shape_cast %11 : vector<1x2x128xf32> to vector<2x128xf32>
    %13 = vector.shape_cast %10 : vector<2x128xf32> to vector<1x2x128xf32>
    tpu.vector_store %arg4[%c0_7, %c0_8, %c0_9], %13 {strides = array<i32>} : memref<1x2x128xf32, #tpu.memory_space<vmem>>, vector<1x2x128xf32>,
    return
  }
  func.func @transform_0(%arg0: i32) -> (i32, i32) {
    %c0_i32 = arith.constant 0 : i32
    %c0_i32_0 = arith.constant 0 : i32
    return %arg0, %c0_i32 : i32, i32
  }
  func.func @transform_1(%arg0: i32) -> (i32, i32) {
    %c0_i32 = arith.constant 0 : i32
    %c0_i32_0 = arith.constant 0 : i32
    %c0_i32_1 = arith.constant 0 : i32
    return %c0_i32, %c0_i32_0 : i32, i32
  }
  func.func @transform_2(%arg0: i32) -> (i32, i32) {
    %c0_i32 = arith.constant 0 : i32
    %c0_i32_0 = arith.constant 0 : i32
    return %arg0, %c0_i32 : i32, i32
  }
  func.func @transform_3(%arg0: i32) -> (i32, i32, i32) {
    %c0_i32 = arith.constant 0 : i32
    %c0_i32_0 = arith.constant 0 : i32
    %c0_i32_1 = arith.constant 0 : i32
    return %arg0, %c0_i32, %c0_i32_0 : i32, i32, i32
  }
}

module attributes {stable_mosaic.version = 11 : i64} {
  func.func @_bn_residual_kernel(%arg0: i32, %arg1: memref<128x128xbf16, #tpu.memory_space<vmem>>, %arg2: memref<2x128xf32, #tpu.memory_space<vmem>>, %arg3: memref<128x128xbf16, #tpu.memory_space<vmem>>, %arg4: memref<2x128xf32, #tpu.memory_space<vmem>>, %arg5: memref<128x128xf32, #tpu.memory_space<vmem>>, %arg6: memref<128x128xf32, #tpu.memory_space<vmem>>) attributes {dimension_semantics = [#tpu.dimension_semantics<parallel>], iteration_bounds = array<i64: 1>, scalar_prefetch = 0 : i64, scratch_operands = 0 : i64, tpu.core_type = #tpu.core_type<tc>, window_params = [{transform_indices = @transform_0, window_bounds = array<i64: 128, 128>}, {pipeline_mode = #tpu.pipeline_mode<synchronous>, transform_indices = @transform_1, window_bounds = array<i64: 2, 128>}, {transform_indices = @transform_2, window_bounds = array<i64: 128, 128>}, {pipeline_mode = #tpu.pipeline_mode<synchronous>, transform_indices = @transform_3, window_bounds = array<i64: 2, 128>}, {transform_indices = @transform_4, window_bounds = array<i64: 128, 128>}, {transform_indices = @transform_5, window_bounds = array<i64: 128, 128>}]} {
    %c0 = arith.constant 0 : index
    %c0_0 = arith.constant 0 : index
    %0 = vector.load %arg3[%c0, %c0_0] : memref<128x128xbf16, #tpu.memory_space<vmem>>, vector<128x128xbf16>
    %c0_1 = arith.constant 0 : index
    %c0_2 = arith.constant 0 : index
    %1 = vector.load %arg4[%c0_1, %c0_2] : memref<2x128xf32, #tpu.memory_space<vmem>>, vector<1x128xf32>
    %2 = arith.extf %0 : vector<128x128xbf16> to vector<128x128xf32>
    %3 = vector.broadcast %1 : vector<1x128xf32> to vector<128x128xf32>
    %4 = arith.mulf %2, %3 : vector<128x128xf32>
    %c1 = arith.constant 1 : index
    %c0_3 = arith.constant 0 : index
    %5 = vector.load %arg4[%c1, %c0_3] : memref<2x128xf32, #tpu.memory_space<vmem>>, vector<1x128xf32>
    %6 = vector.broadcast %5 : vector<1x128xf32> to vector<128x128xf32>
    %7 = arith.addf %4, %6 : vector<128x128xf32>
    %c0_4 = arith.constant 0 : index
    %c0_5 = arith.constant 0 : index
    %8 = vector.load %arg1[%c0_4, %c0_5] : memref<128x128xbf16, #tpu.memory_space<vmem>>, vector<128x128xbf16>
    %c0_6 = arith.constant 0 : index
    %c0_7 = arith.constant 0 : index
    %9 = vector.load %arg2[%c0_6, %c0_7] : memref<2x128xf32, #tpu.memory_space<vmem>>, vector<1x128xf32>
    %10 = arith.extf %8 : vector<128x128xbf16> to vector<128x128xf32>
    %11 = vector.broadcast %9 : vector<1x128xf32> to vector<128x128xf32>
    %12 = arith.mulf %10, %11 : vector<128x128xf32>
    %c1_8 = arith.constant 1 : index
    %c0_9 = arith.constant 0 : index
    %13 = vector.load %arg2[%c1_8, %c0_9] : memref<2x128xf32, #tpu.memory_space<vmem>>, vector<1x128xf32>
    %14 = vector.broadcast %13 : vector<1x128xf32> to vector<128x128xf32>
    %15 = arith.addf %12, %14 : vector<128x128xf32>
    %16 = arith.addf %15, %7 : vector<128x128xf32>
    %c0_10 = arith.constant 0 : index
    %c0_11 = arith.constant 0 : index
    %17 = vector.load %arg6[%c0_10, %c0_11] : memref<128x128xf32, #tpu.memory_space<vmem>>, vector<128x128xf32>
    tpu.vector_store %arg6[%c0_10, %c0_11], %16 {strides = array<i32>} : memref<128x128xf32, #tpu.memory_space<vmem>>, vector<128x128xf32>,
    %cst = arith.constant 0.000000e+00 : f32
    %18 = vector.broadcast %cst : f32 to vector<128x128xf32>
    %19 = arith.maximumf %16, %18 : vector<128x128xf32>
    %c0_12 = arith.constant 0 : index
    %c0_13 = arith.constant 0 : index
    %20 = vector.load %arg5[%c0_12, %c0_13] : memref<128x128xf32, #tpu.memory_space<vmem>>, vector<128x128xf32>
    tpu.vector_store %arg5[%c0_12, %c0_13], %19 {strides = array<i32>} : memref<128x128xf32, #tpu.memory_space<vmem>>, vector<128x128xf32>,
    return
  }
  func.func @transform_0(%arg0: i32) -> (i32, i32) {
    %c0_i32 = arith.constant 0 : i32
    %c0_i32_0 = arith.constant 0 : i32
    return %arg0, %c0_i32 : i32, i32
  }
  func.func @transform_1(%arg0: i32) -> (i32, i32) {
    %c0_i32 = arith.constant 0 : i32
    %c0_i32_0 = arith.constant 0 : i32
    %c0_i32_1 = arith.constant 0 : i32
    return %c0_i32, %c0_i32_0 : i32, i32
  }
  func.func @transform_2(%arg0: i32) -> (i32, i32) {
    %c0_i32 = arith.constant 0 : i32
    %c0_i32_0 = arith.constant 0 : i32
    return %arg0, %c0_i32 : i32, i32
  }
  func.func @transform_3(%arg0: i32) -> (i32, i32) {
    %c0_i32 = arith.constant 0 : i32
    %c0_i32_0 = arith.constant 0 : i32
    %c0_i32_1 = arith.constant 0 : i32
    return %c0_i32, %c0_i32_0 : i32, i32
  }
  func.func @transform_4(%arg0: i32) -> (i32, i32) {
    %c0_i32 = arith.constant 0 : i32
    %c0_i32_0 = arith.constant 0 : i32
    return %arg0, %c0_i32 : i32, i32
  }
  func.func @transform_5(%arg0: i32) -> (i32, i32) {
    %c0_i32 = arith.constant 0 : i32
    %c0_i32_0 = arith.constant 0 : i32
    return %arg0, %c0_i32 : i32, i32
  }
}

</mosaic_0001>

<llo_original>
// kernel: bottleneck_forward.7
$region0: #{bottleneck_forward.7}
  #allocation0 [shape = 'u32[]', space=smem, size = 0x4, offset = 0x4, fixed_abs, tag = 'smem constant byte address 0x4 - core index']
  #allocation1 [shape = 'u32[72,128]{1,0:T(1,128)}', space=vmem, size = 0x9000, scoped, tag = 'internal scratch']
  %s0 = inlined_call_operand.vmem [shape: bf16[512,128], index: 0, kind: input, shape index: {}]
  %s1 = inlined_call_operand.vmem [shape: f32[2,128], index: 1, kind: input, shape index: {}]
  %s2 = inlined_call_operand.vmem [shape: bf16[512,128], index: 2, kind: output, shape index: {}]
  %s3 = sld [smem:[#allocation0]]
  $region18: #{bottleneck_forward.7} parent=0
    _
  %s5 = ssub.s32 1, %s3
  %s6 = scalar_select 0, %s5, %s3
  // Predicated region
  $region2: #{bottleneck_forward.7} parent=0 // pred_check
    _
  $region3: #{bottleneck_forward.7} parent=0 // pred_check_branch
    %8 = sbr.rel (0) target = $region5
  $region4: #{bottleneck_forward.7} parent=0 // pred_region
    _
  $region5: #{bottleneck_forward.7} parent=0 // pred_fallthru
    _
  // Predicated region
  $region6: #{bottleneck_forward.7} parent=0 // pred_check
    _
  $region7: #{bottleneck_forward.7} parent=0 // pred_check_branch
    %10 = sbr.rel (0) target = $region9
  $region8: #{bottleneck_forward.7} parent=0 // pred_region
    _
  $region9: #{bottleneck_forward.7} parent=0 // pred_fallthru
    _
  %v11 = vld [vmem:[%s0] sm:$0xf]
  %v12 = vld [vmem:[%s0 + $0x4] sm:$0xf]
  %v13 = vld [vmem:[%s0 + $0x8] sm:$0xf]
  %v14 = vld [vmem:[%s0 + $0xc] sm:$0xf]
  %v15 = vld [vmem:[%s0 + $0x10] sm:$0xf]
  %v16 = vld [vmem:[%s0 + $0x14] sm:$0xf]
  %v17 = vld [vmem:[%s0 + $0x18] sm:$0xf]
  %v18 = vld [vmem:[%s0 + $0x1c] sm:$0xf]
  %v19 = vld [vmem:[%s0 + $0x20] sm:$0xf]
  %v20 = vld [vmem:[%s0 + $0x24] sm:$0xf]
  %v21 = vld [vmem:[%s0 + $0x28] sm:$0xf]
  %v22 = vld [vmem:[%s0 + $0x2c] sm:$0xf]
  %v23 = vld [vmem:[%s0 + $0x30] sm:$0xf]
  %v24 = vld [vmem:[%s0 + $0x34] sm:$0xf]
  %v25 = vld [vmem:[%s0 + $0x38] sm:$0xf]
  %v26 = vld [vmem:[%s0 + $0x3c] sm:$0xf]
  %v27 = vld [vmem:[%s0 + $0x40] sm:$0xf]
  %v28 = vld [vmem:[%s0 + $0x44] sm:$0xf]
  %v29 = vld [vmem:[%s0 + $0x48] sm:$0xf]
  %v30 = vld [vmem:[%s0 + $0x4c] sm:$0xf]
  %v31 = vld [vmem:[%s0 + $0x50] sm:$0xf]
  %v32 = vld [vmem:[%s0 + $0x54] sm:$0xf]
  %v33 = vld [vmem:[%s0 + $0x58] sm:$0xf]
  %v34 = vld [vmem:[%s0 + $0x5c] sm:$0xf]
  %v35 = vld [vmem:[%s0 + $0x60] sm:$0xf]
  %v36 = vld [vmem:[%s0 + $0x64] sm:$0xf]
  %v37 = vld [vmem:[%s0 + $0x68] sm:$0xf]
  %v38 = vld [vmem:[%s0 + $0x6c] sm:$0xf]
  %v39 = vld [vmem:[%s0 + $0x70] sm:$0xf]
  %v40 = vld [vmem:[%s0 + $0x74] sm:$0xf]
  %v41 = vld [vmem:[%s0 + $0x78] sm:$0xf]
  %v42 = vld [vmem:[%s0 + $0x7c] sm:$0xf]
  %v43 = vld [vmem:[%s0 + $0x80] sm:$0xf]
  %v44 = vld [vmem:[%s0 + $0x84] sm:$0xf]
  %v45 = vld [vmem:[%s0 + $0x88] sm:$0xf]
  %v46 = vld [vmem:[%s0 + $0x8c] sm:$0xf]
  %v47 = vld [vmem:[%s0 + $0x90] sm:$0xf]
  %v48 = vld [vmem:[%s0 + $0x94] sm:$0xf]
  %v49 = vld [vmem:[%s0 + $0x98] sm:$0xf]
  %v50 = vld [vmem:[%s0 + $0x9c] sm:$0xf]
  %v51 = vld [vmem:[%s0 + $0xa0] sm:$0xf]
  %v52 = vld [vmem:[%s0 + $0xa4] sm:$0xf]
  %v53 = vld [vmem:[%s0 + $0xa8] sm:$0xf]
  %v54 = vld [vmem:[%s0 + $0xac] sm:$0xf]
  %v55 = vld [vmem:[%s0 + $0xb0] sm:$0xf]
  %v56 = vld [vmem:[%s0 + $0xb4] sm:$0xf]
  %v57 = vld [vmem:[%s0 + $0xb8] sm:$0xf]
  %v58 = vld [vmem:[%s0 + $0xbc] sm:$0xf]
  %v59 = vld [vmem:[%s0 + $0xc0] sm:$0xf]
  %v60 = vld [vmem:[%s0 + $0xc4] sm:$0xf]
  %v61 = vld [vmem:[%s0 + $0xc8] sm:$0xf]
  %v62 = vld [vmem:[%s0 + $0xcc] sm:$0xf]
  %v63 = vld [vmem:[%s0 + $0xd0] sm:$0xf]
  %v64 = vld [vmem:[%s0 + $0xd4] sm:$0xf]
  %v65 = vld [vmem:[%s0 + $0xd8] sm:$0xf]
  %v66 = vld [vmem:[%s0 + $0xdc] sm:$0xf]
  %v67 = vld [vmem:[%s0 + $0xe0] sm:$0xf]
  %v68 = vld [vmem:[%s0 + $0xe4] sm:$0xf]
  %v69 = vld [vmem:[%s0 + $0xe8] sm:$0xf]
  %v70 = vld [vmem:[%s0 + $0xec] sm:$0xf]
  %v71 = vld [vmem:[%s0 + $0xf0] sm:$0xf]
  %v72 = vld [vmem:[%s0 + $0xf4] sm:$0xf]
  %v73 = vld [vmem:[%s0 + $0xf8] sm:$0xf]
  %v74 = vld [vmem:[%s0 + $0xfc] sm:$0xf]
  %v75 = vld [vmem:[%s1] sm:$0x1]
  %v76 = vunpack.c.l.bf16 %v11
  %v77 = vunpack.c.l.bf16 %v12
  %v78 = vunpack.c.l.bf16 %v13
  %v79 = vunpack.c.l.bf16 %v14
  %v80 = vunpack.c.l.bf16 %v15
  %v81 = vunpack.c.l.bf16 %v16
  %v82 = vunpack.c.l.bf16 %v17
  %v83 = vunpack.c.l.bf16 %v18
  %v84 = vunpack.c.l.bf16 %v19
  %v85 = vunpack.c.l.bf16 %v20
  %v86 = vunpack.c.l.bf16 %v21
  %v87 = vunpack.c.l.bf16 %v22
  %v88 = vunpack.c.l.bf16 %v23
  %v89 = vunpack.c.l.bf16 %v24
  %v90 = vunpack.c.l.bf16 %v25
  %v91 = vunpack.c.l.bf16 %v26
  %v92 = vunpack.c.l.bf16 %v27
  %v93 = vunpack.c.l.bf16 %v28
  %v94 = vunpack.c.l.bf16 %v29
  %v95 = vunpack.c.l.bf16 %v30
  %v96 = vunpack.c.l.bf16 %v31
  %v97 = vunpack.c.l.bf16 %v32
  %v98 = vunpack.c.l.bf16 %v33
  %v99 = vunpack.c.l.bf16 %v34
  %v100 = vunpack.c.l.bf16 %v35
  %v101 = vunpack.c.l.bf16 %v36
  %v102 = vunpack.c.l.bf16 %v37
  %v103 = vunpack.c.l.bf16 %v38
  %v104 = vunpack.c.l.bf16 %v39
  %v105 = vunpack.c.l.bf16 %v40
  %v106 = vunpack.c.l.bf16 %v41
  %v107 = vunpack.c.l.bf16 %v42
  %v108 = vunpack.c.l.bf16 %v43
  %v109 = vunpack.c.l.bf16 %v44
  %v110 = vunpack.c.l.bf16 %v45
  %v111 = vunpack.c.l.bf16 %v46
  %v112 = vunpack.c.l.bf16 %v47
  %v113 = vunpack.c.l.bf16 %v48
  %v114 = vunpack.c.l.bf16 %v49
  %v115 = vunpack.c.l.bf16 %v50
  %v116 = vunpack.c.l.bf16 %v51
  %v117 = vunpack.c.l.bf16 %v52
  %v118 = vunpack.c.l.bf16 %v53
  %v119 = vunpack.c.l.bf16 %v54
  %v120 = vunpack.c.l.bf16 %v55
  %v121 = vunpack.c.l.bf16 %v56
  %v122 = vunpack.c.l.bf16 %v57
  %v123 = vunpack.c.l.bf16 %v58
  %v124 = vunpack.c.l.bf16 %v59
  %v125 = vunpack.c.l.bf16 %v60
  %v126 = vunpack.c.l.bf16 %v61
  %v127 = vunpack.c.l.bf16 %v62
  %v128 = vunpack.c.l.bf16 %v63
  %v129 = vunpack.c.l.bf16 %v64
  %v130 = vunpack.c.l.bf16 %v65
  %v131 = vunpack.c.l.bf16 %v66
  %v132 = vunpack.c.l.bf16 %v67
  %v133 = vunpack.c.l.bf16 %v68
  %v134 = vunpack.c.l.bf16 %v69
  %v135 = vunpack.c.l.bf16 %v70
  %v136 = vunpack.c.l.bf16 %v71
  %v137 = vunpack.c.l.bf16 %v72
  %v138 = vunpack.c.l.bf16 %v73
  %v139 = vunpack.c.l.bf16 %v74
  %v140 = vperm.slane %v75, 0
  %v141 = vmul.f32 %v76, %v140
  %v142 = vmul.f32 %v77, %v140
  %v143 = vmul.f32 %v78, %v140
  %v144 = vmul.f32 %v79, %v140
  %v145 = vmul.f32 %v80, %v140
  %v146 = vmul.f32 %v81, %v140
  %v147 = vmul.f32 %v82, %v140
  %v148 = vmul.f32 %v83, %v140
  %v149 = vmul.f32 %v84, %v140
  %v150 = vmul.f32 %v85, %v140
  %v151 = vmul.f32 %v86, %v140
  %v152 = vmul.f32 %v87, %v140
  %v153 = vmul.f32 %v88, %v140
  %v154 = vmul.f32 %v89, %v140
  %v155 = vmul.f32 %v90, %v140
  %v156 = vmul.f32 %v91, %v140
  %v157 = vmul.f32 %v92, %v140
  %v158 = vmul.f32 %v93, %v140
  %v159 = vmul.f32 %v94, %v140
  %v160 = vmul.f32 %v95, %v140
  %v161 = vmul.f32 %v96, %v140
  %v162 = vmul.f32 %v97, %v140
  %v163 = vmul.f32 %v98, %v140
  %v164 = vmul.f32 %v99, %v140
  %v165 = vmul.f32 %v100, %v140
  %v166 = vmul.f32 %v101, %v140
  %v167 = vmul.f32 %v102, %v140
  %v168 = vmul.f32 %v103, %v140
  %v169 = vmul.f32 %v104, %v140
  %v170 = vmul.f32 %v105, %v140
  %v171 = vmul.f32 %v106, %v140
  %v172 = vmul.f32 %v107, %v140
  %v173 = vmul.f32 %v108, %v140
  %v174 = vmul.f32 %v109, %v140
  %v175 = vmul.f32 %v110, %v140
  %v176 = vmul.f32 %v111, %v140
  %v177 = vmul.f32 %v112, %v140
  %v178 = vmul.f32 %v113, %v140
  %v179 = vmul.f32 %v114, %v140
  %v180 = vmul.f32 %v115, %v140
  %v181 = vmul.f32 %v116, %v140
  %v182 = vmul.f32 %v117, %v140
  %v183 = vmul.f32 %v118, %v140
  %v184 = vmul.f32 %v119, %v140
  %v185 = vmul.f32 %v120, %v140
  %v186 = vmul.f32 %v121, %v140
  %v187 = vmul.f32 %v122, %v140
  %v188 = vmul.f32 %v123, %v140
  %v189 = vmul.f32 %v124, %v140
  %v190 = vmul.f32 %v125, %v140
  %v191 = vmul.f32 %v126, %v140
  %v192 = vmul.f32 %v127, %v140
  %v193 = vmul.f32 %v128, %v140
  %v194 = vmul.f32 %v129, %v140
  %v195 = vmul.f32 %v130, %v140
  %v196 = vmul.f32 %v131, %v140
  %v197 = vmul.f32 %v132, %v140
  %v198 = vmul.f32 %v133, %v140
  %v199 = vmul.f32 %v134, %v140
  %v200 = vmul.f32 %v135, %v140
  %v201 = vmul.f32 %v136, %v140
  %v202 = vmul.f32 %v137, %v140
  %v203 = vmul.f32 %v138, %v140
  %v204 = vmul.f32 %v139, %v140
  %v205 = vld [vmem:[%s1 + $0x1] sm:$0x1]
  %v206 = vperm.slane %v205, 0
  %v207 = vadd.f32 %v141, %v206
  %v208 = vadd.f32 %v142, %v206
  %v209 = vadd.f32 %v143, %v206
  %v210 = vadd.f32 %v144, %v206
  %v211 = vadd.f32 %v145, %v206
  %v212 = vadd.f32 %v146, %v206
  %v213 = vadd.f32 %v147, %v206
  %v214 = vadd.f32 %v148, %v206
  %v215 = vadd.f32 %v149, %v206
  %v216 = vadd.f32 %v150, %v206
  %v217 = vadd.f32 %v151, %v206
  %v218 = vadd.f32 %v152, %v206
  %v219 = vadd.f32 %v153, %v206
  %v220 = vadd.f32 %v154, %v206
  %v221 = vadd.f32 %v155, %v206
  %v222 = vadd.f32 %v156, %v206
  %v223 = vadd.f32 %v157, %v206
  %v224 = vadd.f32 %v158, %v206
  %v225 = vadd.f32 %v159, %v206
  %v226 = vadd.f32 %v160, %v206
  %v227 = vadd.f32 %v161, %v206
  %v228 = vadd.f32 %v162, %v206
  %v229 = vadd.f32 %v163, %v206
  %v230 = vadd.f32 %v164, %v206
  %v231 = vadd.f32 %v165, %v206
  %v232 = vadd.f32 %v166, %v206
  %v233 = vadd.f32 %v167, %v206
  %v234 = vadd.f32 %v168, %v206
  %v235 = vadd.f32 %v169, %v206
  %v236 = vadd.f32 %v170, %v206
  %v237 = vadd.f32 %v171, %v206
  %v238 = vadd.f32 %v172, %v206
  %v239 = vadd.f32 %v173, %v206
  %v240 = vadd.f32 %v174, %v206
  %v241 = vadd.f32 %v175, %v206
  %v242 = vadd.f32 %v176, %v206
  %v243 = vadd.f32 %v177, %v206
  %v244 = vadd.f32 %v178, %v206
  %v245 = vadd.f32 %v179, %v206
  %v246 = vadd.f32 %v180, %v206
  %v247 = vadd.f32 %v181, %v206
  %v248 = vadd.f32 %v182, %v206
  %v249 = vadd.f32 %v183, %v206
  %v250 = vadd.f32 %v184, %v206
  %v251 = vadd.f32 %v185, %v206
  %v252 = vadd.f32 %v186, %v206
  %v253 = vadd.f32 %v187, %v206
  %v254 = vadd.f32 %v188, %v206
  %v255 = vadd.f32 %v189, %v206
  %v256 = vadd.f32 %v190, %v206
  %v257 = vadd.f32 %v191, %v206
  %v258 = vadd.f32 %v192, %v206
  %v259 = vadd.f32 %v193, %v206
  %v260 = vadd.f32 %v194, %v206
  %v261 = vadd.f32 %v195, %v206
  %v262 = vadd.f32 %v196, %v206
  %v263 = vadd.f32 %v197, %v206
  %v264 = vadd.f32 %v198, %v206
  %v265 = vadd.f32 %v199, %v206
  %v266 = vadd.f32 %v200, %v206
  %v267 = vadd.f32 %v201, %v206
  %v268 = vadd.f32 %v202, %v206
  %v269 = vadd.f32 %v203, %v206
  %v270 = vadd.f32 %v204, %v206
  %v271 = vmax.f32 %v207, 0.0
  %v272 = vmax.f32 %v208, 0.0
  %v273 = vmax.f32 %v209, 0.0
  %v274 = vmax.f32 %v210, 0.0
  %v275 = vmax.f32 %v211, 0.0
  %v276 = vmax.f32 %v212, 0.0
  %v277 = vmax.f32 %v213, 0.0
  %v278 = vmax.f32 %v214, 0.0
  %v279 = vmax.f32 %v215, 0.0
  %v280 = vmax.f32 %v216, 0.0
  %v281 = vmax.f32 %v217, 0.0
  %v282 = vmax.f32 %v218, 0.0
  %v283 = vmax.f32 %v219, 0.0
  %v284 = vmax.f32 %v220, 0.0
  %v285 = vmax.f32 %v221, 0.0
  %v286 = vmax.f32 %v222, 0.0
  %v287 = vmax.f32 %v223, 0.0
  %v288 = vmax.f32 %v224, 0.0
  %v289 = vmax.f32 %v225, 0.0
  %v290 = vmax.f32 %v226, 0.0
  %v291 = vmax.f32 %v227, 0.0
  %v292 = vmax.f32 %v228, 0.0
  %v293 = vmax.f32 %v229, 0.0
  %v294 = vmax.f32 %v230, 0.0
  %v295 = vmax.f32 %v231, 0.0
  %v296 = vmax.f32 %v232, 0.0
  %v297 = vmax.f32 %v233, 0.0
  %v298 = vmax.f32 %v234, 0.0
  %v299 = vmax.f32 %v235, 0.0
  %v300 = vmax.f32 %v236, 0.0
  %v301 = vmax.f32 %v237, 0.0
  %v302 = vmax.f32 %v238, 0.0
  %v303 = vmax.f32 %v239, 0.0
  %v304 = vmax.f32 %v240, 0.0
  %v305 = vmax.f32 %v241, 0.0
  %v306 = vmax.f32 %v242, 0.0
  %v307 = vmax.f32 %v243, 0.0
  %v308 = vmax.f32 %v244, 0.0
  %v309 = vmax.f32 %v245, 0.0
  %v310 = vmax.f32 %v246, 0.0
  %v311 = vmax.f32 %v247, 0.0
  %v312 = vmax.f32 %v248, 0.0
  %v313 = vmax.f32 %v249, 0.0
  %v314 = vmax.f32 %v250, 0.0
  %v315 = vmax.f32 %v251, 0.0
  %v316 = vmax.f32 %v252, 0.0
  %v317 = vmax.f32 %v253, 0.0
  %v318 = vmax.f32 %v254, 0.0
  %v319 = vmax.f32 %v255, 0.0
  %v320 = vmax.f32 %v256, 0.0
  %v321 = vmax.f32 %v257, 0.0
  %v322 = vmax.f32 %v258, 0.0
  %v323 = vmax.f32 %v259, 0.0
  %v324 = vmax.f32 %v260, 0.0
  %v325 = vmax.f32 %v261, 0.0
  %v326 = vmax.f32 %v262, 0.0
  %v327 = vmax.f32 %v263, 0.0
  %v328 = vmax.f32 %v264, 0.0
  %v329 = vmax.f32 %v265, 0.0
  %v330 = vmax.f32 %v266, 0.0
  %v331 = vmax.f32 %v267, 0.0
  %v332 = vmax.f32 %v268, 0.0
  %v333 = vmax.f32 %v269, 0.0
  %v334 = vmax.f32 %v270, 0.0
  %v335 = vpack.c.bf16 %v271, %v271
  %v336 = vpack.c.bf16 %v272, %v272
  %v337 = vpack.c.bf16 %v273, %v273
  %v338 = vpack.c.bf16 %v274, %v274
  %v339 = vpack.c.bf16 %v275, %v275
  %v340 = vpack.c.bf16 %v276, %v276
  %v341 = vpack.c.bf16 %v277, %v277
  %v342 = vpack.c.bf16 %v278, %v278
  %v343 = vpack.c.bf16 %v279, %v279
  %v344 = vpack.c.bf16 %v280, %v280
  %v345 = vpack.c.bf16 %v281, %v281
  %v346 = vpack.c.bf16 %v282, %v282
  %v347 = vpack.c.bf16 %v283, %v283
  %v348 = vpack.c.bf16 %v284, %v284
  %v349 = vpack.c.bf16 %v285, %v285
  %v350 = vpack.c.bf16 %v286, %v286
  %v351 = vpack.c.bf16 %v287, %v287
  %v352 = vpack.c.bf16 %v288, %v288
  %v353 = vpack.c.bf16 %v289, %v289
  %v354 = vpack.c.bf16 %v290, %v290
  %v355 = vpack.c.bf16 %v291, %v291
  %v356 = vpack.c.bf16 %v292, %v292
  %v357 = vpack.c.bf16 %v293, %v293
  %v358 = vpack.c.bf16 %v294, %v294
  %v359 = vpack.c.bf16 %v295, %v295
  %v360 = vpack.c.bf16 %v296, %v296
  %v361 = vpack.c.bf16 %v297, %v297
  %v362 = vpack.c.bf16 %v298, %v298
  %v363 = vpack.c.bf16 %v299, %v299
  %v364 = vpack.c.bf16 %v300, %v300
  %v365 = vpack.c.bf16 %v301, %v301
  %v366 = vpack.c.bf16 %v302, %v302
  %v367 = vpack.c.bf16 %v303, %v303
  %v368 = vpack.c.bf16 %v304, %v304
  %v369 = vpack.c.bf16 %v305, %v305
  %v370 = vpack.c.bf16 %v306, %v306
  %v371 = vpack.c.bf16 %v307, %v307
  %v372 = vpack.c.bf16 %v308, %v308
  %v373 = vpack.c.bf16 %v309, %v309
  %v374 = vpack.c.bf16 %v310, %v310
  %v375 = vpack.c.bf16 %v311, %v311
  %v376 = vpack.c.bf16 %v312, %v312
  %v377 = vpack.c.bf16 %v313, %v313
  %v378 = vpack.c.bf16 %v314, %v314
  %v379 = vpack.c.bf16 %v315, %v315
  %v380 = vpack.c.bf16 %v316, %v316
  %v381 = vpack.c.bf16 %v317, %v317
  %v382 = vpack.c.bf16 %v318, %v318
  %v383 = vpack.c.bf16 %v319, %v319
  %v384 = vpack.c.bf16 %v320, %v320
  %v385 = vpack.c.bf16 %v321, %v321
  %v386 = vpack.c.bf16 %v322, %v322
  %v387 = vpack.c.bf16 %v323, %v323
  %v388 = vpack.c.bf16 %v324, %v324
  %v389 = vpack.c.bf16 %v325, %v325
  %v390 = vpack.c.bf16 %v326, %v326
  %v391 = vpack.c.bf16 %v327, %v327
  %v392 = vpack.c.bf16 %v328, %v328
  %v393 = vpack.c.bf16 %v329, %v329
  %v394 = vpack.c.bf16 %v330, %v330
  %v395 = vpack.c.bf16 %v331, %v331
  %v396 = vpack.c.bf16 %v332, %v332
  %v397 = vpack.c.bf16 %v333, %v333
  %v398 = vpack.c.bf16 %v334, %v334
  %399 = vst [vmem:[%s2] sm:$0xf] %v335
  %400 = vst [vmem:[%s2 + $0x4] sm:$0xf] %v336
  %401 = vst [vmem:[%s2 + $0x8] sm:$0xf] %v337
  %402 = vst [vmem:[%s2 + $0xc] sm:$0xf] %v338
  %403 = vst [vmem:[%s2 + $0x10] sm:$0xf] %v339
  %404 = vst [vmem:[%s2 + $0x14] sm:$0xf] %v340
  %405 = vst [vmem:[%s2 + $0x18] sm:$0xf] %v341
  %406 = vst [vmem:[%s2 + $0x1c] sm:$0xf] %v342
  %407 = vst [vmem:[%s2 + $0x20] sm:$0xf] %v343
  %408 = vst [vmem:[%s2 + $0x24] sm:$0xf] %v344
  %409 = vst [vmem:[%s2 + $0x28] sm:$0xf] %v345
  %410 = vst [vmem:[%s2 + $0x2c] sm:$0xf] %v346
  %411 = vst [vmem:[%s2 + $0x30] sm:$0xf] %v347
  %412 = vst [vmem:[%s2 + $0x34] sm:$0xf] %v348
  %413 = vst [vmem:[%s2 + $0x38] sm:$0xf] %v349
  %414 = vst [vmem:[%s2 + $0x3c] sm:$0xf] %v350
  %415 = vst [vmem:[%s2 + $0x40] sm:$0xf] %v351
  %416 = vst [vmem:[%s2 + $0x44] sm:$0xf] %v352
  %417 = vst [vmem:[%s2 + $0x48] sm:$0xf] %v353
  %418 = vst [vmem:[%s2 + $0x4c] sm:$0xf] %v354
  %419 = vst [vmem:[%s2 + $0x50] sm:$0xf] %v355
  %420 = vst [vmem:[%s2 + $0x54] sm:$0xf] %v356
  %421 = vst [vmem:[%s2 + $0x58] sm:$0xf] %v357
  %422 = vst [vmem:[%s2 + $0x5c] sm:$0xf] %v358
  %423 = vst [vmem:[%s2 + $0x60] sm:$0xf] %v359
  %424 = vst [vmem:[%s2 + $0x64] sm:$0xf] %v360
  %425 = vst [vmem:[%s2 + $0x68] sm:$0xf] %v361
  %426 = vst [vmem:[%s2 + $0x6c] sm:$0xf] %v362
  %427 = vst [vmem:[%s2 + $0x70] sm:$0xf] %v363
  %428 = vst [vmem:[%s2 + $0x74] sm:$0xf] %v364
  %429 = vst [vmem:[%s2 + $0x78] sm:$0xf] %v365
  %430 = vst [vmem:[%s2 + $0x7c] sm:$0xf] %v366
  %431 = vst [vmem:[%s2 + $0x80] sm:$0xf] %v367
  %432 = vst [vmem:[%s2 + $0x84] sm:$0xf] %v368
  %433 = vst [vmem:[%s2 + $0x88] sm:$0xf] %v369
  %434 = vst [vmem:[%s2 + $0x8c] sm:$0xf] %v370
  %435 = vst [vmem:[%s2 + $0x90] sm:$0xf] %v371
  %436 = vst [vmem:[%s2 + $0x94] sm:$0xf] %v372
  %437 = vst [vmem:[%s2 + $0x98] sm:$0xf] %v373
  %438 = vst [vmem:[%s2 + $0x9c] sm:$0xf] %v374
  %439 = vst [vmem:[%s2 + $0xa0] sm:$0xf] %v375
  %440 = vst [vmem:[%s2 + $0xa4] sm:$0xf] %v376
  %441 = vst [vmem:[%s2 + $0xa8] sm:$0xf] %v377
  %442 = vst [vmem:[%s2 + $0xac] sm:$0xf] %v378
  %443 = vst [vmem:[%s2 + $0xb0] sm:$0xf] %v379
  %444 = vst [vmem:[%s2 + $0xb4] sm:$0xf] %v380
  %445 = vst [vmem:[%s2 + $0xb8] sm:$0xf] %v381
  %446 = vst [vmem:[%s2 + $0xbc] sm:$0xf] %v382
  %447 = vst [vmem:[%s2 + $0xc0] sm:$0xf] %v383
  %448 = vst [vmem:[%s2 + $0xc4] sm:$0xf] %v384
  %449 = vst [vmem:[%s2 + $0xc8] sm:$0xf] %v385
  %450 = vst [vmem:[%s2 + $0xcc] sm:$0xf] %v386
  %451 = vst [vmem:[%s2 + $0xd0] sm:$0xf] %v387
  %452 = vst [vmem:[%s2 + $0xd4] sm:$0xf] %v388
  %453 = vst [vmem:[%s2 + $0xd8] sm:$0xf] %v389
  %454 = vst [vmem:[%s2 + $0xdc] sm:$0xf] %v390
  %455 = vst [vmem:[%s2 + $0xe0] sm:$0xf] %v391
  %456 = vst [vmem:[%s2 + $0xe4] sm:$0xf] %v392
  %457 = vst [vmem:[%s2 + $0xe8] sm:$0xf] %v393
  %458 = vst [vmem:[%s2 + $0xec] sm:$0xf] %v394
  %459 = vst [vmem:[%s2 + $0xf0] sm:$0xf] %v395
  %460 = vst [vmem:[%s2 + $0xf4] sm:$0xf] %v396
  %461 = vst [vmem:[%s2 + $0xf8] sm:$0xf] %v397
  %462 = vst [vmem:[%s2 + $0xfc] sm:$0xf] %v398
  // Predicated region
  $region10: #{bottleneck_forward.7} parent=0 // pred_check
    _
  $region11: #{bottleneck_forward.7} parent=0 // pred_check_branch
    %464 = sbr.rel (0) target = $region13
  $region12: #{bottleneck_forward.7} parent=0 // pred_region
    _
  $region13: #{bottleneck_forward.7} parent=0 // pred_fallthru
    _
  // Predicated region
  $region14: #{bottleneck_forward.7} parent=0 // pred_check
    _
  $region15: #{bottleneck_forward.7} parent=0 // pred_check_branch
    %466 = sbr.rel (0) target = $region17
  $region16: #{bottleneck_forward.7} parent=0 // pred_region
    _
  $region17: #{bottleneck_forward.7} parent=0 // pred_fallthru
    _

// kernel: bottleneck_forward.6
$region0: #{bottleneck_forward.6}
  #allocation0 [shape = 'u32[]', space=smem, size = 0x4, offset = 0x4, fixed_abs, tag = 'smem constant byte address 0x4 - core index']
  #allocation1 [shape = 'u32[72,128]{1,0:T(1,128)}', space=vmem, size = 0x9000, scoped, tag = 'internal scratch']
  %s0 = inlined_call_operand.vmem [shape: bf16[512,128], index: 0, kind: input, shape index: {}]
  %s1 = inlined_call_operand.vmem [shape: bf16[128,128], index: 1, kind: input, shape index: {}]
  %s2 = inlined_call_operand.vmem [shape: bf16[512,128], index: 2, kind: output, shape index: {0}]
  %s3 = inlined_call_operand.vmem [shape: f32[1,2,128], index: 3, kind: output, shape index: {1}]
  %4 = xla_tuple %s2, %s3
  %s5 = sld [smem:[#allocation0]]
  $region26: #{bottleneck_forward.6} parent=0
    _
  %s7 = ssub.s32 1, %s5
  %s8 = scalar_select 0, %s7, %s5
  // Predicated region
  $region2: #{bottleneck_forward.6} parent=0 // pred_check
    _
  $region3: #{bottleneck_forward.6} parent=0 // pred_check_branch
    %10 = sbr.rel (0) target = $region5
  $region4: #{bottleneck_forward.6} parent=0 // pred_region
    _
  $region5: #{bottleneck_forward.6} parent=0 // pred_fallthru
    _
  // Predicated region
  $region6: #{bottleneck_forward.6} parent=0 // pred_check
    _
  $region7: #{bottleneck_forward.6} parent=0 // pred_check_branch
    %12 = sbr.rel (0) target = $region9
  $region8: #{bottleneck_forward.6} parent=0 // pred_region
    _
  $region9: #{bottleneck_forward.6} parent=0 // pred_fallthru
    _
  %v13 = vld [vmem:[%s0] sm:$0xf]
  %v14 = vld [vmem:[%s0 + $0x4] sm:$0xf]
  %v15 = vld [vmem:[%s0 + $0x8] sm:$0xf]
  %v16 = vld [vmem:[%s0 + $0xc] sm:$0xf]
  %v17 = vld [vmem:[%s0 + $0x10] sm:$0xf]
  %v18 = vld [vmem:[%s0 + $0x14] sm:$0xf]
  %v19 = vld [vmem:[%s0 + $0x18] sm:$0xf]
  %v20 = vld [vmem:[%s0 + $0x1c] sm:$0xf]
  %v21 = vld [vmem:[%s0 + $0x20] sm:$0xf]
  %v22 = vld [vmem:[%s0 + $0x24] sm:$0xf]
  %v23 = vld [vmem:[%s0 + $0x28] sm:$0xf]
  %v24 = vld [vmem:[%s0 + $0x2c] sm:$0xf]
  %v25 = vld [vmem:[%s0 + $0x30] sm:$0xf]
  %v26 = vld [vmem:[%s0 + $0x34] sm:$0xf]
  %v27 = vld [vmem:[%s0 + $0x38] sm:$0xf]
  %v28 = vld [vmem:[%s0 + $0x3c] sm:$0xf]
  %v29 = vld [vmem:[%s0 + $0x40] sm:$0xf]
  %v30 = vld [vmem:[%s0 + $0x44] sm:$0xf]
  %v31 = vld [vmem:[%s0 + $0x48] sm:$0xf]
  %v32 = vld [vmem:[%s0 + $0x4c] sm:$0xf]
  %v33 = vld [vmem:[%s0 + $0x50] sm:$0xf]
  %v34 = vld [vmem:[%s0 + $0x54] sm:$0xf]
  %v35 = vld [vmem:[%s0 + $0x58] sm:$0xf]
  %v36 = vld [vmem:[%s0 + $0x5c] sm:$0xf]
  %v37 = vld [vmem:[%s0 + $0x60] sm:$0xf]
  %v38 = vld [vmem:[%s0 + $0x64] sm:$0xf]
  %v39 = vld [vmem:[%s0 + $0x68] sm:$0xf]
  %v40 = vld [vmem:[%s0 + $0x6c] sm:$0xf]
  %v41 = vld [vmem:[%s0 + $0x70] sm:$0xf]
  %v42 = vld [vmem:[%s0 + $0x74] sm:$0xf]
  %v43 = vld [vmem:[%s0 + $0x78] sm:$0xf]
  %v44 = vld [vmem:[%s0 + $0x7c] sm:$0xf]
  %v45 = vld [vmem:[%s0 + $0x80] sm:$0xf]
  %v46 = vld [vmem:[%s0 + $0x84] sm:$0xf]
  %v47 = vld [vmem:[%s0 + $0x88] sm:$0xf]
  %v48 = vld [vmem:[%s0 + $0x8c] sm:$0xf]
  %v49 = vld [vmem:[%s0 + $0x90] sm:$0xf]
  %v50 = vld [vmem:[%s0 + $0x94] sm:$0xf]
  %v51 = vld [vmem:[%s0 + $0x98] sm:$0xf]
  %v52 = vld [vmem:[%s0 + $0x9c] sm:$0xf]
  %v53 = vld [vmem:[%s0 + $0xa0] sm:$0xf]
  %v54 = vld [vmem:[%s0 + $0xa4] sm:$0xf]
  %v55 = vld [vmem:[%s0 + $0xa8] sm:$0xf]
  %v56 = vld [vmem:[%s0 + $0xac] sm:$0xf]
  %v57 = vld [vmem:[%s0 + $0xb0] sm:$0xf]
  %v58 = vld [vmem:[%s0 + $0xb4] sm:$0xf]
  %v59 = vld [vmem:[%s0 + $0xb8] sm:$0xf]
  %v60 = vld [vmem:[%s0 + $0xbc] sm:$0xf]
  %v61 = vld [vmem:[%s0 + $0xc0] sm:$0xf]
  %v62 = vld [vmem:[%s0 + $0xc4] sm:$0xf]
  %v63 = vld [vmem:[%s0 + $0xc8] sm:$0xf]
  %v64 = vld [vmem:[%s0 + $0xcc] sm:$0xf]
  %v65 = vld [vmem:[%s0 + $0xd0] sm:$0xf]
  %v66 = vld [vmem:[%s0 + $0xd4] sm:$0xf]
  %v67 = vld [vmem:[%s0 + $0xd8] sm:$0xf]
  %v68 = vld [vmem:[%s0 + $0xdc] sm:$0xf]
  %v69 = vld [vmem:[%s0 + $0xe0] sm:$0xf]
  %v70 = vld [vmem:[%s0 + $0xe4] sm:$0xf]
  %v71 = vld [vmem:[%s0 + $0xe8] sm:$0xf]
  %v72 = vld [vmem:[%s0 + $0xec] sm:$0xf]
  %v73 = vld [vmem:[%s0 + $0xf0] sm:$0xf]
  %v74 = vld [vmem:[%s0 + $0xf4] sm:$0xf]
  %v75 = vld [vmem:[%s0 + $0xf8] sm:$0xf]
  %v76 = vld [vmem:[%s0 + $0xfc] sm:$0xf]
  %v77 = vld [vmem:[%s1] sm:$0xf]
  %v78 = vld [vmem:[%s1 + $0x4] sm:$0xf]
  %v79 = vld [vmem:[%s1 + $0x8] sm:$0xf]
  %v80 = vld [vmem:[%s1 + $0xc] sm:$0xf]
  %v81 = vld [vmem:[%s1 + $0x10] sm:$0xf]
  %v82 = vld [vmem:[%s1 + $0x14] sm:$0xf]
  %v83 = vld [vmem:[%s1 + $0x18] sm:$0xf]
  %v84 = vld [vmem:[%s1 + $0x1c] sm:$0xf]
  %v85 = vld [vmem:[%s1 + $0x20] sm:$0xf]
  %v86 = vld [vmem:[%s1 + $0x24] sm:$0xf]
  %v87 = vld [vmem:[%s1 + $0x28] sm:$0xf]
  %v88 = vld [vmem:[%s1 + $0x2c] sm:$0xf]
  %v89 = vld [vmem:[%s1 + $0x30] sm:$0xf]
  %v90 = vld [vmem:[%s1 + $0x34] sm:$0xf]
  %v91 = vld [vmem:[%s1 + $0x38] sm:$0xf]
  %v92 = vld [vmem:[%s1 + $0x3c] sm:$0xf]
  %v157 = vunpack.c.l.b16 %v13
  %v158 = vunpack.c.l.b16 %v14
  %v159 = vunpack.c.l.b16 %v15
  %v160 = vunpack.c.l.b16 %v16
  %v161 = vunpack.c.l.b16 %v17
  %v162 = vunpack.c.l.b16 %v18
  %v163 = vunpack.c.l.b16 %v19
  %v164 = vunpack.c.l.b16 %v20
  %v165 = vunpack.c.l.b16 %v21
  %v166 = vunpack.c.l.b16 %v22
  %v167 = vunpack.c.l.b16 %v23
  %v168 = vunpack.c.l.b16 %v24
  %v169 = vunpack.c.l.b16 %v25
  %v170 = vunpack.c.l.b16 %v26
  %v171 = vunpack.c.l.b16 %v27
  %v172 = vunpack.c.l.b16 %v28
  %v173 = vunpack.c.l.b16 %v29
  %v174 = vunpack.c.l.b16 %v30
  %v175 = vunpack.c.l.b16 %v31
  %v176 = vunpack.c.l.b16 %v32
  %v177 = vunpack.c.l.b16 %v33
  %v178 = vunpack.c.l.b16 %v34
  %v179 = vunpack.c.l.b16 %v35
  %v180 = vunpack.c.l.b16 %v36
  %v181 = vunpack.c.l.b16 %v37
  %v182 = vunpack.c.l.b16 %v38
  %v183 = vunpack.c.l.b16 %v39
  %v184 = vunpack.c.l.b16 %v40
  %v185 = vunpack.c.l.b16 %v41
  %v186 = vunpack.c.l.b16 %v42
  %v187 = vunpack.c.l.b16 %v43
  %v188 = vunpack.c.l.b16 %v44
  %v189 = vunpack.c.l.b16 %v45
  %v190 = vunpack.c.l.b16 %v46
  %v191 = vunpack.c.l.b16 %v47
  %v192 = vunpack.c.l.b16 %v48
  %v193 = vunpack.c.l.b16 %v49
  %v194 = vunpack.c.l.b16 %v50
  %v195 = vunpack.c.l.b16 %v51
  %v196 = vunpack.c.l.b16 %v52
  %v197 = vunpack.c.l.b16 %v53
  %v198 = vunpack.c.l.b16 %v54
  %v199 = vunpack.c.l.b16 %v55
  %v200 = vunpack.c.l.b16 %v56
  %v201 = vunpack.c.l.b16 %v57
  %v202 = vunpack.c.l.b16 %v58
  %v203 = vunpack.c.l.b16 %v59
  %v204 = vunpack.c.l.b16 %v60
  %v205 = vunpack.c.l.b16 %v61
  %v206 = vunpack.c.l.b16 %v62
  %v207 = vunpack.c.l.b16 %v63
  %v208 = vunpack.c.l.b16 %v64
  %v209 = vunpack.c.l.b16 %v65
  %v210 = vunpack.c.l.b16 %v66
  %v211 = vunpack.c.l.b16 %v67
  %v212 = vunpack.c.l.b16 %v68
  %v213 = vunpack.c.l.b16 %v69
  %v214 = vunpack.c.l.b16 %v70
  %v215 = vunpack.c.l.b16 %v71
  %v216 = vunpack.c.l.b16 %v72
  %v217 = vunpack.c.l.b16 %v73
  %v218 = vunpack.c.l.b16 %v74
  %v219 = vunpack.c.l.b16 %v75
  %v220 = vunpack.c.l.b16 %v76
  %v221 = vpack.c.b16 %v158, %v157
  %v222 = vpack.c.b16 %v160, %v159
  %v223 = vpack.c.b16 %v162, %v161
  %v224 = vpack.c.b16 %v164, %v163
  %v225 = vpack.c.b16 %v166, %v165
  %v226 = vpack.c.b16 %v168, %v167
  %v227 = vpack.c.b16 %v170, %v169
  %v228 = vpack.c.b16 %v172, %v171
  %v229 = vpack.c.b16 %v174, %v173
  %v230 = vpack.c.b16 %v176, %v175
  %v231 = vpack.c.b16 %v178, %v177
  %v232 = vpack.c.b16 %v180, %v179
  %v233 = vpack.c.b16 %v182, %v181
  %v234 = vpack.c.b16 %v184, %v183
  %v235 = vpack.c.b16 %v186, %v185
  %v236 = vpack.c.b16 %v188, %v187
  %v237 = vpack.c.b16 %v190, %v189
  %v238 = vpack.c.b16 %v192, %v191
  %v239 = vpack.c.b16 %v194, %v193
  %v240 = vpack.c.b16 %v196, %v195
  %v241 = vpack.c.b16 %v198, %v197
  %v242 = vpack.c.b16 %v200, %v199
  %v243 = vpack.c.b16 %v202, %v201
  %v244 = vpack.c.b16 %v204, %v203
  %v245 = vpack.c.b16 %v206, %v205
  %v246 = vpack.c.b16 %v208, %v207
  %v247 = vpack.c.b16 %v210, %v209
  %v248 = vpack.c.b16 %v212, %v211
  %v249 = vpack.c.b16 %v214, %v213
  %v250 = vpack.c.b16 %v216, %v215
  %v251 = vpack.c.b16 %v218, %v217
  %v252 = vpack.c.b16 %v220, %v219
  %v301 = vunpack.c.l.b16 %v77
  %v302 = vunpack.c.l.b16 %v78
  %v303 = vunpack.c.l.b16 %v79
  %v304 = vunpack.c.l.b16 %v80
  %v305 = vunpack.c.l.b16 %v81
  %v306 = vunpack.c.l.b16 %v82
  %v307 = vunpack.c.l.b16 %v83
  %v308 = vunpack.c.l.b16 %v84
  %v309 = vunpack.c.l.b16 %v85
  %v310 = vunpack.c.l.b16 %v86
  %v311 = vunpack.c.l.b16 %v87
  %v312 = vunpack.c.l.b16 %v88
  %v313 = vunpack.c.l.b16 %v89
  %v314 = vunpack.c.l.b16 %v90
  %v315 = vunpack.c.l.b16 %v91
  %v316 = vunpack.c.l.b16 %v92
  %v317 = vpack.c.b16 %v302, %v301
  %v318 = vpack.c.b16 %v304, %v303
  %v319 = vpack.c.b16 %v306, %v305
  %v320 = vpack.c.b16 %v308, %v307
  %v321 = vpack.c.b16 %v310, %v309
  %v322 = vpack.c.b16 %v312, %v311
  %v323 = vpack.c.b16 %v314, %v313
  %v324 = vpack.c.b16 %v316, %v315
  %333 = vmatpush.bf16.msra.mxu0 %v324
  %334 = vmatpush.bf16.msra.mxu0 %v323
  %335 = vmatpush.bf16.msra.mxu0 %v322
  %336 = vmatpush.bf16.msra.mxu0 %v321
  %337 = vmatpush.bf16.msra.mxu0 %v320
  %338 = vmatpush.bf16.msra.mxu0 %v319
  %339 = vmatpush.bf16.msra.mxu0 %v318
  %340 = vmatpush.bf16.msra.mxu0 %v317
  %341 = vmatmul.bf16.gmra.mxu0 %v221
  %v342 = vpop.f32.mrf.mxu0
  %v343 = vadd.f32 0.0, %v342
  %v344 = vpop.f32.mrf.mxu0
  %v345 = vadd.f32 0.0, %v344
  %346 = vmatmul.bf16.gmra.mxu0 %v222
  %v347 = vpop.f32.mrf.mxu0
  %v348 = vadd.f32 0.0, %v347
  %v349 = vpop.f32.mrf.mxu0
  %v350 = vadd.f32 0.0, %v349
  %351 = vmatmul.bf16.gmra.mxu0 %v223
  %v352 = vpop.f32.mrf.mxu0
  %v353 = vadd.f32 0.0, %v352
  %v354 = vpop.f32.mrf.mxu0
  %v355 = vadd.f32 0.0, %v354
  %356 = vmatmul.bf16.gmra.mxu0 %v224
  %v357 = vpop.f32.mrf.mxu0
  %v358 = vadd.f32 0.0, %v357
  %v359 = vpop.f32.mrf.mxu0
  %v360 = vadd.f32 0.0, %v359
  %361 = vmatmul.bf16.gmra.mxu0 %v225
  %v362 = vpop.f32.mrf.mxu0
  %v363 = vadd.f32 0.0, %v362
  %v364 = vpop.f32.mrf.mxu0
  %v365 = vadd.f32 0.0, %v364
  %366 = vmatmul.bf16.gmra.mxu0 %v226
  %v367 = vpop.f32.mrf.mxu0
  %v368 = vadd.f32 0.0, %v367
  %v369 = vpop.f32.mrf.mxu0
  %v370 = vadd.f32 0.0, %v369
  %371 = vmatmul.bf16.gmra.mxu0 %v227
  %v372 = vpop.f32.mrf.mxu0
  %v373 = vadd.f32 0.0, %v372
  %v374 = vpop.f32.mrf.mxu0
  %v375 = vadd.f32 0.0, %v374
  %376 = vmatmul.bf16.gmra.mxu0 %v228
  %v377 = vpop.f32.mrf.mxu0
  %v378 = vadd.f32 0.0, %v377
  %v379 = vpop.f32.mrf.mxu0
  %v380 = vadd.f32 0.0, %v379
  %381 = vmatmul.bf16.gmra.mxu0 %v229
  %v382 = vpop.f32.mrf.mxu0
  %v383 = vadd.f32 0.0, %v382
  %v384 = vpop.f32.mrf.mxu0
  %v385 = vadd.f32 0.0, %v384
  %386 = vmatmul.bf16.gmra.mxu0 %v230
  %v387 = vpop.f32.mrf.mxu0
  %v388 = vadd.f32 0.0, %v387
  %v389 = vpop.f32.mrf.mxu0
  %v390 = vadd.f32 0.0, %v389
  %391 = vmatmul.bf16.gmra.mxu0 %v231
  %v392 = vpop.f32.mrf.mxu0
  %v393 = vadd.f32 0.0, %v392
  %v394 = vpop.f32.mrf.mxu0
  %v395 = vadd.f32 0.0, %v394
  %396 = vmatmul.bf16.gmra.mxu0 %v232
  %v397 = vpop.f32.mrf.mxu0
  %v398 = vadd.f32 0.0, %v397
  %v399 = vpop.f32.mrf.mxu0
  %v400 = vadd.f32 0.0, %v399
  %401 = vmatmul.bf16.gmra.mxu0 %v233
  %v402 = vpop.f32.mrf.mxu0
  %v403 = vadd.f32 0.0, %v402
  %v404 = vpop.f32.mrf.mxu0
  %v405 = vadd.f32 0.0, %v404
  %406 = vmatmul.bf16.gmra.mxu0 %v234
  %v407 = vpop.f32.mrf.mxu0
  %v408 = vadd.f32 0.0, %v407
  %v409 = vpop.f32.mrf.mxu0
  %v410 = vadd.f32 0.0, %v409
  %411 = vmatmul.bf16.gmra.mxu0 %v235
  %v412 = vpop.f32.mrf.mxu0
  %v413 = vadd.f32 0.0, %v412
  %v414 = vpop.f32.mrf.mxu0
  %v415 = vadd.f32 0.0, %v414
  %416 = vmatmul.bf16.gmra.mxu0 %v236
  %v417 = vpop.f32.mrf.mxu0
  %v418 = vadd.f32 0.0, %v417
  %v419 = vpop.f32.mrf.mxu0
  %v420 = vadd.f32 0.0, %v419
  %421 = vmatmul.bf16.gmra.mxu0 %v237
  %v422 = vpop.f32.mrf.mxu0
  %v423 = vadd.f32 0.0, %v422
  %v424 = vpop.f32.mrf.mxu0
  %v425 = vadd.f32 0.0, %v424
  %426 = vmatmul.bf16.gmra.mxu0 %v238
  %v427 = vpop.f32.mrf.mxu0
  %v428 = vadd.f32 0.0, %v427
  %v429 = vpop.f32.mrf.mxu0
  %v430 = vadd.f32 0.0, %v429
  %431 = vmatmul.bf16.gmra.mxu0 %v239
  %v432 = vpop.f32.mrf.mxu0
  %v433 = vadd.f32 0.0, %v432
  %v434 = vpop.f32.mrf.mxu0
  %v435 = vadd.f32 0.0, %v434
  %436 = vmatmul.bf16.gmra.mxu0 %v240
  %v437 = vpop.f32.mrf.mxu0
  %v438 = vadd.f32 0.0, %v437
  %v439 = vpop.f32.mrf.mxu0
  %v440 = vadd.f32 0.0, %v439
  %441 = vmatmul.bf16.gmra.mxu0 %v241
  %v442 = vpop.f32.mrf.mxu0
  %v443 = vadd.f32 0.0, %v442
  %v444 = vpop.f32.mrf.mxu0
  %v445 = vadd.f32 0.0, %v444
  %446 = vmatmul.bf16.gmra.mxu0 %v242
  %v447 = vpop.f32.mrf.mxu0
  %v448 = vadd.f32 0.0, %v447
  %v449 = vpop.f32.mrf.mxu0
  %v450 = vadd.f32 0.0, %v449
  %451 = vmatmul.bf16.gmra.mxu0 %v243
  %v452 = vpop.f32.mrf.mxu0
  %v453 = vadd.f32 0.0, %v452
  %v454 = vpop.f32.mrf.mxu0
  %v455 = vadd.f32 0.0, %v454
  %456 = vmatmul.bf16.gmra.mxu0 %v244
  %v457 = vpop.f32.mrf.mxu0
  %v458 = vadd.f32 0.0, %v457
  %v459 = vpop.f32.mrf.mxu0
  %v460 = vadd.f32 0.0, %v459
  %461 = vmatmul.bf16.gmra.mxu0 %v245
  %v462 = vpop.f32.mrf.mxu0
  %v463 = vadd.f32 0.0, %v462
  %v464 = vpop.f32.mrf.mxu0
  %v465 = vadd.f32 0.0, %v464
  %466 = vmatmul.bf16.gmra.mxu0 %v246
  %v467 = vpop.f32.mrf.mxu0
  %v468 = vadd.f32 0.0, %v467
  %v469 = vpop.f32.mrf.mxu0
  %v470 = vadd.f32 0.0, %v469
  %471 = vmatmul.bf16.gmra.mxu0 %v247
  %v472 = vpop.f32.mrf.mxu0
  %v473 = vadd.f32 0.0, %v472
  %v474 = vpop.f32.mrf.mxu0
  %v475 = vadd.f32 0.0, %v474
  %476 = vmatmul.bf16.gmra.mxu0 %v248
  %v477 = vpop.f32.mrf.mxu0
  %v478 = vadd.f32 0.0, %v477
  %v479 = vpop.f32.mrf.mxu0
  %v480 = vadd.f32 0.0, %v479
  %481 = vmatmul.bf16.gmra.mxu0 %v249
  %v482 = vpop.f32.mrf.mxu0
  %v483 = vadd.f32 0.0, %v482
  %v484 = vpop.f32.mrf.mxu0
  %v485 = vadd.f32 0.0, %v484
  %486 = vmatmul.bf16.gmra.mxu0 %v250
  %v487 = vpop.f32.mrf.mxu0
  %v488 = vadd.f32 0.0, %v487
  %v489 = vpop.f32.mrf.mxu0
  %v490 = vadd.f32 0.0, %v489
  %491 = vmatmul.bf16.gmra.mxu0 %v251
  %v492 = vpop.f32.mrf.mxu0
  %v493 = vadd.f32 0.0, %v492
  %v494 = vpop.f32.mrf.mxu0
  %v495 = vadd.f32 0.0, %v494
  %496 = vmatmul.bf16.gmra.mxu0 %v252
  %v497 = vpop.f32.mrf.mxu0
  %v498 = vadd.f32 0.0, %v497
  %v499 = vpop.f32.mrf.mxu0
  %v500 = vadd.f32 0.0, %v499
  %501 = vdwg.mxu0
  %v502 = vpack.c.bf16 %v343, %v343
  %v503 = vpack.c.bf16 %v345, %v345
  %v504 = vpack.c.bf16 %v348, %v348
  %v505 = vpack.c.bf16 %v350, %v350
  %v506 = vpack.c.bf16 %v353, %v353
  %v507 = vpack.c.bf16 %v355, %v355
  %v508 = vpack.c.bf16 %v358, %v358
  %v509 = vpack.c.bf16 %v360, %v360
  %v510 = vpack.c.bf16 %v363, %v363
  %v511 = vpack.c.bf16 %v365, %v365
  %v512 = vpack.c.bf16 %v368, %v368
  %v513 = vpack.c.bf16 %v370, %v370
  %v514 = vpack.c.bf16 %v373, %v373
  %v515 = vpack.c.bf16 %v375, %v375
  %v516 = vpack.c.bf16 %v378, %v378
  %v517 = vpack.c.bf16 %v380, %v380
  %v518 = vpack.c.bf16 %v383, %v383
  %v519 = vpack.c.bf16 %v385, %v385
  %v520 = vpack.c.bf16 %v388, %v388
  %v521 = vpack.c.bf16 %v390, %v390
  %v522 = vpack.c.bf16 %v393, %v393
  %v523 = vpack.c.bf16 %v395, %v395
  %v524 = vpack.c.bf16 %v398, %v398
  %v525 = vpack.c.bf16 %v400, %v400
  %v526 = vpack.c.bf16 %v403, %v403
  %v527 = vpack.c.bf16 %v405, %v405
  %v528 = vpack.c.bf16 %v408, %v408
  %v529 = vpack.c.bf16 %v410, %v410
  %v530 = vpack.c.bf16 %v413, %v413
  %v531 = vpack.c.bf16 %v415, %v415
  %v532 = vpack.c.bf16 %v418, %v418
  %v533 = vpack.c.bf16 %v420, %v420
  %v534 = vpack.c.bf16 %v423, %v423
  %v535 = vpack.c.bf16 %v425, %v425
  %v536 = vpack.c.bf16 %v428, %v428
  %v537 = vpack.c.bf16 %v430, %v430
  %v538 = vpack.c.bf16 %v433, %v433
  %v539 = vpack.c.bf16 %v435, %v435
  %v540 = vpack.c.bf16 %v438, %v438
  %v541 = vpack.c.bf16 %v440, %v440
  %v542 = vpack.c.bf16 %v443, %v443
  %v543 = vpack.c.bf16 %v445, %v445
  %v544 = vpack.c.bf16 %v448, %v448
  %v545 = vpack.c.bf16 %v450, %v450
  %v546 = vpack.c.bf16 %v453, %v453
  %v547 = vpack.c.bf16 %v455, %v455
  %v548 = vpack.c.bf16 %v458, %v458
  %v549 = vpack.c.bf16 %v460, %v460
  %v550 = vpack.c.bf16 %v463, %v463
  %v551 = vpack.c.bf16 %v465, %v465
  %v552 = vpack.c.bf16 %v468, %v468
  %v553 = vpack.c.bf16 %v470, %v470
  %v554 = vpack.c.bf16 %v473, %v473
  %v555 = vpack.c.bf16 %v475, %v475
  %v556 = vpack.c.bf16 %v478, %v478
  %v557 = vpack.c.bf16 %v480, %v480
  %v558 = vpack.c.bf16 %v483, %v483
  %v559 = vpack.c.bf16 %v485, %v485
  %v560 = vpack.c.bf16 %v488, %v488
  %v561 = vpack.c.bf16 %v490, %v490
  %v562 = vpack.c.bf16 %v493, %v493
  %v563 = vpack.c.bf16 %v495, %v495
  %v564 = vpack.c.bf16 %v498, %v498
  %v565 = vpack.c.bf16 %v500, %v500
  %566 = vst [vmem:[%s2] sm:$0xf] %v502
  %567 = vst [vmem:[%s2 + $0x4] sm:$0xf] %v503
  %568 = vst [vmem:[%s2 + $0x8] sm:$0xf] %v504
  %569 = vst [vmem:[%s2 + $0xc] sm:$0xf] %v505
  %570 = vst [vmem:[%s2 + $0x10] sm:$0xf] %v506
  %571 = vst [vmem:[%s2 + $0x14] sm:$0xf] %v507
  %572 = vst [vmem:[%s2 + $0x18] sm:$0xf] %v508
  %573 = vst [vmem:[%s2 + $0x1c] sm:$0xf] %v509
  %574 = vst [vmem:[%s2 + $0x20] sm:$0xf] %v510
  %575 = vst [vmem:[%s2 + $0x24] sm:$0xf] %v511
  %576 = vst [vmem:[%s2 + $0x28] sm:$0xf] %v512
  %577 = vst [vmem:[%s2 + $0x2c] sm:$0xf] %v513
  %578 = vst [vmem:[%s2 + $0x30] sm:$0xf] %v514
  %579 = vst [vmem:[%s2 + $0x34] sm:$0xf] %v515
  %580 = vst [vmem:[%s2 + $0x38] sm:$0xf] %v516
  %581 = vst [vmem:[%s2 + $0x3c] sm:$0xf] %v517
  %582 = vst [vmem:[%s2 + $0x40] sm:$0xf] %v518
  %583 = vst [vmem:[%s2 + $0x44] sm:$0xf] %v519
  %584 = vst [vmem:[%s2 + $0x48] sm:$0xf] %v520
  %585 = vst [vmem:[%s2 + $0x4c] sm:$0xf] %v521
  %586 = vst [vmem:[%s2 + $0x50] sm:$0xf] %v522
  %587 = vst [vmem:[%s2 + $0x54] sm:$0xf] %v523
  %588 = vst [vmem:[%s2 + $0x58] sm:$0xf] %v524
  %589 = vst [vmem:[%s2 + $0x5c] sm:$0xf] %v525
  %590 = vst [vmem:[%s2 + $0x60] sm:$0xf] %v526
  %591 = vst [vmem:[%s2 + $0x64] sm:$0xf] %v527
  %592 = vst [vmem:[%s2 + $0x68] sm:$0xf] %v528
  %593 = vst [vmem:[%s2 + $0x6c] sm:$0xf] %v529
  %594 = vst [vmem:[%s2 + $0x70] sm:$0xf] %v530
  %595 = vst [vmem:[%s2 + $0x74] sm:$0xf] %v531
  %596 = vst [vmem:[%s2 + $0x78] sm:$0xf] %v532
  %597 = vst [vmem:[%s2 + $0x7c] sm:$0xf] %v533
  %598 = vst [vmem:[%s2 + $0x80] sm:$0xf] %v534
  %599 = vst [vmem:[%s2 + $0x84] sm:$0xf] %v535
  %600 = vst [vmem:[%s2 + $0x88] sm:$0xf] %v536
  %601 = vst [vmem:[%s2 + $0x8c] sm:$0xf] %v537
  %602 = vst [vmem:[%s2 + $0x90] sm:$0xf] %v538
  %603 = vst [vmem:[%s2 + $0x94] sm:$0xf] %v539
  %604 = vst [vmem:[%s2 + $0x98] sm:$0xf] %v540
  %605 = vst [vmem:[%s2 + $0x9c] sm:$0xf] %v541
  %606 = vst [vmem:[%s2 + $0xa0] sm:$0xf] %v542
  %607 = vst [vmem:[%s2 + $0xa4] sm:$0xf] %v543
  %608 = vst [vmem:[%s2 + $0xa8] sm:$0xf] %v544
  %609 = vst [vmem:[%s2 + $0xac] sm:$0xf] %v545
  %610 = vst [vmem:[%s2 + $0xb0] sm:$0xf] %v546
  %611 = vst [vmem:[%s2 + $0xb4] sm:$0xf] %v547
  %612 = vst [vmem:[%s2 + $0xb8] sm:$0xf] %v548
  %613 = vst [vmem:[%s2 + $0xbc] sm:$0xf] %v549
  %614 = vst [vmem:[%s2 + $0xc0] sm:$0xf] %v550
  %615 = vst [vmem:[%s2 + $0xc4] sm:$0xf] %v551
  %616 = vst [vmem:[%s2 + $0xc8] sm:$0xf] %v552
  %617 = vst [vmem:[%s2 + $0xcc] sm:$0xf] %v553
  %618 = vst [vmem:[%s2 + $0xd0] sm:$0xf] %v554
  %619 = vst [vmem:[%s2 + $0xd4] sm:$0xf] %v555
  %620 = vst [vmem:[%s2 + $0xd8] sm:$0xf] %v556
  %621 = vst [vmem:[%s2 + $0xdc] sm:$0xf] %v557
  %622 = vst [vmem:[%s2 + $0xe0] sm:$0xf] %v558
  %623 = vst [vmem:[%s2 + $0xe4] sm:$0xf] %v559
  %624 = vst [vmem:[%s2 + $0xe8] sm:$0xf] %v560
  %625 = vst [vmem:[%s2 + $0xec] sm:$0xf] %v561
  %626 = vst [vmem:[%s2 + $0xf0] sm:$0xf] %v562
  %627 = vst [vmem:[%s2 + $0xf4] sm:$0xf] %v563
  %628 = vst [vmem:[%s2 + $0xf8] sm:$0xf] %v564
  %629 = vst [vmem:[%s2 + $0xfc] sm:$0xf] %v565
  %v630 = vadd.f32 %v343, %v345
  %v631 = vadd.f32 %v630, %v348
  %v632 = vadd.f32 %v631, %v350
  %v633 = vadd.f32 %v632, %v353
  %v634 = vadd.f32 %v633, %v355
  %v635 = vadd.f32 %v634, %v358
  %v636 = vadd.f32 %v635, %v360
  %v637 = vadd.f32 %v636, %v363
  %v638 = vadd.f32 %v637, %v365
  %v639 = vadd.f32 %v638, %v368
  %v640 = vadd.f32 %v639, %v370
  %v641 = vadd.f32 %v640, %v373
  %v642 = vadd.f32 %v641, %v375
  %v643 = vadd.f32 %v642, %v378
  %v644 = vadd.f32 %v643, %v380
  %v645 = vadd.f32 %v644, %v383
  %v646 = vadd.f32 %v645, %v385
  %v647 = vadd.f32 %v646, %v388
  %v648 = vadd.f32 %v647, %v390
  %v649 = vadd.f32 %v648, %v393
  %v650 = vadd.f32 %v649, %v395
  %v651 = vadd.f32 %v650, %v398
  %v652 = vadd.f32 %v651, %v400
  %v653 = vadd.f32 %v652, %v403
  %v654 = vadd.f32 %v653, %v405
  %v655 = vadd.f32 %v654, %v408
  %v656 = vadd.f32 %v655, %v410
  %v657 = vadd.f32 %v656, %v413
  %v658 = vadd.f32 %v657, %v415
  %v659 = vadd.f32 %v658, %v418
  %v660 = vadd.f32 %v659, %v420
  %v661 = vadd.f32 %v660, %v423
  %v662 = vadd.f32 %v661, %v425
  %v663 = vadd.f32 %v662, %v428
  %v664 = vadd.f32 %v663, %v430
  %v665 = vadd.f32 %v664, %v433
  %v666 = vadd.f32 %v665, %v435
  %v667 = vadd.f32 %v666, %v438
  %v668 = vadd.f32 %v667, %v440
  %v669 = vadd.f32 %v668, %v443
  %v670 = vadd.f32 %v669, %v445
  %v671 = vadd.f32 %v670, %v448
  %v672 = vadd.f32 %v671, %v450
  %v673 = vadd.f32 %v672, %v453
  %v674 = vadd.f32 %v673, %v455
  %v675 = vadd.f32 %v674, %v458
  %v676 = vadd.f32 %v675, %v460
  %v677 = vadd.f32 %v676, %v463
  %v678 = vadd.f32 %v677, %v465
  %v679 = vadd.f32 %v678, %v468
  %v680 = vadd.f32 %v679, %v470
  %v681 = vadd.f32 %v680, %v473
  %v682 = vadd.f32 %v681, %v475
  %v683 = vadd.f32 %v682, %v478
  %v684 = vadd.f32 %v683, %v480
  %v685 = vadd.f32 %v684, %v483
  %v686 = vadd.f32 %v685, %v485
  %v687 = vadd.f32 %v686, %v488
  %v688 = vadd.f32 %v687, %v490
  %v689 = vadd.f32 %v688, %v493
  %v690 = vadd.f32 %v689, %v495
  %v691 = vadd.f32 %v690, %v498
  %v692 = vadd.f32 %v691, %v500
  %v693 = vrot.slane %v692, 4
  %v694 = vadd.f32 %v692, %v693
  %v695 = vrot.slane %v694, 2
  %v696 = vadd.f32 %v694, %v695
  %v697 = vrot.slane %v696, 1
  %v698 = vadd.f32 %v696, %v697
  %v699 = vmul.f32 %v343, %v343
  %v700 = vmul.f32 %v345, %v345
  %v701 = vmul.f32 %v348, %v348
  %v702 = vmul.f32 %v350, %v350
  %v703 = vmul.f32 %v353, %v353
  %v704 = vmul.f32 %v355, %v355
  %v705 = vmul.f32 %v358, %v358
  %v706 = vmul.f32 %v360, %v360
  %v707 = vmul.f32 %v363, %v363
  %v708 = vmul.f32 %v365, %v365
  %v709 = vmul.f32 %v368, %v368
  %v710 = vmul.f32 %v370, %v370
  %v711 = vmul.f32 %v373, %v373
  %v712 = vmul.f32 %v375, %v375
  %v713 = vmul.f32 %v378, %v378
  %v714 = vmul.f32 %v380, %v380
  %v715 = vmul.f32 %v383, %v383
  %v716 = vmul.f32 %v385, %v385
  %v717 = vmul.f32 %v388, %v388
  %v718 = vmul.f32 %v390, %v390
  %v719 = vmul.f32 %v393, %v393
  %v720 = vmul.f32 %v395, %v395
  %v721 = vmul.f32 %v398, %v398
  %v722 = vmul.f32 %v400, %v400
  %v723 = vmul.f32 %v403, %v403
  %v724 = vmul.f32 %v405, %v405
  %v725 = vmul.f32 %v408, %v408
  %v726 = vmul.f32 %v410, %v410
  %v727 = vmul.f32 %v413, %v413
  %v728 = vmul.f32 %v415, %v415
  %v729 = vmul.f32 %v418, %v418
  %v730 = vmul.f32 %v420, %v420
  %v731 = vmul.f32 %v423, %v423
  %v732 = vmul.f32 %v425, %v425
  %v733 = vmul.f32 %v428, %v428
  %v734 = vmul.f32 %v430, %v430
  %v735 = vmul.f32 %v433, %v433
  %v736 = vmul.f32 %v435, %v435
  %v737 = vmul.f32 %v438, %v438
  %v738 = vmul.f32 %v440, %v440
  %v739 = vmul.f32 %v443, %v443
  %v740 = vmul.f32 %v445, %v445
  %v741 = vmul.f32 %v448, %v448
  %v742 = vmul.f32 %v450, %v450
  %v743 = vmul.f32 %v453, %v453
  %v744 = vmul.f32 %v455, %v455
  %v745 = vmul.f32 %v458, %v458
  %v746 = vmul.f32 %v460, %v460
  %v747 = vmul.f32 %v463, %v463
  %v748 = vmul.f32 %v465, %v465
  %v749 = vmul.f32 %v468, %v468
  %v750 = vmul.f32 %v470, %v470
  %v751 = vmul.f32 %v473, %v473
  %v752 = vmul.f32 %v475, %v475
  %v753 = vmul.f32 %v478, %v478
  %v754 = vmul.f32 %v480, %v480
  %v755 = vmul.f32 %v483, %v483
  %v756 = vmul.f32 %v485, %v485
  %v757 = vmul.f32 %v488, %v488
  %v758 = vmul.f32 %v490, %v490
  %v759 = vmul.f32 %v493, %v493
  %v760 = vmul.f32 %v495, %v495
  %v761 = vmul.f32 %v498, %v498
  %v762 = vmul.f32 %v500, %v500
  %v763 = vadd.f32 %v699, %v700
  %v764 = vadd.f32 %v763, %v701
  %v765 = vadd.f32 %v764, %v702
  %v766 = vadd.f32 %v765, %v703
  %v767 = vadd.f32 %v766, %v704
  %v768 = vadd.f32 %v767, %v705
  %v769 = vadd.f32 %v768, %v706
  %v770 = vadd.f32 %v769, %v707
  %v771 = vadd.f32 %v770, %v708
  %v772 = vadd.f32 %v771, %v709
  %v773 = vadd.f32 %v772, %v710
  %v774 = vadd.f32 %v773, %v711
  %v775 = vadd.f32 %v774, %v712
  %v776 = vadd.f32 %v775, %v713
  %v777 = vadd.f32 %v776, %v714
  %v778 = vadd.f32 %v777, %v715
  %v779 = vadd.f32 %v778, %v716
  %v780 = vadd.f32 %v779, %v717
  %v781 = vadd.f32 %v780, %v718
  %v782 = vadd.f32 %v781, %v719
  %v783 = vadd.f32 %v782, %v720
  %v784 = vadd.f32 %v783, %v721
  %v785 = vadd.f32 %v784, %v722
  %v786 = vadd.f32 %v785, %v723
  %v787 = vadd.f32 %v786, %v724
  %v788 = vadd.f32 %v787, %v725
  %v789 = vadd.f32 %v788, %v726
  %v790 = vadd.f32 %v789, %v727
  %v791 = vadd.f32 %v790, %v728
  %v792 = vadd.f32 %v791, %v729
  %v793 = vadd.f32 %v792, %v730
  %v794 = vadd.f32 %v793, %v731
  %v795 = vadd.f32 %v794, %v732
  %v796 = vadd.f32 %v795, %v733
  %v797 = vadd.f32 %v796, %v734
  %v798 = vadd.f32 %v797, %v735
  %v799 = vadd.f32 %v798, %v736
  %v800 = vadd.f32 %v799, %v737
  %v801 = vadd.f32 %v800, %v738
  %v802 = vadd.f32 %v801, %v739
  %v803 = vadd.f32 %v802, %v740
  %v804 = vadd.f32 %v803, %v741
  %v805 = vadd.f32 %v804, %v742
  %v806 = vadd.f32 %v805, %v743
  %v807 = vadd.f32 %v806, %v744
  %v808 = vadd.f32 %v807, %v745
  %v809 = vadd.f32 %v808, %v746
  %v810 = vadd.f32 %v809, %v747
  %v811 = vadd.f32 %v810, %v748
  %v812 = vadd.f32 %v811, %v749
  %v813 = vadd.f32 %v812, %v750
  %v814 = vadd.f32 %v813, %v751
  %v815 = vadd.f32 %v814, %v752
  %v816 = vadd.f32 %v815, %v753
  %v817 = vadd.f32 %v816, %v754
  %v818 = vadd.f32 %v817, %v755
  %v819 = vadd.f32 %v818, %v756
  %v820 = vadd.f32 %v819, %v757
  %v821 = vadd.f32 %v820, %v758
  %v822 = vadd.f32 %v821, %v759
  %v823 = vadd.f32 %v822, %v760
  %v824 = vadd.f32 %v823, %v761
  %v825 = vadd.f32 %v824, %v762
  %v826 = vrot.slane %v825, 4
  %v827 = vadd.f32 %v825, %v826
  %v828 = vrot.slane %v827, 2
  %v829 = vadd.f32 %v827, %v828
  %v830 = vrot.slane %v829, 1
  %v831 = vadd.f32 %v829, %v830
  %vm832 = vcmask 1040384
  %v833 = vsel %vm832, %v698, %v831
  %834 = vst [vmem:[%s3] sm:$0x3] %v833
  // Predicated region
  $region10: #{bottleneck_forward.6} parent=0 // pred_check
    _
  $region11: #{bottleneck_forward.6} parent=0 // pred_check_branch
    %836 = sbr.rel (0) target = $region13
  $region12: #{bottleneck_forward.6} parent=0 // pred_region
    _
  $region13: #{bottleneck_forward.6} parent=0 // pred_fallthru
    _
  // Predicated region
  $region14: #{bottleneck_forward.6} parent=0 // pred_check
    _
  $region15: #{bottleneck_forward.6} parent=0 // pred_check_branch
    %838 = sbr.rel (0) target = $region17
  $region16: #{bottleneck_forward.6} parent=0 // pred_region
    _
  $region17: #{bottleneck_forward.6} parent=0 // pred_fallthru
    _
  // Predicated region
  $region18: #{bottleneck_forward.6} parent=0 // pred_check
    _
  $region19: #{bottleneck_forward.6} parent=0 // pred_check_branch
    %840 = sbr.rel (0) target = $region21
  $region20: #{bottleneck_forward.6} parent=0 // pred_region
    _
  $region21: #{bottleneck_forward.6} parent=0 // pred_fallthru
    _
  // Predicated region
  $region22: #{bottleneck_forward.6} parent=0 // pred_check
    _
  $region23: #{bottleneck_forward.6} parent=0 // pred_check_branch
    %842 = sbr.rel (0) target = $region25
  $region24: #{bottleneck_forward.6} parent=0 // pred_region
    _
  $region25: #{bottleneck_forward.6} parent=0 // pred_fallthru
    _

// kernel: bottleneck_forward.9
$region0: #{bottleneck_forward.9}
  #allocation0 [shape = 'u32[]', space=smem, size = 0x4, offset = 0x4, fixed_abs, tag = 'smem constant byte address 0x4 - core index']
  #allocation1 [shape = 'u32[72,128]{1,0:T(1,128)}', space=vmem, size = 0x9000, scoped, tag = 'internal scratch']
  %s0 = inlined_call_operand.vmem [shape: bf16[128,128], index: 0, kind: input, shape index: {}]
  %s1 = inlined_call_operand.vmem [shape: f32[2,128], index: 1, kind: input, shape index: {}]
  %s2 = inlined_call_operand.vmem [shape: bf16[128,128], index: 2, kind: input, shape index: {}]
  %s3 = inlined_call_operand.vmem [shape: bf16[128,128], index: 3, kind: output, shape index: {0}]
  %s4 = inlined_call_operand.vmem [shape: f32[1,2,128], index: 4, kind: output, shape index: {1}]
  %5 = xla_tuple %s3, %s4
  %s6 = sld [smem:[#allocation0]]
  $region30: #{bottleneck_forward.9} parent=0
    _
  %s8 = ssub.s32 1, %s6
  %s9 = scalar_select 0, %s8, %s6
  // Predicated region
  $region2: #{bottleneck_forward.9} parent=0 // pred_check
    _
  $region3: #{bottleneck_forward.9} parent=0 // pred_check_branch
    %11 = sbr.rel (0) target = $region5
  $region4: #{bottleneck_forward.9} parent=0 // pred_region
    _
  $region5: #{bottleneck_forward.9} parent=0 // pred_fallthru
    _
  // Predicated region
  $region6: #{bottleneck_forward.9} parent=0 // pred_check
    _
  $region7: #{bottleneck_forward.9} parent=0 // pred_check_branch
    %13 = sbr.rel (0) target = $region9
  $region8: #{bottleneck_forward.9} parent=0 // pred_region
    _
  $region9: #{bottleneck_forward.9} parent=0 // pred_fallthru
    _
  // Predicated region
  $region10: #{bottleneck_forward.9} parent=0 // pred_check
    _
  $region11: #{bottleneck_forward.9} parent=0 // pred_check_branch
    %15 = sbr.rel (0) target = $region13
  $region12: #{bottleneck_forward.9} parent=0 // pred_region
    _
  $region13: #{bottleneck_forward.9} parent=0 // pred_fallthru
    _
  %v16 = vld [vmem:[%s0] sm:$0xf]
  %v17 = vld [vmem:[%s0 + $0x4] sm:$0xf]
  %v18 = vld [vmem:[%s0 + $0x8] sm:$0xf]
  %v19 = vld [vmem:[%s0 + $0xc] sm:$0xf]
  %v20 = vld [vmem:[%s0 + $0x10] sm:$0xf]
  %v21 = vld [vmem:[%s0 + $0x14] sm:$0xf]
  %v22 = vld [vmem:[%s0 + $0x18] sm:$0xf]
  %v23 = vld [vmem:[%s0 + $0x1c] sm:$0xf]
  %v24 = vld [vmem:[%s0 + $0x20] sm:$0xf]
  %v25 = vld [vmem:[%s0 + $0x24] sm:$0xf]
  %v26 = vld [vmem:[%s0 + $0x28] sm:$0xf]
  %v27 = vld [vmem:[%s0 + $0x2c] sm:$0xf]
  %v28 = vld [vmem:[%s0 + $0x30] sm:$0xf]
  %v29 = vld [vmem:[%s0 + $0x34] sm:$0xf]
  %v30 = vld [vmem:[%s0 + $0x38] sm:$0xf]
  %v31 = vld [vmem:[%s0 + $0x3c] sm:$0xf]
  %v32 = vld [vmem:[%s1] sm:$0x1]
  %v33 = vunpack.c.l.bf16 %v16
  %v34 = vunpack.c.l.bf16 %v17
  %v35 = vunpack.c.l.bf16 %v18
  %v36 = vunpack.c.l.bf16 %v19
  %v37 = vunpack.c.l.bf16 %v20
  %v38 = vunpack.c.l.bf16 %v21
  %v39 = vunpack.c.l.bf16 %v22
  %v40 = vunpack.c.l.bf16 %v23
  %v41 = vunpack.c.l.bf16 %v24
  %v42 = vunpack.c.l.bf16 %v25
  %v43 = vunpack.c.l.bf16 %v26
  %v44 = vunpack.c.l.bf16 %v27
  %v45 = vunpack.c.l.bf16 %v28
  %v46 = vunpack.c.l.bf16 %v29
  %v47 = vunpack.c.l.bf16 %v30
  %v48 = vunpack.c.l.bf16 %v31
  %v49 = vperm.slane %v32, 0
  %v50 = vmul.f32 %v33, %v49
  %v51 = vmul.f32 %v34, %v49
  %v52 = vmul.f32 %v35, %v49
  %v53 = vmul.f32 %v36, %v49
  %v54 = vmul.f32 %v37, %v49
  %v55 = vmul.f32 %v38, %v49
  %v56 = vmul.f32 %v39, %v49
  %v57 = vmul.f32 %v40, %v49
  %v58 = vmul.f32 %v41, %v49
  %v59 = vmul.f32 %v42, %v49
  %v60 = vmul.f32 %v43, %v49
  %v61 = vmul.f32 %v44, %v49
  %v62 = vmul.f32 %v45, %v49
  %v63 = vmul.f32 %v46, %v49
  %v64 = vmul.f32 %v47, %v49
  %v65 = vmul.f32 %v48, %v49
  %v66 = vld [vmem:[%s1 + $0x1] sm:$0x1]
  %v67 = vperm.slane %v66, 0
  %v68 = vadd.f32 %v50, %v67
  %v69 = vadd.f32 %v51, %v67
  %v70 = vadd.f32 %v52, %v67
  %v71 = vadd.f32 %v53, %v67
  %v72 = vadd.f32 %v54, %v67
  %v73 = vadd.f32 %v55, %v67
  %v74 = vadd.f32 %v56, %v67
  %v75 = vadd.f32 %v57, %v67
  %v76 = vadd.f32 %v58, %v67
  %v77 = vadd.f32 %v59, %v67
  %v78 = vadd.f32 %v60, %v67
  %v79 = vadd.f32 %v61, %v67
  %v80 = vadd.f32 %v62, %v67
  %v81 = vadd.f32 %v63, %v67
  %v82 = vadd.f32 %v64, %v67
  %v83 = vadd.f32 %v65, %v67
  %v84 = vmax.f32 %v68, 0.0
  %v85 = vmax.f32 %v69, 0.0
  %v86 = vmax.f32 %v70, 0.0
  %v87 = vmax.f32 %v71, 0.0
  %v88 = vmax.f32 %v72, 0.0
  %v89 = vmax.f32 %v73, 0.0
  %v90 = vmax.f32 %v74, 0.0
  %v91 = vmax.f32 %v75, 0.0
  %v92 = vmax.f32 %v76, 0.0
  %v93 = vmax.f32 %v77, 0.0
  %v94 = vmax.f32 %v78, 0.0
  %v95 = vmax.f32 %v79, 0.0
  %v96 = vmax.f32 %v80, 0.0
  %v97 = vmax.f32 %v81, 0.0
  %v98 = vmax.f32 %v82, 0.0
  %v99 = vmax.f32 %v83, 0.0
  %v100 = vpack.c.bf16 %v85, %v84
  %v101 = vpack.c.bf16 %v87, %v86
  %v102 = vpack.c.bf16 %v89, %v88
  %v103 = vpack.c.bf16 %v91, %v90
  %v104 = vpack.c.bf16 %v93, %v92
  %v105 = vpack.c.bf16 %v95, %v94
  %v106 = vpack.c.bf16 %v97, %v96
  %v107 = vpack.c.bf16 %v99, %v98
  %v108 = vld [vmem:[%s2] sm:$0xf]
  %v109 = vld [vmem:[%s2 + $0x4] sm:$0xf]
  %v110 = vld [vmem:[%s2 + $0x8] sm:$0xf]
  %v111 = vld [vmem:[%s2 + $0xc] sm:$0xf]
  %v112 = vld [vmem:[%s2 + $0x10] sm:$0xf]
  %v113 = vld [vmem:[%s2 + $0x14] sm:$0xf]
  %v114 = vld [vmem:[%s2 + $0x18] sm:$0xf]
  %v115 = vld [vmem:[%s2 + $0x1c] sm:$0xf]
  %v116 = vld [vmem:[%s2 + $0x20] sm:$0xf]
  %v117 = vld [vmem:[%s2 + $0x24] sm:$0xf]
  %v118 = vld [vmem:[%s2 + $0x28] sm:$0xf]
  %v119 = vld [vmem:[%s2 + $0x2c] sm:$0xf]
  %v120 = vld [vmem:[%s2 + $0x30] sm:$0xf]
  %v121 = vld [vmem:[%s2 + $0x34] sm:$0xf]
  %v122 = vld [vmem:[%s2 + $0x38] sm:$0xf]
  %v123 = vld [vmem:[%s2 + $0x3c] sm:$0xf]
  %v140 = vunpack.c.l.b16 %v108
  %v141 = vunpack.c.l.b16 %v109
  %v142 = vunpack.c.l.b16 %v110
  %v143 = vunpack.c.l.b16 %v111
  %v144 = vunpack.c.l.b16 %v112
  %v145 = vunpack.c.l.b16 %v113
  %v146 = vunpack.c.l.b16 %v114
  %v147 = vunpack.c.l.b16 %v115
  %v148 = vunpack.c.l.b16 %v116
  %v149 = vunpack.c.l.b16 %v117
  %v150 = vunpack.c.l.b16 %v118
  %v151 = vunpack.c.l.b16 %v119
  %v152 = vunpack.c.l.b16 %v120
  %v153 = vunpack.c.l.b16 %v121
  %v154 = vunpack.c.l.b16 %v122
  %v155 = vunpack.c.l.b16 %v123
  %v156 = vpack.c.b16 %v141, %v140
  %v157 = vpack.c.b16 %v143, %v142
  %v158 = vpack.c.b16 %v145, %v144
  %v159 = vpack.c.b16 %v147, %v146
  %v160 = vpack.c.b16 %v149, %v148
  %v161 = vpack.c.b16 %v151, %v150
  %v162 = vpack.c.b16 %v153, %v152
  %v163 = vpack.c.b16 %v155, %v154
  %172 = vmatpush.bf16.msra.mxu0 %v163
  %173 = vmatpush.bf16.msra.mxu0 %v162
  %174 = vmatpush.bf16.msra.mxu0 %v161
  %175 = vmatpush.bf16.msra.mxu0 %v160
  %176 = vmatpush.bf16.msra.mxu0 %v159
  %177 = vmatpush.bf16.msra.mxu0 %v158
  %178 = vmatpush.bf16.msra.mxu0 %v157
  %179 = vmatpush.bf16.msra.mxu0 %v156
  %180 = vmatmul.bf16.gmra.mxu0 %v100
  %v181 = vpop.f32.mrf.mxu0
  %v182 = vadd.f32 0.0, %v181
  %v183 = vpop.f32.mrf.mxu0
  %v184 = vadd.f32 0.0, %v183
  %185 = vmatmul.bf16.gmra.mxu0 %v101
  %v186 = vpop.f32.mrf.mxu0
  %v187 = vadd.f32 0.0, %v186
  %v188 = vpop.f32.mrf.mxu0
  %v189 = vadd.f32 0.0, %v188
  %190 = vmatmul.bf16.gmra.mxu0 %v102
  %v191 = vpop.f32.mrf.mxu0
  %v192 = vadd.f32 0.0, %v191
  %v193 = vpop.f32.mrf.mxu0
  %v194 = vadd.f32 0.0, %v193
  %195 = vmatmul.bf16.gmra.mxu0 %v103
  %v196 = vpop.f32.mrf.mxu0
  %v197 = vadd.f32 0.0, %v196
  %v198 = vpop.f32.mrf.mxu0
  %v199 = vadd.f32 0.0, %v198
  %200 = vmatmul.bf16.gmra.mxu0 %v104
  %v201 = vpop.f32.mrf.mxu0
  %v202 = vadd.f32 0.0, %v201
  %v203 = vpop.f32.mrf.mxu0
  %v204 = vadd.f32 0.0, %v203
  %205 = vmatmul.bf16.gmra.mxu0 %v105
  %v206 = vpop.f32.mrf.mxu0
  %v207 = vadd.f32 0.0, %v206
  %v208 = vpop.f32.mrf.mxu0
  %v209 = vadd.f32 0.0, %v208
  %210 = vmatmul.bf16.gmra.mxu0 %v106
  %v211 = vpop.f32.mrf.mxu0
  %v212 = vadd.f32 0.0, %v211
  %v213 = vpop.f32.mrf.mxu0
  %v214 = vadd.f32 0.0, %v213
  %215 = vmatmul.bf16.gmra.mxu0 %v107
  %v216 = vpop.f32.mrf.mxu0
  %v217 = vadd.f32 0.0, %v216
  %v218 = vpop.f32.mrf.mxu0
  %v219 = vadd.f32 0.0, %v218
  %220 = vdwg.mxu0
  %v221 = vpack.c.bf16 %v182, %v182
  %v222 = vpack.c.bf16 %v184, %v184
  %v223 = vpack.c.bf16 %v187, %v187
  %v224 = vpack.c.bf16 %v189, %v189
  %v225 = vpack.c.bf16 %v192, %v192
  %v226 = vpack.c.bf16 %v194, %v194
  %v227 = vpack.c.bf16 %v197, %v197
  %v228 = vpack.c.bf16 %v199, %v199
  %v229 = vpack.c.bf16 %v202, %v202
  %v230 = vpack.c.bf16 %v204, %v204
  %v231 = vpack.c.bf16 %v207, %v207
  %v232 = vpack.c.bf16 %v209, %v209
  %v233 = vpack.c.bf16 %v212, %v212
  %v234 = vpack.c.bf16 %v214, %v214
  %v235 = vpack.c.bf16 %v217, %v217
  %v236 = vpack.c.bf16 %v219, %v219
  %237 = vst [vmem:[%s3] sm:$0xf] %v221
  %238 = vst [vmem:[%s3 + $0x4] sm:$0xf] %v222
  %239 = vst [vmem:[%s3 + $0x8] sm:$0xf] %v223
  %240 = vst [vmem:[%s3 + $0xc] sm:$0xf] %v224
  %241 = vst [vmem:[%s3 + $0x10] sm:$0xf] %v225
  %242 = vst [vmem:[%s3 + $0x14] sm:$0xf] %v226
  %243 = vst [vmem:[%s3 + $0x18] sm:$0xf] %v227
  %244 = vst [vmem:[%s3 + $0x1c] sm:$0xf] %v228
  %245 = vst [vmem:[%s3 + $0x20] sm:$0xf] %v229
  %246 = vst [vmem:[%s3 + $0x24] sm:$0xf] %v230
  %247 = vst [vmem:[%s3 + $0x28] sm:$0xf] %v231
  %248 = vst [vmem:[%s3 + $0x2c] sm:$0xf] %v232
  %249 = vst [vmem:[%s3 + $0x30] sm:$0xf] %v233
  %250 = vst [vmem:[%s3 + $0x34] sm:$0xf] %v234
  %251 = vst [vmem:[%s3 + $0x38] sm:$0xf] %v235
  %252 = vst [vmem:[%s3 + $0x3c] sm:$0xf] %v236
  %v253 = vadd.f32 %v182, %v184
  %v254 = vadd.f32 %v253, %v187
  %v255 = vadd.f32 %v254, %v189
  %v256 = vadd.f32 %v255, %v192
  %v257 = vadd.f32 %v256, %v194
  %v258 = vadd.f32 %v257, %v197
  %v259 = vadd.f32 %v258, %v199
  %v260 = vadd.f32 %v259, %v202
  %v261 = vadd.f32 %v260, %v204
  %v262 = vadd.f32 %v261, %v207
  %v263 = vadd.f32 %v262, %v209
  %v264 = vadd.f32 %v263, %v212
  %v265 = vadd.f32 %v264, %v214
  %v266 = vadd.f32 %v265, %v217
  %v267 = vadd.f32 %v266, %v219
  %v268 = vrot.slane %v267, 4
  %v269 = vadd.f32 %v267, %v268
  %v270 = vrot.slane %v269, 2
  %v271 = vadd.f32 %v269, %v270
  %v272 = vrot.slane %v271, 1
  %v273 = vadd.f32 %v271, %v272
  %v274 = vmul.f32 %v182, %v182
  %v275 = vmul.f32 %v184, %v184
  %v276 = vmul.f32 %v187, %v187
  %v277 = vmul.f32 %v189, %v189
  %v278 = vmul.f32 %v192, %v192
  %v279 = vmul.f32 %v194, %v194
  %v280 = vmul.f32 %v197, %v197
  %v281 = vmul.f32 %v199, %v199
  %v282 = vmul.f32 %v202, %v202
  %v283 = vmul.f32 %v204, %v204
  %v284 = vmul.f32 %v207, %v207
  %v285 = vmul.f32 %v209, %v209
  %v286 = vmul.f32 %v212, %v212
  %v287 = vmul.f32 %v214, %v214
  %v288 = vmul.f32 %v217, %v217
  %v289 = vmul.f32 %v219, %v219
  %v290 = vadd.f32 %v274, %v275
  %v291 = vadd.f32 %v290, %v276
  %v292 = vadd.f32 %v291, %v277
  %v293 = vadd.f32 %v292, %v278
  %v294 = vadd.f32 %v293, %v279
  %v295 = vadd.f32 %v294, %v280
  %v296 = vadd.f32 %v295, %v281
  %v297 = vadd.f32 %v296, %v282
  %v298 = vadd.f32 %v297, %v283
  %v299 = vadd.f32 %v298, %v284
  %v300 = vadd.f32 %v299, %v285
  %v301 = vadd.f32 %v300, %v286
  %v302 = vadd.f32 %v301, %v287
  %v303 = vadd.f32 %v302, %v288
  %v304 = vadd.f32 %v303, %v289
  %v305 = vrot.slane %v304, 4
  %v306 = vadd.f32 %v304, %v305
  %v307 = vrot.slane %v306, 2
  %v308 = vadd.f32 %v306, %v307
  %v309 = vrot.slane %v308, 1
  %v310 = vadd.f32 %v308, %v309
  %vm311 = vcmask 1040384
  %v312 = vsel %vm311, %v273, %v310
  %313 = vst [vmem:[%s4] sm:$0x3] %v312
  // Predicated region
  $region14: #{bottleneck_forward.9} parent=0 // pred_check
    _
  $region15: #{bottleneck_forward.9} parent=0 // pred_check_branch
    %315 = sbr.rel (0) target = $region17
  $region16: #{bottleneck_forward.9} parent=0 // pred_region
    _
  $region17: #{bottleneck_forward.9} parent=0 // pred_fallthru
    _
  // Predicated region
  $region18: #{bottleneck_forward.9} parent=0 // pred_check
    _
  $region19: #{bottleneck_forward.9} parent=0 // pred_check_branch
    %317 = sbr.rel (0) target = $region21
  $region20: #{bottleneck_forward.9} parent=0 // pred_region
    _
  $region21: #{bottleneck_forward.9} parent=0 // pred_fallthru
    _
  // Predicated region
  $region22: #{bottleneck_forward.9} parent=0 // pred_check
    _
  $region23: #{bottleneck_forward.9} parent=0 // pred_check_branch
    %319 = sbr.rel (0) target = $region25
  $region24: #{bottleneck_forward.9} parent=0 // pred_region
    _
  $region25: #{bottleneck_forward.9} parent=0 // pred_fallthru
    _
  // Predicated region
  $region26: #{bottleneck_forward.9} parent=0 // pred_check
    _
  $region27: #{bottleneck_forward.9} parent=0 // pred_check_branch
    %321 = sbr.rel (0) target = $region29
  $region28: #{bottleneck_forward.9} parent=0 // pred_region
    _
  $region29: #{bottleneck_forward.9} parent=0 // pred_fallthru
    _

// kernel: bottleneck_forward.8
$region0: #{bottleneck_forward.8}
  #allocation0 [shape = 'u32[]', space=smem, size = 0x4, offset = 0x4, fixed_abs, tag = 'smem constant byte address 0x4 - core index']
  #allocation1 [shape = 'u32[72,128]{1,0:T(1,128)}', space=vmem, size = 0x9000, scoped, tag = 'internal scratch']
  %s0 = inlined_call_operand.vmem [shape: bf16[2,4,9,9,128], index: 0, kind: input, shape index: {}]
  %s1 = inlined_call_operand.vmem [shape: bf16[1152,128], index: 1, kind: input, shape index: {}]
  %s2 = inlined_call_operand.vmem [shape: bf16[2,64,128], index: 2, kind: output, shape index: {0}]
  %s3 = inlined_call_operand.vmem [shape: f32[2,2,128], index: 3, kind: output, shape index: {1}]
  %4 = xla_tuple %s2, %s3
  %s5 = sld [smem:[#allocation0]]
  $region49: #{bottleneck_forward.8} parent=0
    _
  %s7 = ssub.s32 1, %s5
  %s8 = scalar_select 0, %s7, %s5
  loop: start=0, step=1, limit=4
  $region2: #{bottleneck_forward.8} parent=0 // loop_pre_header
    _
  $region3: #{bottleneck_forward.8} parent=0 // loop_header
    %s10 = sphi 0, %s14
    %p11 = scmp.ge.s32.totalorder %s10, 4
    %s20 = sphi 0, %s22
    %s23 = sphi 0, %s20
    %s24 = sphi 0, %s23
    %s40 = sphi 0, %s24
    %s44 = sphi 0, %s44
    %s46 = sphi 0, %s44
    %s47 = sphi 0, %s46
    %s61 = sphi 0, %s47
    %s67 = sphi 0, %s69
    %s70 = sphi 0, %s67
    %s71 = sphi 0, %s70
    %s87 = sphi 0, %s71
    %s93 = sphi 0, %s95
    %s96 = sphi 0, %s93
    %s97 = sphi 0, %s96
    %s113 = sphi 0, %s97
  $region4: #{bottleneck_forward.8} parent=0 // loop_header_branch
    %13 = sbr.rel (%p11) target = $region8
  $region5: #{bottleneck_forward.8} parent=0 // loop_body
    %s15 = ssub.s32 %s10, 1
    %s16 = ssub.s32 %s10, 2
    %s17 = sadd.s32 %s10, 1
    %s18 = ssub.s32 %s10, %s17
    %p19 = scmp.eq.s32.totalorder %s18, 0
    %s21 = sadd.s32 %s20, 1
    %s22 = scalar_select %p19, %s20, %s21
    %p25 = pneg %p19
    %p26 = scmp.eq.s32.totalorder %s10, 1
    %p27 = por %p25, %p26
    %p28 = scmp.ne.s32.totalorder %s20, %s23
    %p29 = scmp.eq.s32.totalorder %s10, 0
    %p30 = por %p28, %p29
    %p31 = scmp.ne.s32.totalorder %s20, %s23
    %p32 = scmp.eq.s32.totalorder %s15, 1
    %p33 = por %p31, %p32
    %p34 = scmp.ne.s32.totalorder %s23, %s24
    %p35 = scmp.eq.s32.totalorder %s15, 0
    %p36 = por %p34, %p35
    %p37 = scmp.ne.s32.totalorder %s23, %s24
    %p38 = scmp.eq.s32.totalorder %s16, 1
    %p39 = por %p37, %p38
    %p41 = scmp.ne.s32.totalorder %s24, %s40
    %p42 = scmp.eq.s32.totalorder %s16, 0
    %p43 = por %p41, %p42
    %s45 = sadd.s32 %s44, 1
    %p48 = scmp.eq.s32.totalorder %s10, 1
    %p49 = scmp.ne.s32.totalorder %s44, %s46
    %p50 = scmp.eq.s32.totalorder %s10, 0
    %p51 = por %p49, %p50
    %p52 = scmp.ne.s32.totalorder %s44, %s46
    %p53 = scmp.eq.s32.totalorder %s15, 1
    %p54 = por %p52, %p53
    %p55 = scmp.ne.s32.totalorder %s46, %s47
    %p56 = scmp.eq.s32.totalorder %s15, 0
    %p57 = por %p55, %p56
    %p58 = scmp.ne.s32.totalorder %s46, %s47
    %p59 = scmp.eq.s32.totalorder %s16, 1
    %p60 = por %p58, %p59
    %p62 = scmp.ne.s32.totalorder %s47, %s61
    %p63 = scmp.eq.s32.totalorder %s16, 0
    %p64 = por %p62, %p63
    %s65 = ssub.s32 %s10, %s17
    %p66 = scmp.eq.s32.totalorder %s65, 0
    %s68 = sadd.s32 %s67, 1
    %s69 = scalar_select %p66, %s67, %s68
    %p72 = pneg %p66
    %p73 = scmp.eq.s32.totalorder %s10, 1
    %p74 = por %p72, %p73
    %p75 = scmp.ne.s32.totalorder %s67, %s70
    %p76 = scmp.eq.s32.totalorder %s10, 0
    %p77 = por %p75, %p76
    %p78 = scmp.ne.s32.totalorder %s67, %s70
    %p79 = scmp.eq.s32.totalorder %s15, 1
    %p80 = por %p78, %p79
    %p81 = scmp.ne.s32.totalorder %s70, %s71
    %p82 = scmp.eq.s32.totalorder %s15, 0
    %p83 = por %p81, %p82
    %p84 = scmp.ne.s32.totalorder %s70, %s71
    %p85 = scmp.eq.s32.totalorder %s16, 1
    %p86 = por %p84, %p85
    %p88 = scmp.ne.s32.totalorder %s71, %s87
    %p89 = scmp.eq.s32.totalorder %s16, 0
    %p90 = por %p88, %p89
    %s91 = ssub.s32 %s10, %s17
    %p92 = scmp.eq.s32.totalorder %s91, 0
    %s94 = sadd.s32 %s93, 1
    %s95 = scalar_select %p92, %s93, %s94
    %p98 = pneg %p92
    %p99 = scmp.eq.s32.totalorder %s10, 1
    %p100 = por %p98, %p99
    %p101 = scmp.ne.s32.totalorder %s93, %s96
    %p102 = scmp.eq.s32.totalorder %s10, 0
    %p103 = por %p101, %p102
    %p104 = scmp.ne.s32.totalorder %s93, %s96
    %p105 = scmp.eq.s32.totalorder %s15, 1
    %p106 = por %p104, %p105
    %p107 = scmp.ne.s32.totalorder %s96, %s97
    %p108 = scmp.eq.s32.totalorder %s15, 0
    %p109 = por %p107, %p108
    %p110 = scmp.ne.s32.totalorder %s96, %s97
    %p111 = scmp.eq.s32.totalorder %s16, 1
    %p112 = por %p110, %p111
    %p114 = scmp.ne.s32.totalorder %s97, %s113
    %p115 = scmp.eq.s32.totalorder %s16, 0
    %p116 = por %p114, %p115
    %p117 = scmp.le.s32.totalorder 1, %s10
    %p118 = scmp.lt.s32.totalorder %s10, 3
    %p119 = pnand %p117, %p118
    %p120 = pneg %p119
    // Predicated region
    $region9: #{bottleneck_forward.8} parent=5 // pred_check
      _
    $region10: #{bottleneck_forward.8} parent=5 // pred_check_branch
      %122 = sbr.rel (%p119) target = $region12
    $region11: #{bottleneck_forward.8} parent=5 // pred_region
      %s123 = ssub.s32 %s10, 1
      // Predicated region
      $region13: #{bottleneck_forward.8} parent=11 // pred_check
        %p124 = pneg %p57
      $region14: #{bottleneck_forward.8} parent=11 // pred_check_branch
        %126 = sbr.rel (%p124) target = $region16
      $region15: #{bottleneck_forward.8} parent=11 // pred_region
        _
      $region16: #{bottleneck_forward.8} parent=11 // pred_fallthru
        _
    $region12: #{bottleneck_forward.8} parent=5 // pred_fallthru
      _
    %p127 = scmp.lt.s32.totalorder %s10, 2
    // Predicated region
    $region17: #{bottleneck_forward.8} parent=5 // pred_check
      %p128 = pneg %p127
    $region18: #{bottleneck_forward.8} parent=5 // pred_check_branch
      %130 = sbr.rel (%p128) target = $region20
    $region19: #{bottleneck_forward.8} parent=5 // pred_region
      // Predicated region
      $region21: #{bottleneck_forward.8} parent=19 // pred_check
        %p131 = pneg %p30
      $region22: #{bottleneck_forward.8} parent=19 // pred_check_branch
        %133 = sbr.rel (%p131) target = $region24
      $region23: #{bottleneck_forward.8} parent=19 // pred_region
        %p134 = scmp.lt.s32.totalorder %s10, 1
        %s135 = scalar_select %p134, %s10, 1
        %s136 = smul.addr %s135, 72
        %s137 = smul.addr %s136, 4
        %s138 = scalar_lea.vmem %s0, %s137
      $region24: #{bottleneck_forward.8} parent=19 // pred_fallthru
        _
    $region20: #{bottleneck_forward.8} parent=5 // pred_fallthru
      _
    %p139 = scmp.le.s32.totalorder 1, %s10
    %p140 = scmp.lt.s32.totalorder %s10, 3
    %p141 = pnand %p139, %p140
    %p142 = pneg %p141
    // Predicated region
    $region25: #{bottleneck_forward.8} parent=5 // pred_check
      _
    $region26: #{bottleneck_forward.8} parent=5 // pred_check_branch
      %144 = sbr.rel (%p141) target = $region28
    $region27: #{bottleneck_forward.8} parent=5 // pred_region
      %s145 = ssub.s32 %s10, 1
      %p146 = scmp.lt.s32.totalorder %s15, 1
      %s147 = scalar_select %p146, %s15, 1
      %s148 = smul.addr %s147, 72
      %s149 = smul.addr %s148, 4
      %s150 = scalar_lea.vmem %s0, %s149
      %p151 = pneg %p36
      %p152 = pneg %p33
      %p153 = pneg %p57
      %p154 = pneg %p54
      %p155 = pneg %p83
      %p156 = pneg %p80
      %p157 = scmp.lt.s32.totalorder %s15, 1
      %s158 = scalar_select %p157, %s15, 1
      %s159 = smul.addr %s158, 8
      %s160 = smul.addr %s159, 4
      %s161 = scalar_lea.vmem %s2, %s160
      %p162 = pneg %p109
      %p163 = pneg %p106
      %p164 = scmp.lt.s32.totalorder %s15, 1
      %s165 = scalar_select %p164, %s15, 1
      %s166 = smul.addr %s165, 2
      %s167 = scalar_lea.vmem %s3, %s166
      %p168 = scmp.lt.s32.totalorder %s15, 1
      %s169 = scalar_select %p168, %s15, 1
      %s170 = smul.addr %s169, 72
      %s171 = smul.addr %s170, 4
      %s172 = scalar_lea.vmem %s0, %s171
      %p173 = scmp.lt.s32.totalorder %s15, 1
      %s174 = scalar_select %p173, %s15, 1
      %s175 = smul.addr %s174, 8
      %s176 = smul.addr %s175, 4
      %s177 = scalar_lea.vmem %s2, %s176
      %p178 = scmp.lt.s32.totalorder %s15, 1
      %s179 = scalar_select %p178, %s15, 1
      %s180 = smul.addr %s179, 2
      %s181 = scalar_lea.vmem %s3, %s180
      %v182 = vld [vmem:[%s172] sm:$0xf]
      %v183 = vld [vmem:[%s172 + $0x8] sm:$0xf]
      %v184 = vld [vmem:[%s172 + $0x10] sm:$0xf]
      %v185 = vld [vmem:[%s172 + $0x18] sm:$0xf]
      %v186 = vld [vmem:[%s172 + $0x20] sm:$0xf]
      %v187 = vld [vmem:[%s172 + $0x28] sm:$0xf]
      %v188 = vld [vmem:[%s172 + $0x30] sm:$0xf]
      %v189 = vld [vmem:[%s172 + $0x38] sm:$0xf]
      %s190 = scalar_lea.vmem %s172, 72
      %v191 = vld [vmem:[%s190] sm:$0xf]
      %v192 = vld [vmem:[%s190 + $0x8] sm:$0xf]
      %v193 = vld [vmem:[%s190 + $0x10] sm:$0xf]
      %v194 = vld [vmem:[%s190 + $0x18] sm:$0xf]
      %v195 = vld [vmem:[%s190 + $0x20] sm:$0xf]
      %v196 = vld [vmem:[%s190 + $0x28] sm:$0xf]
      %v197 = vld [vmem:[%s190 + $0x30] sm:$0xf]
      %v198 = vld [vmem:[%s190 + $0x38] sm:$0xf]
      %v199 = vld [vmem:[%s172 + $0x4] sm:$0x1]
      %v200 = vld [vmem:[%s172 + $0xc] sm:$0x1]
      %v201 = vld [vmem:[%s172 + $0x14] sm:$0x1]
      %v202 = vld [vmem:[%s172 + $0x1c] sm:$0x1]
      %v203 = vld [vmem:[%s172 + $0x24] sm:$0x1]
      %v204 = vld [vmem:[%s172 + $0x2c] sm:$0x1]
      %v205 = vld [vmem:[%s172 + $0x34] sm:$0x1]
      %v206 = vld [vmem:[%s172 + $0x3c] sm:$0x1]
      %vm207 = vsmask.f32 3328
      %vm208 = vsmask.f32 7440
      %vm209 = vmor %vm207, %vm208
      %v211 = vshrl.u32 %v182, 16
      %v213 = vrot.slane %v211, 4
      %v214 = vshll.u32 %v182, 16
      %v216 = vrot.slane %v214, 5
      %v217 = vor.u32 %v213, %v216
      %v218 = vrot.slane %v217, 4
      %v220 = vshll.u32 %v199, 16
      %v222 = vrot.slane %v220, 5
      %v223 = vsel %vm209, %v218, %v222
      %v225 = vshrl.u32 %v183, 16
      %v227 = vrot.slane %v225, 4
      %v228 = vshll.u32 %v183, 16
      %v230 = vrot.slane %v228, 5
      %v231 = vor.u32 %v227, %v230
      %v232 = vrot.slane %v231, 4
      %v234 = vshll.u32 %v200, 16
      %v236 = vrot.slane %v234, 5
      %v237 = vsel %vm209, %v232, %v236
      %v239 = vshrl.u32 %v184, 16
      %v241 = vrot.slane %v239, 4
      %v242 = vshll.u32 %v184, 16
      %v244 = vrot.slane %v242, 5
      %v245 = vor.u32 %v241, %v244
      %v246 = vrot.slane %v245, 4
      %v248 = vshll.u32 %v201, 16
      %v250 = vrot.slane %v248, 5
      %v251 = vsel %vm209, %v246, %v250
      %v253 = vshrl.u32 %v185, 16
      %v255 = vrot.slane %v253, 4
      %v256 = vshll.u32 %v185, 16
      %v258 = vrot.slane %v256, 5
      %v259 = vor.u32 %v255, %v258
      %v260 = vrot.slane %v259, 4
      %v262 = vshll.u32 %v202, 16
      %v264 = vrot.slane %v262, 5
      %v265 = vsel %vm209, %v260, %v264
      %v267 = vshrl.u32 %v186, 16
      %v269 = vrot.slane %v267, 4
      %v270 = vshll.u32 %v186, 16
      %v272 = vrot.slane %v270, 5
      %v273 = vor.u32 %v269, %v272
      %v274 = vrot.slane %v273, 4
      %v276 = vshll.u32 %v203, 16
      %v278 = vrot.slane %v276, 5
      %v279 = vsel %vm209, %v274, %v278
      %v281 = vshrl.u32 %v187, 16
      %v283 = vrot.slane %v281, 4
      %v284 = vshll.u32 %v187, 16
      %v286 = vrot.slane %v284, 5
      %v287 = vor.u32 %v283, %v286
      %v288 = vrot.slane %v287, 4
      %v290 = vshll.u32 %v204, 16
      %v292 = vrot.slane %v290, 5
      %v293 = vsel %vm209, %v288, %v292
      %v295 = vshrl.u32 %v188, 16
      %v297 = vrot.slane %v295, 4
      %v298 = vshll.u32 %v188, 16
      %v300 = vrot.slane %v298, 5
      %v301 = vor.u32 %v297, %v300
      %v302 = vrot.slane %v301, 4
      %v304 = vshll.u32 %v205, 16
      %v306 = vrot.slane %v304, 5
      %v307 = vsel %vm209, %v302, %v306
      %v309 = vshrl.u32 %v189, 16
      %v311 = vrot.slane %v309, 4
      %v312 = vshll.u32 %v189, 16
      %v314 = vrot.slane %v312, 5
      %v315 = vor.u32 %v311, %v314
      %v316 = vrot.slane %v315, 4
      %v318 = vshll.u32 %v206, 16
      %v320 = vrot.slane %v318, 5
      %v321 = vsel %vm209, %v316, %v320
      %s322 = scalar_lea.vmem %s172, 144
      %v323 = vld [vmem:[%s322] sm:$0xf]
      %v324 = vld [vmem:[%s322 + $0x8] sm:$0xf]
      %v325 = vld [vmem:[%s322 + $0x10] sm:$0xf]
      %v326 = vld [vmem:[%s322 + $0x18] sm:$0xf]
      %v327 = vld [vmem:[%s322 + $0x20] sm:$0xf]
      %v328 = vld [vmem:[%s322 + $0x28] sm:$0xf]
      %v329 = vld [vmem:[%s322 + $0x30] sm:$0xf]
      %v330 = vld [vmem:[%s322 + $0x38] sm:$0xf]
      %s331 = scalar_lea.vmem %s172, 216
      %v332 = vld [vmem:[%s331] sm:$0xf]
      %v333 = vld [vmem:[%s331 + $0x8] sm:$0xf]
      %v334 = vld [vmem:[%s331 + $0x10] sm:$0xf]
      %v335 = vld [vmem:[%s331 + $0x18] sm:$0xf]
      %v336 = vld [vmem:[%s331 + $0x20] sm:$0xf]
      %v337 = vld [vmem:[%s331 + $0x28] sm:$0xf]
      %v338 = vld [vmem:[%s331 + $0x30] sm:$0xf]
      %v339 = vld [vmem:[%s331 + $0x38] sm:$0xf]
      %v340 = vld [vmem:[%s322 + $0x4] sm:$0x1]
      %v341 = vld [vmem:[%s322 + $0xc] sm:$0x1]
      %v342 = vld [vmem:[%s322 + $0x14] sm:$0x1]
      %v343 = vld [vmem:[%s322 + $0x1c] sm:$0x1]
      %v344 = vld [vmem:[%s322 + $0x24] sm:$0x1]
      %v345 = vld [vmem:[%s322 + $0x2c] sm:$0x1]
      %v346 = vld [vmem:[%s322 + $0x34] sm:$0x1]
      %v347 = vld [vmem:[%s322 + $0x3c] sm:$0x1]
      %v349 = vshrl.u32 %v323, 16
      %v351 = vrot.slane %v349, 4
      %v352 = vshll.u32 %v323, 16
      %v354 = vrot.slane %v352, 5
      %v355 = vor.u32 %v351, %v354
      %v356 = vrot.slane %v355, 4
      %v358 = vshll.u32 %v340, 16
      %v360 = vrot.slane %v358, 5
      %v361 = vsel %vm209, %v356, %v360
      %v363 = vshrl.u32 %v324, 16
      %v365 = vrot.slane %v363, 4
      %v366 = vshll.u32 %v324, 16
      %v368 = vrot.slane %v366, 5
      %v369 = vor.u32 %v365, %v368
      %v370 = vrot.slane %v369, 4
      %v372 = vshll.u32 %v341, 16
      %v374 = vrot.slane %v372, 5
      %v375 = vsel %vm209, %v370, %v374
      %v377 = vshrl.u32 %v325, 16
      %v379 = vrot.slane %v377, 4
      %v380 = vshll.u32 %v325, 16
      %v382 = vrot.slane %v380, 5
      %v383 = vor.u32 %v379, %v382
      %v384 = vrot.slane %v383, 4
      %v386 = vshll.u32 %v342, 16
      %v388 = vrot.slane %v386, 5
      %v389 = vsel %vm209, %v384, %v388
      %v391 = vshrl.u32 %v326, 16
      %v393 = vrot.slane %v391, 4
      %v394 = vshll.u32 %v326, 16
      %v396 = vrot.slane %v394, 5
      %v397 = vor.u32 %v393, %v396
      %v398 = vrot.slane %v397, 4
      %v400 = vshll.u32 %v343, 16
      %v402 = vrot.slane %v400, 5
      %v403 = vsel %vm209, %v398, %v402
      %v405 = vshrl.u32 %v327, 16
      %v407 = vrot.slane %v405, 4
      %v408 = vshll.u32 %v327, 16
      %v410 = vrot.slane %v408, 5
      %v411 = vor.u32 %v407, %v410
      %v412 = vrot.slane %v411, 4
      %v414 = vshll.u32 %v344, 16
      %v416 = vrot.slane %v414, 5
      %v417 = vsel %vm209, %v412, %v416
      %v419 = vshrl.u32 %v328, 16
      %v421 = vrot.slane %v419, 4
      %v422 = vshll.u32 %v328, 16
      %v424 = vrot.slane %v422, 5
      %v425 = vor.u32 %v421, %v424
      %v426 = vrot.slane %v425, 4
      %v428 = vshll.u32 %v345, 16
      %v430 = vrot.slane %v428, 5
      %v431 = vsel %vm209, %v426, %v430
      %v433 = vshrl.u32 %v329, 16
      %v435 = vrot.slane %v433, 4
      %v436 = vshll.u32 %v329, 16
      %v438 = vrot.slane %v436, 5
      %v439 = vor.u32 %v435, %v438
      %v440 = vrot.slane %v439, 4
      %v442 = vshll.u32 %v346, 16
      %v444 = vrot.slane %v442, 5
      %v445 = vsel %vm209, %v440, %v444
      %v447 = vshrl.u32 %v330, 16
      %v449 = vrot.slane %v447, 4
      %v450 = vshll.u32 %v330, 16
      %v452 = vrot.slane %v450, 5
      %v453 = vor.u32 %v449, %v452
      %v454 = vrot.slane %v453, 4
      %v456 = vshll.u32 %v347, 16
      %v458 = vrot.slane %v456, 5
      %v459 = vsel %vm209, %v454, %v458
      %s460 = scalar_lea.vmem %s172, 8
      %v461 = vld [vmem:[%s460] sm:$0xf]
      %v462 = vld [vmem:[%s460 + $0x8] sm:$0xf]
      %v463 = vld [vmem:[%s460 + $0x10] sm:$0xf]
      %v464 = vld [vmem:[%s460 + $0x18] sm:$0xf]
      %v465 = vld [vmem:[%s460 + $0x20] sm:$0xf]
      %v466 = vld [vmem:[%s460 + $0x28] sm:$0xf]
      %v467 = vld [vmem:[%s460 + $0x30] sm:$0xf]
      %v468 = vld [vmem:[%s460 + $0x38] sm:$0xf]
      %s469 = scalar_lea.vmem %s172, 80
      %v470 = vld [vmem:[%s469] sm:$0xf]
      %v471 = vld [vmem:[%s469 + $0x8] sm:$0xf]
      %v472 = vld [vmem:[%s469 + $0x10] sm:$0xf]
      %v473 = vld [vmem:[%s469 + $0x18] sm:$0xf]
      %v474 = vld [vmem:[%s469 + $0x20] sm:$0xf]
      %v475 = vld [vmem:[%s469 + $0x28] sm:$0xf]
      %v476 = vld [vmem:[%s469 + $0x30] sm:$0xf]
      %v477 = vld [vmem:[%s469 + $0x38] sm:$0xf]
      %v478 = vld [vmem:[%s460 + $0x4] sm:$0x1]
      %v479 = vld [vmem:[%s460 + $0xc] sm:$0x1]
      %v480 = vld [vmem:[%s460 + $0x14] sm:$0x1]
      %v481 = vld [vmem:[%s460 + $0x1c] sm:$0x1]
      %v482 = vld [vmem:[%s460 + $0x24] sm:$0x1]
      %v483 = vld [vmem:[%s460 + $0x2c] sm:$0x1]
      %v484 = vld [vmem:[%s460 + $0x34] sm:$0x1]
      %v485 = vld [vmem:[%s460 + $0x3c] sm:$0x1]
      %v487 = vshrl.u32 %v461, 16
      %v489 = vrot.slane %v487, 4
      %v490 = vshll.u32 %v461, 16
      %v492 = vrot.slane %v490, 5
      %v493 = vor.u32 %v489, %v492
      %v494 = vrot.slane %v493, 4
      %v496 = vshll.u32 %v478, 16
      %v498 = vrot.slane %v496, 5
      %v499 = vsel %vm209, %v494, %v498
      %v501 = vshrl.u32 %v462, 16
      %v503 = vrot.slane %v501, 4
      %v504 = vshll.u32 %v462, 16
      %v506 = vrot.slane %v504, 5
      %v507 = vor.u32 %v503, %v506
      %v508 = vrot.slane %v507, 4
      %v510 = vshll.u32 %v479, 16
      %v512 = vrot.slane %v510, 5
      %v513 = vsel %vm209, %v508, %v512
      %v515 = vshrl.u32 %v463, 16
      %v517 = vrot.slane %v515, 4
      %v518 = vshll.u32 %v463, 16
      %v520 = vrot.slane %v518, 5
      %v521 = vor.u32 %v517, %v520
      %v522 = vrot.slane %v521, 4
      %v524 = vshll.u32 %v480, 16
      %v526 = vrot.slane %v524, 5
      %v527 = vsel %vm209, %v522, %v526
      %v529 = vshrl.u32 %v464, 16
      %v531 = vrot.slane %v529, 4
      %v532 = vshll.u32 %v464, 16
      %v534 = vrot.slane %v532, 5
      %v535 = vor.u32 %v531, %v534
      %v536 = vrot.slane %v535, 4
      %v538 = vshll.u32 %v481, 16
      %v540 = vrot.slane %v538, 5
      %v541 = vsel %vm209, %v536, %v540
      %v543 = vshrl.u32 %v465, 16
      %v545 = vrot.slane %v543, 4
      %v546 = vshll.u32 %v465, 16
      %v548 = vrot.slane %v546, 5
      %v549 = vor.u32 %v545, %v548
      %v550 = vrot.slane %v549, 4
      %v552 = vshll.u32 %v482, 16
      %v554 = vrot.slane %v552, 5
      %v555 = vsel %vm209, %v550, %v554
      %v557 = vshrl.u32 %v466, 16
      %v559 = vrot.slane %v557, 4
      %v560 = vshll.u32 %v466, 16
      %v562 = vrot.slane %v560, 5
      %v563 = vor.u32 %v559, %v562
      %v564 = vrot.slane %v563, 4
      %v566 = vshll.u32 %v483, 16
      %v568 = vrot.slane %v566, 5
      %v569 = vsel %vm209, %v564, %v568
      %v571 = vshrl.u32 %v467, 16
      %v573 = vrot.slane %v571, 4
      %v574 = vshll.u32 %v467, 16
      %v576 = vrot.slane %v574, 5
      %v577 = vor.u32 %v573, %v576
      %v578 = vrot.slane %v577, 4
      %v580 = vshll.u32 %v484, 16
      %v582 = vrot.slane %v580, 5
      %v583 = vsel %vm209, %v578, %v582
      %v585 = vshrl.u32 %v468, 16
      %v587 = vrot.slane %v585, 4
      %v588 = vshll.u32 %v468, 16
      %v590 = vrot.slane %v588, 5
      %v591 = vor.u32 %v587, %v590
      %v592 = vrot.slane %v591, 4
      %v594 = vshll.u32 %v485, 16
      %v596 = vrot.slane %v594, 5
      %v597 = vsel %vm209, %v592, %v596
      %v606 = vunpack.c.l.b16 %v182
      %v607 = vunpack.c.l.b16 %v183
      %v608 = vunpack.c.l.b16 %v184
      %v609 = vunpack.c.l.b16 %v185
      %v610 = vunpack.c.l.b16 %v186
      %v611 = vunpack.c.l.b16 %v187
      %v612 = vunpack.c.l.b16 %v188
      %v613 = vunpack.c.l.b16 %v189
      %v614 = vpack.c.b16 %v607, %v606
      %v615 = vpack.c.b16 %v609, %v608
      %v616 = vpack.c.b16 %v611, %v610
      %v617 = vpack.c.b16 %v613, %v612
      %v630 = vunpack.c.l.b16 %v191
      %v631 = vunpack.c.l.b16 %v192
      %v632 = vunpack.c.l.b16 %v193
      %v633 = vunpack.c.l.b16 %v194
      %v634 = vunpack.c.l.b16 %v195
      %v635 = vunpack.c.l.b16 %v196
      %v636 = vunpack.c.l.b16 %v197
      %v637 = vunpack.c.l.b16 %v198
      %v638 = vpack.c.b16 %v631, %v630
      %v639 = vpack.c.b16 %v633, %v632
      %v640 = vpack.c.b16 %v635, %v634
      %v641 = vpack.c.b16 %v637, %v636
      %v646 = vunpack.c.l.b16 %v223
      %v647 = vunpack.c.l.b16 %v237
      %v648 = vunpack.c.l.b16 %v251
      %v649 = vunpack.c.l.b16 %v265
      %v650 = vunpack.c.l.b16 %v279
      %v651 = vunpack.c.l.b16 %v293
      %v652 = vunpack.c.l.b16 %v307
      %v653 = vunpack.c.l.b16 %v321
      %v654 = vpack.c.b16 %v647, %v646
      %v655 = vpack.c.b16 %v649, %v648
      %v656 = vpack.c.b16 %v651, %v650
      %v657 = vpack.c.b16 %v653, %v652
      %v670 = vunpack.c.l.b16 %v323
      %v671 = vunpack.c.l.b16 %v324
      %v672 = vunpack.c.l.b16 %v325
      %v673 = vunpack.c.l.b16 %v326
      %v674 = vunpack.c.l.b16 %v327
      %v675 = vunpack.c.l.b16 %v328
      %v676 = vunpack.c.l.b16 %v329
      %v677 = vunpack.c.l.b16 %v330
      %v678 = vpack.c.b16 %v671, %v670
      %v679 = vpack.c.b16 %v673, %v672
      %v680 = vpack.c.b16 %v675, %v674
      %v681 = vpack.c.b16 %v677, %v676
      %v694 = vunpack.c.l.b16 %v332
      %v695 = vunpack.c.l.b16 %v333
      %v696 = vunpack.c.l.b16 %v334
      %v697 = vunpack.c.l.b16 %v335
      %v698 = vunpack.c.l.b16 %v336
      %v699 = vunpack.c.l.b16 %v337
      %v700 = vunpack.c.l.b16 %v338
      %v701 = vunpack.c.l.b16 %v339
      %v702 = vpack.c.b16 %v695, %v694
      %v703 = vpack.c.b16 %v697, %v696
      %v704 = vpack.c.b16 %v699, %v698
      %v705 = vpack.c.b16 %v701, %v700
      %v710 = vunpack.c.l.b16 %v361
      %v711 = vunpack.c.l.b16 %v375
      %v712 = vunpack.c.l.b16 %v389
      %v713 = vunpack.c.l.b16 %v403
      %v714 = vunpack.c.l.b16 %v417
      %v715 = vunpack.c.l.b16 %v431
      %v716 = vunpack.c.l.b16 %v445
      %v717 = vunpack.c.l.b16 %v459
      %v718 = vpack.c.b16 %v711, %v710
      %v719 = vpack.c.b16 %v713, %v712
      %v720 = vpack.c.b16 %v715, %v714
      %v721 = vpack.c.b16 %v717, %v716
      %v734 = vunpack.c.l.b16 %v461
      %v735 = vunpack.c.l.b16 %v462
      %v736 = vunpack.c.l.b16 %v463
      %v737 = vunpack.c.l.b16 %v464
      %v738 = vunpack.c.l.b16 %v465
      %v739 = vunpack.c.l.b16 %v466
      %v740 = vunpack.c.l.b16 %v467
      %v741 = vunpack.c.l.b16 %v468
      %v742 = vpack.c.b16 %v735, %v734
      %v743 = vpack.c.b16 %v737, %v736
      %v744 = vpack.c.b16 %v739, %v738
      %v745 = vpack.c.b16 %v741, %v740
      %v758 = vunpack.c.l.b16 %v470
      %v759 = vunpack.c.l.b16 %v471
      %v760 = vunpack.c.l.b16 %v472
      %v761 = vunpack.c.l.b16 %v473
      %v762 = vunpack.c.l.b16 %v474
      %v763 = vunpack.c.l.b16 %v475
      %v764 = vunpack.c.l.b16 %v476
      %v765 = vunpack.c.l.b16 %v477
      %v766 = vpack.c.b16 %v759, %v758
      %v767 = vpack.c.b16 %v761, %v760
      %v768 = vpack.c.b16 %v763, %v762
      %v769 = vpack.c.b16 %v765, %v764
      %v774 = vunpack.c.l.b16 %v499
      %v775 = vunpack.c.l.b16 %v513
      %v776 = vunpack.c.l.b16 %v527
      %v777 = vunpack.c.l.b16 %v541
      %v778 = vunpack.c.l.b16 %v555
      %v779 = vunpack.c.l.b16 %v569
      %v780 = vunpack.c.l.b16 %v583
      %v781 = vunpack.c.l.b16 %v597
      %v782 = vpack.c.b16 %v775, %v774
      %v783 = vpack.c.b16 %v777, %v776
      %v784 = vpack.c.b16 %v779, %v778
      %v785 = vpack.c.b16 %v781, %v780
      %v790 = vld [vmem:[%s1] sm:$0xf]
      %v791 = vld [vmem:[%s1 + $0x4] sm:$0xf]
      %v792 = vld [vmem:[%s1 + $0x8] sm:$0xf]
      %v793 = vld [vmem:[%s1 + $0xc] sm:$0xf]
      %v794 = vld [vmem:[%s1 + $0x10] sm:$0xf]
      %v795 = vld [vmem:[%s1 + $0x14] sm:$0xf]
      %v796 = vld [vmem:[%s1 + $0x18] sm:$0xf]
      %v797 = vld [vmem:[%s1 + $0x1c] sm:$0xf]
      %v798 = vld [vmem:[%s1 + $0x20] sm:$0xf]
      %v799 = vld [vmem:[%s1 + $0x24] sm:$0xf]
      %v800 = vld [vmem:[%s1 + $0x28] sm:$0xf]
      %v801 = vld [vmem:[%s1 + $0x2c] sm:$0xf]
      %v802 = vld [vmem:[%s1 + $0x30] sm:$0xf]
      %v803 = vld [vmem:[%s1 + $0x34] sm:$0xf]
      %v804 = vld [vmem:[%s1 + $0x38] sm:$0xf]
      %v805 = vld [vmem:[%s1 + $0x3c] sm:$0xf]
      %v806 = vld [vmem:[%s1 + $0x40] sm:$0xf]
      %v807 = vld [vmem:[%s1 + $0x44] sm:$0xf]
      %v808 = vld [vmem:[%s1 + $0x48] sm:$0xf]
      %v809 = vld [vmem:[%s1 + $0x4c] sm:$0xf]
      %v810 = vld [vmem:[%s1 + $0x50] sm:$0xf]
      %v811 = vld [vmem:[%s1 + $0x54] sm:$0xf]
      %v812 = vld [vmem:[%s1 + $0x58] sm:$0xf]
      %v813 = vld [vmem:[%s1 + $0x5c] sm:$0xf]
      %v814 = vld [vmem:[%s1 + $0x60] sm:$0xf]
      %v815 = vld [vmem:[%s1 + $0x64] sm:$0xf]
      %v816 = vld [vmem:[%s1 + $0x68] sm:$0xf]
      %v817 = vld [vmem:[%s1 + $0x6c] sm:$0xf]
      %v818 = vld [vmem:[%s1 + $0x70] sm:$0xf]
      %v819 = vld [vmem:[%s1 + $0x74] sm:$0xf]
      %v820 = vld [vmem:[%s1 + $0x78] sm:$0xf]
      %v821 = vld [vmem:[%s1 + $0x7c] sm:$0xf]
      %v822 = vld [vmem:[%s1 + $0x80] sm:$0xf]
      %v823 = vld [vmem:[%s1 + $0x84] sm:$0xf]
      %v824 = vld [vmem:[%s1 + $0x88] sm:$0xf]
      %v825 = vld [vmem:[%s1 + $0x8c] sm:$0xf]
      %v826 = vld [vmem:[%s1 + $0x90] sm:$0xf]
      %v827 = vld [vmem:[%s1 + $0x94] sm:$0xf]
      %v828 = vld [vmem:[%s1 + $0x98] sm:$0xf]
      %v829 = vld [vmem:[%s1 + $0x9c] sm:$0xf]
      %v830 = vld [vmem:[%s1 + $0xa0] sm:$0xf]
      %v831 = vld [vmem:[%s1 + $0xa4] sm:$0xf]
      %v832 = vld [vmem:[%s1 + $0xa8] sm:$0xf]
      %v833 = vld [vmem:[%s1 + $0xac] sm:$0xf]
      %v834 = vld [vmem:[%s1 + $0xb0] sm:$0xf]
      %v835 = vld [vmem:[%s1 + $0xb4] sm:$0xf]
      %v836 = vld [vmem:[%s1 + $0xb8] sm:$0xf]
      %v837 = vld [vmem:[%s1 + $0xbc] sm:$0xf]
      %v838 = vld [vmem:[%s1 + $0xc0] sm:$0xf]
      %v839 = vld [vmem:[%s1 + $0xc4] sm:$0xf]
      %v840 = vld [vmem:[%s1 + $0xc8] sm:$0xf]
      %v841 = vld [vmem:[%s1 + $0xcc] sm:$0xf]
      %v842 = vld [vmem:[%s1 + $0xd0] sm:$0xf]
      %v843 = vld [vmem:[%s1 + $0xd4] sm:$0xf]
      %v844 = vld [vmem:[%s1 + $0xd8] sm:$0xf]
      %v845 = vld [vmem:[%s1 + $0xdc] sm:$0xf]
      %v846 = vld [vmem:[%s1 + $0xe0] sm:$0xf]
      %v847 = vld [vmem:[%s1 + $0xe4] sm:$0xf]
      %v848 = vld [vmem:[%s1 + $0xe8] sm:$0xf]
      %v849 = vld [vmem:[%s1 + $0xec] sm:$0xf]
      %v850 = vld [vmem:[%s1 + $0xf0] sm:$0xf]
      %v851 = vld [vmem:[%s1 + $0xf4] sm:$0xf]
      %v852 = vld [vmem:[%s1 + $0xf8] sm:$0xf]
      %v853 = vld [vmem:[%s1 + $0xfc] sm:$0xf]
      %v854 = vld [vmem:[%s1 + $0x100] sm:$0xf]
      %v855 = vld [vmem:[%s1 + $0x104] sm:$0xf]
      %v856 = vld [vmem:[%s1 + $0x108] sm:$0xf]
      %v857 = vld [vmem:[%s1 + $0x10c] sm:$0xf]
      %v858 = vld [vmem:[%s1 + $0x110] sm:$0xf]
      %v859 = vld [vmem:[%s1 + $0x114] sm:$0xf]
      %v860 = vld [vmem:[%s1 + $0x118] sm:$0xf]
      %v861 = vld [vmem:[%s1 + $0x11c] sm:$0xf]
      %v862 = vld [vmem:[%s1 + $0x120] sm:$0xf]
      %v863 = vld [vmem:[%s1 + $0x124] sm:$0xf]
      %v864 = vld [vmem:[%s1 + $0x128] sm:$0xf]
      %v865 = vld [vmem:[%s1 + $0x12c] sm:$0xf]
      %v866 = vld [vmem:[%s1 + $0x130] sm:$0xf]
      %v867 = vld [vmem:[%s1 + $0x134] sm:$0xf]
      %v868 = vld [vmem:[%s1 + $0x138] sm:$0xf]
      %v869 = vld [vmem:[%s1 + $0x13c] sm:$0xf]
      %v870 = vld [vmem:[%s1 + $0x140] sm:$0xf]
      %v871 = vld [vmem:[%s1 + $0x144] sm:$0xf]
      %v872 = vld [vmem:[%s1 + $0x148] sm:$0xf]
      %v873 = vld [vmem:[%s1 + $0x14c] sm:$0xf]
      %v874 = vld [vmem:[%s1 + $0x150] sm:$0xf]
      %v875 = vld [vmem:[%s1 + $0x154] sm:$0xf]
      %v876 = vld [vmem:[%s1 + $0x158] sm:$0xf]
      %v877 = vld [vmem:[%s1 + $0x15c] sm:$0xf]
      %v878 = vld [vmem:[%s1 + $0x160] sm:$0xf]
      %v879 = vld [vmem:[%s1 + $0x164] sm:$0xf]
      %v880 = vld [vmem:[%s1 + $0x168] sm:$0xf]
      %v881 = vld [vmem:[%s1 + $0x16c] sm:$0xf]
      %v882 = vld [vmem:[%s1 + $0x170] sm:$0xf]
      %v883 = vld [vmem:[%s1 + $0x174] sm:$0xf]
      %v884 = vld [vmem:[%s1 + $0x178] sm:$0xf]
      %v885 = vld [vmem:[%s1 + $0x17c] sm:$0xf]
      %v886 = vld [vmem:[%s1 + $0x180] sm:$0xf]
      %v887 = vld [vmem:[%s1 + $0x184] sm:$0xf]
      %v888 = vld [vmem:[%s1 + $0x188] sm:$0xf]
      %v889 = vld [vmem:[%s1 + $0x18c] sm:$0xf]
      %v890 = vld [vmem:[%s1 + $0x190] sm:$0xf]
      %v891 = vld [vmem:[%s1 + $0x194] sm:$0xf]
      %v892 = vld [vmem:[%s1 + $0x198] sm:$0xf]
      %v893 = vld [vmem:[%s1 + $0x19c] sm:$0xf]
      %v894 = vld [vmem:[%s1 + $0x1a0] sm:$0xf]
      %v895 = vld [vmem:[%s1 + $0x1a4] sm:$0xf]
      %v896 = vld [vmem:[%s1 + $0x1a8] sm:$0xf]
      %v897 = vld [vmem:[%s1 + $0x1ac] sm:$0xf]
      %v898 = vld [vmem:[%s1 + $0x1b0] sm:$0xf]
      %v899 = vld [vmem:[%s1 + $0x1b4] sm:$0xf]
      %v900 = vld [vmem:[%s1 + $0x1b8] sm:$0xf]
      %v901 = vld [vmem:[%s1 + $0x1bc] sm:$0xf]
      %v902 = vld [vmem:[%s1 + $0x1c0] sm:$0xf]
      %v903 = vld [vmem:[%s1 + $0x1c4] sm:$0xf]
      %v904 = vld [vmem:[%s1 + $0x1c8] sm:$0xf]
      %v905 = vld [vmem:[%s1 + $0x1cc] sm:$0xf]
      %v906 = vld [vmem:[%s1 + $0x1d0] sm:$0xf]
      %v907 = vld [vmem:[%s1 + $0x1d4] sm:$0xf]
      %v908 = vld [vmem:[%s1 + $0x1d8] sm:$0xf]
      %v909 = vld [vmem:[%s1 + $0x1dc] sm:$0xf]
      %v910 = vld [vmem:[%s1 + $0x1e0] sm:$0xf]
      %v911 = vld [vmem:[%s1 + $0x1e4] sm:$0xf]
      %v912 = vld [vmem:[%s1 + $0x1e8] sm:$0xf]
      %v913 = vld [vmem:[%s1 + $0x1ec] sm:$0xf]
      %v914 = vld [vmem:[%s1 + $0x1f0] sm:$0xf]
      %v915 = vld [vmem:[%s1 + $0x1f4] sm:$0xf]
      %v916 = vld [vmem:[%s1 + $0x1f8] sm:$0xf]
      %v917 = vld [vmem:[%s1 + $0x1fc] sm:$0xf]
      %v918 = vld [vmem:[%s1 + $0x200] sm:$0xf]
      %v919 = vld [vmem:[%s1 + $0x204] sm:$0xf]
      %v920 = vld [vmem:[%s1 + $0x208] sm:$0xf]
      %v921 = vld [vmem:[%s1 + $0x20c] sm:$0xf]
      %v922 = vld [vmem:[%s1 + $0x210] sm:$0xf]
      %v923 = vld [vmem:[%s1 + $0x214] sm:$0xf]
      %v924 = vld [vmem:[%s1 + $0x218] sm:$0xf]
      %v925 = vld [vmem:[%s1 + $0x21c] sm:$0xf]
      %v926 = vld [vmem:[%s1 + $0x220] sm:$0xf]
      %v927 = vld [vmem:[%s1 + $0x224] sm:$0xf]
      %v928 = vld [vmem:[%s1 + $0x228] sm:$0xf]
      %v929 = vld [vmem:[%s1 + $0x22c] sm:$0xf]
      %v930 = vld [vmem:[%s1 + $0x230] sm:$0xf]
      %v931 = vld [vmem:[%s1 + $0x234] sm:$0xf]
      %v932 = vld [vmem:[%s1 + $0x238] sm:$0xf]
      %v933 = vld [vmem:[%s1 + $0x23c] sm:$0xf]
      %v1078 = vunpack.c.l.b16 %v790
      %v1079 = vunpack.c.l.b16 %v791
      %v1080 = vunpack.c.l.b16 %v792
      %v1081 = vunpack.c.l.b16 %v793
      %v1082 = vunpack.c.l.b16 %v794
      %v1083 = vunpack.c.l.b16 %v795
      %v1084 = vunpack.c.l.b16 %v796
      %v1085 = vunpack.c.l.b16 %v797
      %v1086 = vunpack.c.l.b16 %v798
      %v1087 = vunpack.c.l.b16 %v799
      %v1088 = vunpack.c.l.b16 %v800
      %v1089 = vunpack.c.l.b16 %v801
      %v1090 = vunpack.c.l.b16 %v802
      %v1091 = vunpack.c.l.b16 %v803
      %v1092 = vunpack.c.l.b16 %v804
      %v1093 = vunpack.c.l.b16 %v805
      %v1094 = vunpack.c.l.b16 %v806
      %v1095 = vunpack.c.l.b16 %v807
      %v1096 = vunpack.c.l.b16 %v808
      %v1097 = vunpack.c.l.b16 %v809
      %v1098 = vunpack.c.l.b16 %v810
      %v1099 = vunpack.c.l.b16 %v811
      %v1100 = vunpack.c.l.b16 %v812
      %v1101 = vunpack.c.l.b16 %v813
      %v1102 = vunpack.c.l.b16 %v814
      %v1103 = vunpack.c.l.b16 %v815
      %v1104 = vunpack.c.l.b16 %v816
      %v1105 = vunpack.c.l.b16 %v817
      %v1106 = vunpack.c.l.b16 %v818
      %v1107 = vunpack.c.l.b16 %v819
      %v1108 = vunpack.c.l.b16 %v820
      %v1109 = vunpack.c.l.b16 %v821
      %v1110 = vunpack.c.l.b16 %v822
      %v1111 = vunpack.c.l.b16 %v823
      %v1112 = vunpack.c.l.b16 %v824
      %v1113 = vunpack.c.l.b16 %v825
      %v1114 = vunpack.c.l.b16 %v826
      %v1115 = vunpack.c.l.b16 %v827
      %v1116 = vunpack.c.l.b16 %v828
      %v1117 = vunpack.c.l.b16 %v829
      %v1118 = vunpack.c.l.b16 %v830
      %v1119 = vunpack.c.l.b16 %v831
      %v1120 = vunpack.c.l.b16 %v832
      %v1121 = vunpack.c.l.b16 %v833
      %v1122 = vunpack.c.l.b16 %v834
      %v1123 = vunpack.c.l.b16 %v835
      %v1124 = vunpack.c.l.b16 %v836
      %v1125 = vunpack.c.l.b16 %v837
      %v1126 = vunpack.c.l.b16 %v838
      %v1127 = vunpack.c.l.b16 %v839
      %v1128 = vunpack.c.l.b16 %v840
      %v1129 = vunpack.c.l.b16 %v841
      %v1130 = vunpack.c.l.b16 %v842
      %v1131 = vunpack.c.l.b16 %v843
      %v1132 = vunpack.c.l.b16 %v844
      %v1133 = vunpack.c.l.b16 %v845
      %v1134 = vunpack.c.l.b16 %v846
      %v1135 = vunpack.c.l.b16 %v847
      %v1136 = vunpack.c.l.b16 %v848
      %v1137 = vunpack.c.l.b16 %v849
      %v1138 = vunpack.c.l.b16 %v850
      %v1139 = vunpack.c.l.b16 %v851
      %v1140 = vunpack.c.l.b16 %v852
      %v1141 = vunpack.c.l.b16 %v853
      %v1142 = vunpack.c.l.b16 %v854
      %v1143 = vunpack.c.l.b16 %v855
      %v1144 = vunpack.c.l.b16 %v856
      %v1145 = vunpack.c.l.b16 %v857
      %v1146 = vunpack.c.l.b16 %v858
      %v1147 = vunpack.c.l.b16 %v859
      %v1148 = vunpack.c.l.b16 %v860
      %v1149 = vunpack.c.l.b16 %v861
      %v1150 = vunpack.c.l.b16 %v862
      %v1151 = vunpack.c.l.b16 %v863
      %v1152 = vunpack.c.l.b16 %v864
      %v1153 = vunpack.c.l.b16 %v865
      %v1154 = vunpack.c.l.b16 %v866
      %v1155 = vunpack.c.l.b16 %v867
      %v1156 = vunpack.c.l.b16 %v868
      %v1157 = vunpack.c.l.b16 %v869
      %v1158 = vunpack.c.l.b16 %v870
      %v1159 = vunpack.c.l.b16 %v871
      %v1160 = vunpack.c.l.b16 %v872
      %v1161 = vunpack.c.l.b16 %v873
      %v1162 = vunpack.c.l.b16 %v874
      %v1163 = vunpack.c.l.b16 %v875
      %v1164 = vunpack.c.l.b16 %v876
      %v1165 = vunpack.c.l.b16 %v877
      %v1166 = vunpack.c.l.b16 %v878
      %v1167 = vunpack.c.l.b16 %v879
      %v1168 = vunpack.c.l.b16 %v880
      %v1169 = vunpack.c.l.b16 %v881
      %v1170 = vunpack.c.l.b16 %v882
      %v1171 = vunpack.c.l.b16 %v883
      %v1172 = vunpack.c.l.b16 %v884
      %v1173 = vunpack.c.l.b16 %v885
      %v1174 = vunpack.c.l.b16 %v886
      %v1175 = vunpack.c.l.b16 %v887
      %v1176 = vunpack.c.l.b16 %v888
      %v1177 = vunpack.c.l.b16 %v889
      %v1178 = vunpack.c.l.b16 %v890
      %v1179 = vunpack.c.l.b16 %v891
      %v1180 = vunpack.c.l.b16 %v892
      %v1181 = vunpack.c.l.b16 %v893
      %v1182 = vunpack.c.l.b16 %v894
      %v1183 = vunpack.c.l.b16 %v895
      %v1184 = vunpack.c.l.b16 %v896
      %v1185 = vunpack.c.l.b16 %v897
      %v1186 = vunpack.c.l.b16 %v898
      %v1187 = vunpack.c.l.b16 %v899
      %v1188 = vunpack.c.l.b16 %v900
      %v1189 = vunpack.c.l.b16 %v901
      %v1190 = vunpack.c.l.b16 %v902
      %v1191 = vunpack.c.l.b16 %v903
      %v1192 = vunpack.c.l.b16 %v904
      %v1193 = vunpack.c.l.b16 %v905
      %v1194 = vunpack.c.l.b16 %v906
      %v1195 = vunpack.c.l.b16 %v907
      %v1196 = vunpack.c.l.b16 %v908
      %v1197 = vunpack.c.l.b16 %v909
      %v1198 = vunpack.c.l.b16 %v910
      %v1199 = vunpack.c.l.b16 %v911
      %v1200 = vunpack.c.l.b16 %v912
      %v1201 = vunpack.c.l.b16 %v913
      %v1202 = vunpack.c.l.b16 %v914
      %v1203 = vunpack.c.l.b16 %v915
      %v1204 = vunpack.c.l.b16 %v916
      %v1205 = vunpack.c.l.b16 %v917
      %v1206 = vunpack.c.l.b16 %v918
      %v1207 = vunpack.c.l.b16 %v919
      %v1208 = vunpack.c.l.b16 %v920
      %v1209 = vunpack.c.l.b16 %v921
      %v1210 = vunpack.c.l.b16 %v922
      %v1211 = vunpack.c.l.b16 %v923
      %v1212 = vunpack.c.l.b16 %v924
      %v1213 = vunpack.c.l.b16 %v925
      %v1214 = vunpack.c.l.b16 %v926
      %v1215 = vunpack.c.l.b16 %v927
      %v1216 = vunpack.c.l.b16 %v928
      %v1217 = vunpack.c.l.b16 %v929
      %v1218 = vunpack.c.l.b16 %v930
      %v1219 = vunpack.c.l.b16 %v931
      %v1220 = vunpack.c.l.b16 %v932
      %v1221 = vunpack.c.l.b16 %v933
      %v1222 = vpack.c.b16 %v1079, %v1078
      %v1223 = vpack.c.b16 %v1081, %v1080
      %v1224 = vpack.c.b16 %v1083, %v1082
      %v1225 = vpack.c.b16 %v1085, %v1084
      %v1226 = vpack.c.b16 %v1087, %v1086
      %v1227 = vpack.c.b16 %v1089, %v1088
      %v1228 = vpack.c.b16 %v1091, %v1090
      %v1229 = vpack.c.b16 %v1093, %v1092
      %v1230 = vpack.c.b16 %v1095, %v1094
      %v1231 = vpack.c.b16 %v1097, %v1096
      %v1232 = vpack.c.b16 %v1099, %v1098
      %v1233 = vpack.c.b16 %v1101, %v1100
      %v1234 = vpack.c.b16 %v1103, %v1102
      %v1235 = vpack.c.b16 %v1105, %v1104
      %v1236 = vpack.c.b16 %v1107, %v1106
      %v1237 = vpack.c.b16 %v1109, %v1108
      %v1238 = vpack.c.b16 %v1111, %v1110
      %v1239 = vpack.c.b16 %v1113, %v1112
      %v1240 = vpack.c.b16 %v1115, %v1114
      %v1241 = vpack.c.b16 %v1117, %v1116
      %v1242 = vpack.c.b16 %v1119, %v1118
      %v1243 = vpack.c.b16 %v1121, %v1120
      %v1244 = vpack.c.b16 %v1123, %v1122
      %v1245 = vpack.c.b16 %v1125, %v1124
      %v1246 = vpack.c.b16 %v1127, %v1126
      %v1247 = vpack.c.b16 %v1129, %v1128
      %v1248 = vpack.c.b16 %v1131, %v1130
      %v1249 = vpack.c.b16 %v1133, %v1132
      %v1250 = vpack.c.b16 %v1135, %v1134
      %v1251 = vpack.c.b16 %v1137, %v1136
      %v1252 = vpack.c.b16 %v1139, %v1138
      %v1253 = vpack.c.b16 %v1141, %v1140
      %v1254 = vpack.c.b16 %v1143, %v1142
      %v1255 = vpack.c.b16 %v1145, %v1144
      %v1256 = vpack.c.b16 %v1147, %v1146
      %v1257 = vpack.c.b16 %v1149, %v1148
      %v1258 = vpack.c.b16 %v1151, %v1150
      %v1259 = vpack.c.b16 %v1153, %v1152
      %v1260 = vpack.c.b16 %v1155, %v1154
      %v1261 = vpack.c.b16 %v1157, %v1156
      %v1262 = vpack.c.b16 %v1159, %v1158
      %v1263 = vpack.c.b16 %v1161, %v1160
      %v1264 = vpack.c.b16 %v1163, %v1162
      %v1265 = vpack.c.b16 %v1165, %v1164
      %v1266 = vpack.c.b16 %v1167, %v1166
      %v1267 = vpack.c.b16 %v1169, %v1168
      %v1268 = vpack.c.b16 %v1171, %v1170
      %v1269 = vpack.c.b16 %v1173, %v1172
      %v1270 = vpack.c.b16 %v1175, %v1174
      %v1271 = vpack.c.b16 %v1177, %v1176
      %v1272 = vpack.c.b16 %v1179, %v1178
      %v1273 = vpack.c.b16 %v1181, %v1180
      %v1274 = vpack.c.b16 %v1183, %v1182
      %v1275 = vpack.c.b16 %v1185, %v1184
      %v1276 = vpack.c.b16 %v1187, %v1186
      %v1277 = vpack.c.b16 %v1189, %v1188
      %v1278 = vpack.c.b16 %v1191, %v1190
      %v1279 = vpack.c.b16 %v1193, %v1192
      %v1280 = vpack.c.b16 %v1195, %v1194
      %v1281 = vpack.c.b16 %v1197, %v1196
      %v1282 = vpack.c.b16 %v1199, %v1198
      %v1283 = vpack.c.b16 %v1201, %v1200
      %v1284 = vpack.c.b16 %v1203, %v1202
      %v1285 = vpack.c.b16 %v1205, %v1204
      %v1286 = vpack.c.b16 %v1207, %v1206
      %v1287 = vpack.c.b16 %v1209, %v1208
      %v1288 = vpack.c.b16 %v1211, %v1210
      %v1289 = vpack.c.b16 %v1213, %v1212
      %v1290 = vpack.c.b16 %v1215, %v1214
      %v1291 = vpack.c.b16 %v1217, %v1216
      %v1292 = vpack.c.b16 %v1219, %v1218
      %v1293 = vpack.c.b16 %v1221, %v1220
      %1366 = vmatpush.bf16.msra.mxu0 %v1229
      %1367 = vmatpush.bf16.msra.mxu0 %v1228
      %1368 = vmatpush.bf16.msra.mxu0 %v1227
      %1369 = vmatpush.bf16.msra.mxu0 %v1226
      %1370 = vmatpush.bf16.msra.mxu0 %v1225
      %1371 = vmatpush.bf16.msra.mxu0 %v1224
      %1372 = vmatpush.bf16.msra.mxu0 %v1223
      %1373 = vmatpush.bf16.msra.mxu0 %v1222
      %1374 = vmatmul.bf16.gmra.mxu0 %v614
      %v1375 = vpop.f32.mrf.mxu0
      %v1376 = vadd.f32 0.0, %v1375
      %v1377 = vpop.f32.mrf.mxu0
      %v1378 = vadd.f32 0.0, %v1377
      %1379 = vmatmul.bf16.gmra.mxu0 %v615
      %v1380 = vpop.f32.mrf.mxu0
      %v1381 = vadd.f32 0.0, %v1380
      %v1382 = vpop.f32.mrf.mxu0
      %v1383 = vadd.f32 0.0, %v1382
      %1384 = vmatmul.bf16.gmra.mxu0 %v616
      %v1385 = vpop.f32.mrf.mxu0
      %v1386 = vadd.f32 0.0, %v1385
      %v1387 = vpop.f32.mrf.mxu0
      %v1388 = vadd.f32 0.0, %v1387
      %1389 = vmatmul.bf16.gmra.mxu0 %v617
      %v1390 = vpop.f32.mrf.mxu0
      %v1391 = vadd.f32 0.0, %v1390
      %v1392 = vpop.f32.mrf.mxu0
      %v1393 = vadd.f32 0.0, %v1392
      %1394 = vdwg.mxu0
      %1395 = vmatpush.bf16.msra.mxu0 %v1237
      %1396 = vmatpush.bf16.msra.mxu0 %v1236
      %1397 = vmatpush.bf16.msra.mxu0 %v1235
      %1398 = vmatpush.bf16.msra.mxu0 %v1234
      %1399 = vmatpush.bf16.msra.mxu0 %v1233
      %1400 = vmatpush.bf16.msra.mxu0 %v1232
      %1401 = vmatpush.bf16.msra.mxu0 %v1231
      %1402 = vmatpush.bf16.msra.mxu0 %v1230
      %1403 = vmatmul.bf16.gmra.mxu0 %v638
      %v1404 = vpop.f32.mrf.mxu0
      %v1405 = vadd.f32 %v1376, %v1404
      %v1406 = vpop.f32.mrf.mxu0
      %v1407 = vadd.f32 %v1378, %v1406
      %1408 = vmatmul.bf16.gmra.mxu0 %v639
      %v1409 = vpop.f32.mrf.mxu0
      %v1410 = vadd.f32 %v1381, %v1409
      %v1411 = vpop.f32.mrf.mxu0
      %v1412 = vadd.f32 %v1383, %v1411
      %1413 = vmatmul.bf16.gmra.mxu0 %v640
      %v1414 = vpop.f32.mrf.mxu0
      %v1415 = vadd.f32 %v1386, %v1414
      %v1416 = vpop.f32.mrf.mxu0
      %v1417 = vadd.f32 %v1388, %v1416
      %1418 = vmatmul.bf16.gmra.mxu0 %v641
      %v1419 = vpop.f32.mrf.mxu0
      %v1420 = vadd.f32 %v1391, %v1419
      %v1421 = vpop.f32.mrf.mxu0
      %v1422 = vadd.f32 %v1393, %v1421
      %1423 = vdwg.mxu0
      %1424 = vmatpush.bf16.msra.mxu0 %v1245
      %1425 = vmatpush.bf16.msra.mxu0 %v1244
      %1426 = vmatpush.bf16.msra.mxu0 %v1243
      %1427 = vmatpush.bf16.msra.mxu0 %v1242
      %1428 = vmatpush.bf16.msra.mxu0 %v1241
      %1429 = vmatpush.bf16.msra.mxu0 %v1240
      %1430 = vmatpush.bf16.msra.mxu0 %v1239
      %1431 = vmatpush.bf16.msra.mxu0 %v1238
      %1432 = vmatmul.bf16.gmra.mxu0 %v654
      %v1433 = vpop.f32.mrf.mxu0
      %v1434 = vadd.f32 %v1405, %v1433
      %v1435 = vpop.f32.mrf.mxu0
      %v1436 = vadd.f32 %v1407, %v1435
      %1437 = vmatmul.bf16.gmra.mxu0 %v655
      %v1438 = vpop.f32.mrf.mxu0
      %v1439 = vadd.f32 %v1410, %v1438
      %v1440 = vpop.f32.mrf.mxu0
      %v1441 = vadd.f32 %v1412, %v1440
      %1442 = vmatmul.bf16.gmra.mxu0 %v656
      %v1443 = vpop.f32.mrf.mxu0
      %v1444 = vadd.f32 %v1415, %v1443
      %v1445 = vpop.f32.mrf.mxu0
      %v1446 = vadd.f32 %v1417, %v1445
      %1447 = vmatmul.bf16.gmra.mxu0 %v657
      %v1448 = vpop.f32.mrf.mxu0
      %v1449 = vadd.f32 %v1420, %v1448
      %v1450 = vpop.f32.mrf.mxu0
      %v1451 = vadd.f32 %v1422, %v1450
      %1452 = vdwg.mxu0
      %1453 = vmatpush.bf16.msra.mxu0 %v1253
      %1454 = vmatpush.bf16.msra.mxu0 %v1252
      %1455 = vmatpush.bf16.msra.mxu0 %v1251
      %1456 = vmatpush.bf16.msra.mxu0 %v1250
      %1457 = vmatpush.bf16.msra.mxu0 %v1249
      %1458 = vmatpush.bf16.msra.mxu0 %v1248
      %1459 = vmatpush.bf16.msra.mxu0 %v1247
      %1460 = vmatpush.bf16.msra.mxu0 %v1246
      %1461 = vmatmul.bf16.gmra.mxu0 %v678
      %v1462 = vpop.f32.mrf.mxu0
      %v1463 = vadd.f32 %v1434, %v1462
      %v1464 = vpop.f32.mrf.mxu0
      %v1465 = vadd.f32 %v1436, %v1464
      %1466 = vmatmul.bf16.gmra.mxu0 %v679
      %v1467 = vpop.f32.mrf.mxu0
      %v1468 = vadd.f32 %v1439, %v1467
      %v1469 = vpop.f32.mrf.mxu0
      %v1470 = vadd.f32 %v1441, %v1469
      %1471 = vmatmul.bf16.gmra.mxu0 %v680
      %v1472 = vpop.f32.mrf.mxu0
      %v1473 = vadd.f32 %v1444, %v1472
      %v1474 = vpop.f32.mrf.mxu0
      %v1475 = vadd.f32 %v1446, %v1474
      %1476 = vmatmul.bf16.gmra.mxu0 %v681
      %v1477 = vpop.f32.mrf.mxu0
      %v1478 = vadd.f32 %v1449, %v1477
      %v1479 = vpop.f32.mrf.mxu0
      %v1480 = vadd.f32 %v1451, %v1479
      %1481 = vdwg.mxu0
      %1482 = vmatpush.bf16.msra.mxu0 %v1261
      %1483 = vmatpush.bf16.msra.mxu0 %v1260
      %1484 = vmatpush.bf16.msra.mxu0 %v1259
      %1485 = vmatpush.bf16.msra.mxu0 %v1258
      %1486 = vmatpush.bf16.msra.mxu0 %v1257
      %1487 = vmatpush.bf16.msra.mxu0 %v1256
      %1488 = vmatpush.bf16.msra.mxu0 %v1255
      %1489 = vmatpush.bf16.msra.mxu0 %v1254
      %1490 = vmatmul.bf16.gmra.mxu0 %v702
      %v1491 = vpop.f32.mrf.mxu0
      %v1492 = vadd.f32 %v1463, %v1491
      %v1493 = vpop.f32.mrf.mxu0
      %v1494 = vadd.f32 %v1465, %v1493
      %1495 = vmatmul.bf16.gmra.mxu0 %v703
      %v1496 = vpop.f32.mrf.mxu0
      %v1497 = vadd.f32 %v1468, %v1496
      %v1498 = vpop.f32.mrf.mxu0
      %v1499 = vadd.f32 %v1470, %v1498
      %1500 = vmatmul.bf16.gmra.mxu0 %v704
      %v1501 = vpop.f32.mrf.mxu0
      %v1502 = vadd.f32 %v1473, %v1501
      %v1503 = vpop.f32.mrf.mxu0
      %v1504 = vadd.f32 %v1475, %v1503
      %1505 = vmatmul.bf16.gmra.mxu0 %v705
      %v1506 = vpop.f32.mrf.mxu0
      %v1507 = vadd.f32 %v1478, %v1506
      %v1508 = vpop.f32.mrf.mxu0
      %v1509 = vadd.f32 %v1480, %v1508
      %1510 = vdwg.mxu0
      %1511 = vmatpush.bf16.msra.mxu0 %v1269
      %1512 = vmatpush.bf16.msra.mxu0 %v1268
      %1513 = vmatpush.bf16.msra.mxu0 %v1267
      %1514 = vmatpush.bf16.msra.mxu0 %v1266
      %1515 = vmatpush.bf16.msra.mxu0 %v1265
      %1516 = vmatpush.bf16.msra.mxu0 %v1264
      %1517 = vmatpush.bf16.msra.mxu0 %v1263
      %1518 = vmatpush.bf16.msra.mxu0 %v1262
      %1519 = vmatmul.bf16.gmra.mxu0 %v718
      %v1520 = vpop.f32.mrf.mxu0
      %v1521 = vadd.f32 %v1492, %v1520
      %v1522 = vpop.f32.mrf.mxu0
      %v1523 = vadd.f32 %v1494, %v1522
      %1524 = vmatmul.bf16.gmra.mxu0 %v719
      %v1525 = vpop.f32.mrf.mxu0
      %v1526 = vadd.f32 %v1497, %v1525
      %v1527 = vpop.f32.mrf.mxu0
      %v1528 = vadd.f32 %v1499, %v1527
      %1529 = vmatmul.bf16.gmra.mxu0 %v720
      %v1530 = vpop.f32.mrf.mxu0
      %v1531 = vadd.f32 %v1502, %v1530
      %v1532 = vpop.f32.mrf.mxu0
      %v1533 = vadd.f32 %v1504, %v1532
      %1534 = vmatmul.bf16.gmra.mxu0 %v721
      %v1535 = vpop.f32.mrf.mxu0
      %v1536 = vadd.f32 %v1507, %v1535
      %v1537 = vpop.f32.mrf.mxu0
      %v1538 = vadd.f32 %v1509, %v1537
      %1539 = vdwg.mxu0
      %1540 = vmatpush.bf16.msra.mxu0 %v1277
      %1541 = vmatpush.bf16.msra.mxu0 %v1276
      %1542 = vmatpush.bf16.msra.mxu0 %v1275
      %1543 = vmatpush.bf16.msra.mxu0 %v1274
      %1544 = vmatpush.bf16.msra.mxu0 %v1273
      %1545 = vmatpush.bf16.msra.mxu0 %v1272
      %1546 = vmatpush.bf16.msra.mxu0 %v1271
      %1547 = vmatpush.bf16.msra.mxu0 %v1270
      %1548 = vmatmul.bf16.gmra.mxu0 %v742
      %v1549 = vpop.f32.mrf.mxu0
      %v1550 = vadd.f32 %v1521, %v1549
      %v1551 = vpop.f32.mrf.mxu0
      %v1552 = vadd.f32 %v1523, %v1551
      %1553 = vmatmul.bf16.gmra.mxu0 %v743
      %v1554 = vpop.f32.mrf.mxu0
      %v1555 = vadd.f32 %v1526, %v1554
      %v1556 = vpop.f32.mrf.mxu0
      %v1557 = vadd.f32 %v1528, %v1556
      %1558 = vmatmul.bf16.gmra.mxu0 %v744
      %v1559 = vpop.f32.mrf.mxu0
      %v1560 = vadd.f32 %v1531, %v1559
      %v1561 = vpop.f32.mrf.mxu0
      %v1562 = vadd.f32 %v1533, %v1561
      %1563 = vmatmul.bf16.gmra.mxu0 %v745
      %v1564 = vpop.f32.mrf.mxu0
      %v1565 = vadd.f32 %v1536, %v1564
      %v1566 = vpop.f32.mrf.mxu0
      %v1567 = vadd.f32 %v1538, %v1566
      %1568 = vdwg.mxu0
      %1569 = vmatpush.bf16.msra.mxu0 %v1285
      %1570 = vmatpush.bf16.msra.mxu0 %v1284
      %1571 = vmatpush.bf16.msra.mxu0 %v1283
      %1572 = vmatpush.bf16.msra.mxu0 %v1282
      %1573 = vmatpush.bf16.msra.mxu0 %v1281
      %1574 = vmatpush.bf16.msra.mxu0 %v1280
      %1575 = vmatpush.bf16.msra.mxu0 %v1279
      %1576 = vmatpush.bf16.msra.mxu0 %v1278
      %1577 = vmatmul.bf16.gmra.mxu0 %v766
      %v1578 = vpop.f32.mrf.mxu0
      %v1579 = vadd.f32 %v1550, %v1578
      %v1580 = vpop.f32.mrf.mxu0
      %v1581 = vadd.f32 %v1552, %v1580
      %1582 = vmatmul.bf16.gmra.mxu0 %v767
      %v1583 = vpop.f32.mrf.mxu0
      %v1584 = vadd.f32 %v1555, %v1583
      %v1585 = vpop.f32.mrf.mxu0
      %v1586 = vadd.f32 %v1557, %v1585
      %1587 = vmatmul.bf16.gmra.mxu0 %v768
      %v1588 = vpop.f32.mrf.mxu0
      %v1589 = vadd.f32 %v1560, %v1588
      %v1590 = vpop.f32.mrf.mxu0
      %v1591 = vadd.f32 %v1562, %v1590
      %1592 = vmatmul.bf16.gmra.mxu0 %v769
      %v1593 = vpop.f32.mrf.mxu0
      %v1594 = vadd.f32 %v1565, %v1593
      %v1595 = vpop.f32.mrf.mxu0
      %v1596 = vadd.f32 %v1567, %v1595
      %1597 = vdwg.mxu0
      %1598 = vmatpush.bf16.msra.mxu0 %v1293
      %1599 = vmatpush.bf16.msra.mxu0 %v1292
      %1600 = vmatpush.bf16.msra.mxu0 %v1291
      %1601 = vmatpush.bf16.msra.mxu0 %v1290
      %1602 = vmatpush.bf16.msra.mxu0 %v1289
      %1603 = vmatpush.bf16.msra.mxu0 %v1288
      %1604 = vmatpush.bf16.msra.mxu0 %v1287
      %1605 = vmatpush.bf16.msra.mxu0 %v1286
      %1606 = vmatmul.bf16.gmra.mxu0 %v782
      %v1607 = vpop.f32.mrf.mxu0
      %v1608 = vadd.f32 %v1579, %v1607
      %v1609 = vpop.f32.mrf.mxu0
      %v1610 = vadd.f32 %v1581, %v1609
      %1611 = vmatmul.bf16.gmra.mxu0 %v783
      %v1612 = vpop.f32.mrf.mxu0
      %v1613 = vadd.f32 %v1584, %v1612
      %v1614 = vpop.f32.mrf.mxu0
      %v1615 = vadd.f32 %v1586, %v1614
      %1616 = vmatmul.bf16.gmra.mxu0 %v784
      %v1617 = vpop.f32.mrf.mxu0
      %v1618 = vadd.f32 %v1589, %v1617
      %v1619 = vpop.f32.mrf.mxu0
      %v1620 = vadd.f32 %v1591, %v1619
      %1621 = vmatmul.bf16.gmra.mxu0 %v785
      %v1622 = vpop.f32.mrf.mxu0
      %v1623 = vadd.f32 %v1594, %v1622
      %v1624 = vpop.f32.mrf.mxu0
      %v1625 = vadd.f32 %v1596, %v1624
      %1626 = vdwg.mxu0
      %v1627 = vpack.c.bf16 %v1608, %v1608
      %v1628 = vpack.c.bf16 %v1610, %v1610
      %v1629 = vpack.c.bf16 %v1613, %v1613
      %v1630 = vpack.c.bf16 %v1615, %v1615
      %v1631 = vpack.c.bf16 %v1618, %v1618
      %v1632 = vpack.c.bf16 %v1620, %v1620
      %v1633 = vpack.c.bf16 %v1623, %v1623
      %v1634 = vpack.c.bf16 %v1625, %v1625
      %1635 = vst [vmem:[%s177] sm:$0xf] %v1627
      %1636 = vst [vmem:[%s177 + $0x4] sm:$0xf] %v1628
      %1637 = vst [vmem:[%s177 + $0x8] sm:$0xf] %v1629
      %1638 = vst [vmem:[%s177 + $0xc] sm:$0xf] %v1630
      %1639 = vst [vmem:[%s177 + $0x10] sm:$0xf] %v1631
      %1640 = vst [vmem:[%s177 + $0x14] sm:$0xf] %v1632
      %1641 = vst [vmem:[%s177 + $0x18] sm:$0xf] %v1633
      %1642 = vst [vmem:[%s177 + $0x1c] sm:$0xf] %v1634
      %v1643 = vadd.f32 %v1608, %v1610
      %v1644 = vadd.f32 %v1643, %v1613
      %v1645 = vadd.f32 %v1644, %v1615
      %v1646 = vadd.f32 %v1645, %v1618
      %v1647 = vadd.f32 %v1646, %v1620
      %v1648 = vadd.f32 %v1647, %v1623
      %v1649 = vadd.f32 %v1648, %v1625
      %v1650 = vrot.slane %v1649, 4
      %v1651 = vadd.f32 %v1649, %v1650
      %v1652 = vrot.slane %v1651, 2
      %v1653 = vadd.f32 %v1651, %v1652
      %v1654 = vrot.slane %v1653, 1
      %v1655 = vadd.f32 %v1653, %v1654
      %v1656 = vmul.f32 %v1608, %v1608
      %v1657 = vmul.f32 %v1610, %v1610
      %v1658 = vmul.f32 %v1613, %v1613
      %v1659 = vmul.f32 %v1615, %v1615
      %v1660 = vmul.f32 %v1618, %v1618
      %v1661 = vmul.f32 %v1620, %v1620
      %v1662 = vmul.f32 %v1623, %v1623
      %v1663 = vmul.f32 %v1625, %v1625
      %v1664 = vadd.f32 %v1656, %v1657
      %v1665 = vadd.f32 %v1664, %v1658
      %v1666 = vadd.f32 %v1665, %v1659
      %v1667 = vadd.f32 %v1666, %v1660
      %v1668 = vadd.f32 %v1667, %v1661
      %v1669 = vadd.f32 %v1668, %v1662
      %v1670 = vadd.f32 %v1669, %v1663
      %v1671 = vrot.slane %v1670, 4
      %v1672 = vadd.f32 %v1670, %v1671
      %v1673 = vrot.slane %v1672, 2
      %v1674 = vadd.f32 %v1672, %v1673
      %v1675 = vrot.slane %v1674, 1
      %v1676 = vadd.f32 %v1674, %v1675
      %vm1677 = vcmask 1040384
      %v1678 = vsel %vm1677, %v1655, %v1676
      %1679 = vst [vmem:[%s181] sm:$0x3] %v1678
      %p1680 = scmp.lt.s32.totalorder %s15, 1
      %s1681 = scalar_select %p1680, %s15, 1
      %s1682 = smul.addr %s1681, 8
      %s1683 = smul.addr %s1682, 4
      %s1684 = scalar_lea.vmem %s2, %s1683
      %p1685 = scmp.lt.s32.totalorder %s15, 1
      %s1686 = scalar_select %p1685, %s15, 1
      %s1687 = smul.addr %s1686, 2
      %s1688 = scalar_lea.vmem %s3, %s1687
      // Predicated region
      $region29: #{bottleneck_forward.8} parent=27 // pred_check
        %p1689 = pneg %p80
      $region30: #{bottleneck_forward.8} parent=27 // pred_check_branch
        %1691 = sbr.rel (%p1689) target = $region32
      $region31: #{bottleneck_forward.8} parent=27 // pred_region
        _
      $region32: #{bottleneck_forward.8} parent=27 // pred_fallthru
        _
      // Predicated region
      $region33: #{bottleneck_forward.8} parent=27 // pred_check
        %p1692 = pneg %p106
      $region34: #{bottleneck_forward.8} parent=27 // pred_check_branch
        %1694 = sbr.rel (%p1692) target = $region36
      $region35: #{bottleneck_forward.8} parent=27 // pred_region
        _
      $region36: #{bottleneck_forward.8} parent=27 // pred_fallthru
        _
    $region28: #{bottleneck_forward.8} parent=5 // pred_fallthru
      _
    %p1695 = scmp.le.s32.totalorder 2, %s10
    // Predicated region
    $region37: #{bottleneck_forward.8} parent=5 // pred_check
      %p1696 = pneg %p1695
    $region38: #{bottleneck_forward.8} parent=5 // pred_check_branch
      %1698 = sbr.rel (%p1696) target = $region40
    $region39: #{bottleneck_forward.8} parent=5 // pred_region
      %s1699 = ssub.s32 %s10, 2
      // Predicated region
      $region41: #{bottleneck_forward.8} parent=39 // pred_check
        %p1700 = pneg %p86
      $region42: #{bottleneck_forward.8} parent=39 // pred_check_branch
        %1702 = sbr.rel (%p1700) target = $region44
      $region43: #{bottleneck_forward.8} parent=39 // pred_region
        %p1703 = scmp.lt.s32.totalorder %s16, 1
        %s1704 = scalar_select %p1703, %s16, 1
        %s1705 = smul.addr %s1704, 8
        %s1706 = smul.addr %s1705, 4
        %s1707 = scalar_lea.vmem %s2, %s1706
      $region44: #{bottleneck_forward.8} parent=39 // pred_fallthru
        _
      // Predicated region
      $region45: #{bottleneck_forward.8} parent=39 // pred_check
        %p1708 = pneg %p112
      $region46: #{bottleneck_forward.8} parent=39 // pred_check_branch
        %1710 = sbr.rel (%p1708) target = $region48
      $region47: #{bottleneck_forward.8} parent=39 // pred_region
        %p1711 = scmp.lt.s32.totalorder %s16, 1
        %s1712 = scalar_select %p1711, %s16, 1
        %s1713 = smul.addr %s1712, 2
        %s1714 = scalar_lea.vmem %s3, %s1713
      $region48: #{bottleneck_forward.8} parent=39 // pred_fallthru
        _
    $region40: #{bottleneck_forward.8} parent=5 // pred_fallthru
      _
  $region6: #{bottleneck_forward.8} parent=0 // loop_footer
    %s14 = sadd.s32 1, %s10
  $region7: #{bottleneck_forward.8} parent=0 // loop_footer_branch
    %9 = sbr.rel target = $region3
  $region8: #{bottleneck_forward.8} parent=0 // loop_exit
    _

// kernel: bottleneck_forward.10
$region0: #{bottleneck_forward.10}
  #allocation0 [shape = 'u32[]', space=smem, size = 0x4, offset = 0x4, fixed_abs, tag = 'smem constant byte address 0x4 - core index']
  #allocation1 [shape = 'u32[72,128]{1,0:T(1,128)}', space=vmem, size = 0x9000, scoped, tag = 'internal scratch']
  %s0 = inlined_call_operand.vmem [shape: bf16[128,128], index: 0, kind: input, shape index: {}]
  %s1 = inlined_call_operand.vmem [shape: bf16[128,128], index: 1, kind: input, shape index: {}]
  %s2 = inlined_call_operand.vmem [shape: bf16[128,128], index: 2, kind: output, shape index: {0}]
  %s3 = inlined_call_operand.vmem [shape: f32[1,2,128], index: 3, kind: output, shape index: {1}]
  %4 = xla_tuple %s2, %s3
  %s5 = sld [smem:[#allocation0]]
  $region26: #{bottleneck_forward.10} parent=0
    _
  %s7 = ssub.s32 1, %s5
  %s8 = scalar_select 0, %s7, %s5
  // Predicated region
  $region2: #{bottleneck_forward.10} parent=0 // pred_check
    _
  $region3: #{bottleneck_forward.10} parent=0 // pred_check_branch
    %10 = sbr.rel (0) target = $region5
  $region4: #{bottleneck_forward.10} parent=0 // pred_region
    _
  $region5: #{bottleneck_forward.10} parent=0 // pred_fallthru
    _
  // Predicated region
  $region6: #{bottleneck_forward.10} parent=0 // pred_check
    _
  $region7: #{bottleneck_forward.10} parent=0 // pred_check_branch
    %12 = sbr.rel (0) target = $region9
  $region8: #{bottleneck_forward.10} parent=0 // pred_region
    _
  $region9: #{bottleneck_forward.10} parent=0 // pred_fallthru
    _
  %v13 = vld [vmem:[%s0] sm:$0xf]
  %v14 = vld [vmem:[%s0 + $0x4] sm:$0xf]
  %v15 = vld [vmem:[%s0 + $0x8] sm:$0xf]
  %v16 = vld [vmem:[%s0 + $0xc] sm:$0xf]
  %v17 = vld [vmem:[%s0 + $0x10] sm:$0xf]
  %v18 = vld [vmem:[%s0 + $0x14] sm:$0xf]
  %v19 = vld [vmem:[%s0 + $0x18] sm:$0xf]
  %v20 = vld [vmem:[%s0 + $0x1c] sm:$0xf]
  %v21 = vld [vmem:[%s0 + $0x20] sm:$0xf]
  %v22 = vld [vmem:[%s0 + $0x24] sm:$0xf]
  %v23 = vld [vmem:[%s0 + $0x28] sm:$0xf]
  %v24 = vld [vmem:[%s0 + $0x2c] sm:$0xf]
  %v25 = vld [vmem:[%s0 + $0x30] sm:$0xf]
  %v26 = vld [vmem:[%s0 + $0x34] sm:$0xf]
  %v27 = vld [vmem:[%s0 + $0x38] sm:$0xf]
  %v28 = vld [vmem:[%s0 + $0x3c] sm:$0xf]
  %v29 = vld [vmem:[%s1] sm:$0xf]
  %v30 = vld [vmem:[%s1 + $0x4] sm:$0xf]
  %v31 = vld [vmem:[%s1 + $0x8] sm:$0xf]
  %v32 = vld [vmem:[%s1 + $0xc] sm:$0xf]
  %v33 = vld [vmem:[%s1 + $0x10] sm:$0xf]
  %v34 = vld [vmem:[%s1 + $0x14] sm:$0xf]
  %v35 = vld [vmem:[%s1 + $0x18] sm:$0xf]
  %v36 = vld [vmem:[%s1 + $0x1c] sm:$0xf]
  %v37 = vld [vmem:[%s1 + $0x20] sm:$0xf]
  %v38 = vld [vmem:[%s1 + $0x24] sm:$0xf]
  %v39 = vld [vmem:[%s1 + $0x28] sm:$0xf]
  %v40 = vld [vmem:[%s1 + $0x2c] sm:$0xf]
  %v41 = vld [vmem:[%s1 + $0x30] sm:$0xf]
  %v42 = vld [vmem:[%s1 + $0x34] sm:$0xf]
  %v43 = vld [vmem:[%s1 + $0x38] sm:$0xf]
  %v44 = vld [vmem:[%s1 + $0x3c] sm:$0xf]
  %v61 = vunpack.c.l.b16 %v13
  %v62 = vunpack.c.l.b16 %v14
  %v63 = vunpack.c.l.b16 %v15
  %v64 = vunpack.c.l.b16 %v16
  %v65 = vunpack.c.l.b16 %v17
  %v66 = vunpack.c.l.b16 %v18
  %v67 = vunpack.c.l.b16 %v19
  %v68 = vunpack.c.l.b16 %v20
  %v69 = vunpack.c.l.b16 %v21
  %v70 = vunpack.c.l.b16 %v22
  %v71 = vunpack.c.l.b16 %v23
  %v72 = vunpack.c.l.b16 %v24
  %v73 = vunpack.c.l.b16 %v25
  %v74 = vunpack.c.l.b16 %v26
  %v75 = vunpack.c.l.b16 %v27
  %v76 = vunpack.c.l.b16 %v28
  %v77 = vpack.c.b16 %v62, %v61
  %v78 = vpack.c.b16 %v64, %v63
  %v79 = vpack.c.b16 %v66, %v65
  %v80 = vpack.c.b16 %v68, %v67
  %v81 = vpack.c.b16 %v70, %v69
  %v82 = vpack.c.b16 %v72, %v71
  %v83 = vpack.c.b16 %v74, %v73
  %v84 = vpack.c.b16 %v76, %v75
  %v109 = vunpack.c.l.b16 %v29
  %v110 = vunpack.c.l.b16 %v30
  %v111 = vunpack.c.l.b16 %v31
  %v112 = vunpack.c.l.b16 %v32
  %v113 = vunpack.c.l.b16 %v33
  %v114 = vunpack.c.l.b16 %v34
  %v115 = vunpack.c.l.b16 %v35
  %v116 = vunpack.c.l.b16 %v36
  %v117 = vunpack.c.l.b16 %v37
  %v118 = vunpack.c.l.b16 %v38
  %v119 = vunpack.c.l.b16 %v39
  %v120 = vunpack.c.l.b16 %v40
  %v121 = vunpack.c.l.b16 %v41
  %v122 = vunpack.c.l.b16 %v42
  %v123 = vunpack.c.l.b16 %v43
  %v124 = vunpack.c.l.b16 %v44
  %v125 = vpack.c.b16 %v110, %v109
  %v126 = vpack.c.b16 %v112, %v111
  %v127 = vpack.c.b16 %v114, %v113
  %v128 = vpack.c.b16 %v116, %v115
  %v129 = vpack.c.b16 %v118, %v117
  %v130 = vpack.c.b16 %v120, %v119
  %v131 = vpack.c.b16 %v122, %v121
  %v132 = vpack.c.b16 %v124, %v123
  %141 = vmatpush.bf16.msra.mxu0 %v132
  %142 = vmatpush.bf16.msra.mxu0 %v131
  %143 = vmatpush.bf16.msra.mxu0 %v130
  %144 = vmatpush.bf16.msra.mxu0 %v129
  %145 = vmatpush.bf16.msra.mxu0 %v128
  %146 = vmatpush.bf16.msra.mxu0 %v127
  %147 = vmatpush.bf16.msra.mxu0 %v126
  %148 = vmatpush.bf16.msra.mxu0 %v125
  %149 = vmatmul.bf16.gmra.mxu0 %v77
  %v150 = vpop.f32.mrf.mxu0
  %v151 = vadd.f32 0.0, %v150
  %v152 = vpop.f32.mrf.mxu0
  %v153 = vadd.f32 0.0, %v152
  %154 = vmatmul.bf16.gmra.mxu0 %v78
  %v155 = vpop.f32.mrf.mxu0
  %v156 = vadd.f32 0.0, %v155
  %v157 = vpop.f32.mrf.mxu0
  %v158 = vadd.f32 0.0, %v157
  %159 = vmatmul.bf16.gmra.mxu0 %v79
  %v160 = vpop.f32.mrf.mxu0
  %v161 = vadd.f32 0.0, %v160
  %v162 = vpop.f32.mrf.mxu0
  %v163 = vadd.f32 0.0, %v162
  %164 = vmatmul.bf16.gmra.mxu0 %v80
  %v165 = vpop.f32.mrf.mxu0
  %v166 = vadd.f32 0.0, %v165
  %v167 = vpop.f32.mrf.mxu0
  %v168 = vadd.f32 0.0, %v167
  %169 = vmatmul.bf16.gmra.mxu0 %v81
  %v170 = vpop.f32.mrf.mxu0
  %v171 = vadd.f32 0.0, %v170
  %v172 = vpop.f32.mrf.mxu0
  %v173 = vadd.f32 0.0, %v172
  %174 = vmatmul.bf16.gmra.mxu0 %v82
  %v175 = vpop.f32.mrf.mxu0
  %v176 = vadd.f32 0.0, %v175
  %v177 = vpop.f32.mrf.mxu0
  %v178 = vadd.f32 0.0, %v177
  %179 = vmatmul.bf16.gmra.mxu0 %v83
  %v180 = vpop.f32.mrf.mxu0
  %v181 = vadd.f32 0.0, %v180
  %v182 = vpop.f32.mrf.mxu0
  %v183 = vadd.f32 0.0, %v182
  %184 = vmatmul.bf16.gmra.mxu0 %v84
  %v185 = vpop.f32.mrf.mxu0
  %v186 = vadd.f32 0.0, %v185
  %v187 = vpop.f32.mrf.mxu0
  %v188 = vadd.f32 0.0, %v187
  %189 = vdwg.mxu0
  %v190 = vpack.c.bf16 %v151, %v151
  %v191 = vpack.c.bf16 %v153, %v153
  %v192 = vpack.c.bf16 %v156, %v156
  %v193 = vpack.c.bf16 %v158, %v158
  %v194 = vpack.c.bf16 %v161, %v161
  %v195 = vpack.c.bf16 %v163, %v163
  %v196 = vpack.c.bf16 %v166, %v166
  %v197 = vpack.c.bf16 %v168, %v168
  %v198 = vpack.c.bf16 %v171, %v171
  %v199 = vpack.c.bf16 %v173, %v173
  %v200 = vpack.c.bf16 %v176, %v176
  %v201 = vpack.c.bf16 %v178, %v178
  %v202 = vpack.c.bf16 %v181, %v181
  %v203 = vpack.c.bf16 %v183, %v183
  %v204 = vpack.c.bf16 %v186, %v186
  %v205 = vpack.c.bf16 %v188, %v188
  %206 = vst [vmem:[%s2] sm:$0xf] %v190
  %207 = vst [vmem:[%s2 + $0x4] sm:$0xf] %v191
  %208 = vst [vmem:[%s2 + $0x8] sm:$0xf] %v192
  %209 = vst [vmem:[%s2 + $0xc] sm:$0xf] %v193
  %210 = vst [vmem:[%s2 + $0x10] sm:$0xf] %v194
  %211 = vst [vmem:[%s2 + $0x14] sm:$0xf] %v195
  %212 = vst [vmem:[%s2 + $0x18] sm:$0xf] %v196
  %213 = vst [vmem:[%s2 + $0x1c] sm:$0xf] %v197
  %214 = vst [vmem:[%s2 + $0x20] sm:$0xf] %v198
  %215 = vst [vmem:[%s2 + $0x24] sm:$0xf] %v199
  %216 = vst [vmem:[%s2 + $0x28] sm:$0xf] %v200
  %217 = vst [vmem:[%s2 + $0x2c] sm:$0xf] %v201
  %218 = vst [vmem:[%s2 + $0x30] sm:$0xf] %v202
  %219 = vst [vmem:[%s2 + $0x34] sm:$0xf] %v203
  %220 = vst [vmem:[%s2 + $0x38] sm:$0xf] %v204
  %221 = vst [vmem:[%s2 + $0x3c] sm:$0xf] %v205
  %v222 = vadd.f32 %v151, %v153
  %v223 = vadd.f32 %v222, %v156
  %v224 = vadd.f32 %v223, %v158
  %v225 = vadd.f32 %v224, %v161
  %v226 = vadd.f32 %v225, %v163
  %v227 = vadd.f32 %v226, %v166
  %v228 = vadd.f32 %v227, %v168
  %v229 = vadd.f32 %v228, %v171
  %v230 = vadd.f32 %v229, %v173
  %v231 = vadd.f32 %v230, %v176
  %v232 = vadd.f32 %v231, %v178
  %v233 = vadd.f32 %v232, %v181
  %v234 = vadd.f32 %v233, %v183
  %v235 = vadd.f32 %v234, %v186
  %v236 = vadd.f32 %v235, %v188
  %v237 = vrot.slane %v236, 4
  %v238 = vadd.f32 %v236, %v237
  %v239 = vrot.slane %v238, 2
  %v240 = vadd.f32 %v238, %v239
  %v241 = vrot.slane %v240, 1
  %v242 = vadd.f32 %v240, %v241
  %v243 = vmul.f32 %v151, %v151
  %v244 = vmul.f32 %v153, %v153
  %v245 = vmul.f32 %v156, %v156
  %v246 = vmul.f32 %v158, %v158
  %v247 = vmul.f32 %v161, %v161
  %v248 = vmul.f32 %v163, %v163
  %v249 = vmul.f32 %v166, %v166
  %v250 = vmul.f32 %v168, %v168
  %v251 = vmul.f32 %v171, %v171
  %v252 = vmul.f32 %v173, %v173
  %v253 = vmul.f32 %v176, %v176
  %v254 = vmul.f32 %v178, %v178
  %v255 = vmul.f32 %v181, %v181
  %v256 = vmul.f32 %v183, %v183
  %v257 = vmul.f32 %v186, %v186
  %v258 = vmul.f32 %v188, %v188
  %v259 = vadd.f32 %v243, %v244
  %v260 = vadd.f32 %v259, %v245
  %v261 = vadd.f32 %v260, %v246
  %v262 = vadd.f32 %v261, %v247
  %v263 = vadd.f32 %v262, %v248
  %v264 = vadd.f32 %v263, %v249
  %v265 = vadd.f32 %v264, %v250
  %v266 = vadd.f32 %v265, %v251
  %v267 = vadd.f32 %v266, %v252
  %v268 = vadd.f32 %v267, %v253
  %v269 = vadd.f32 %v268, %v254
  %v270 = vadd.f32 %v269, %v255
  %v271 = vadd.f32 %v270, %v256
  %v272 = vadd.f32 %v271, %v257
  %v273 = vadd.f32 %v272, %v258
  %v274 = vrot.slane %v273, 4
  %v275 = vadd.f32 %v273, %v274
  %v276 = vrot.slane %v275, 2
  %v277 = vadd.f32 %v275, %v276
  %v278 = vrot.slane %v277, 1
  %v279 = vadd.f32 %v277, %v278
  %vm280 = vcmask 1040384
  %v281 = vsel %vm280, %v242, %v279
  %282 = vst [vmem:[%s3] sm:$0x3] %v281
  // Predicated region
  $region10: #{bottleneck_forward.10} parent=0 // pred_check
    _
  $region11: #{bottleneck_forward.10} parent=0 // pred_check_branch
    %284 = sbr.rel (0) target = $region13
  $region12: #{bottleneck_forward.10} parent=0 // pred_region
    _
  $region13: #{bottleneck_forward.10} parent=0 // pred_fallthru
    _
  // Predicated region
  $region14: #{bottleneck_forward.10} parent=0 // pred_check
    _
  $region15: #{bottleneck_forward.10} parent=0 // pred_check_branch
    %286 = sbr.rel (0) target = $region17
  $region16: #{bottleneck_forward.10} parent=0 // pred_region
    _
  $region17: #{bottleneck_forward.10} parent=0 // pred_fallthru
    _
  // Predicated region
  $region18: #{bottleneck_forward.10} parent=0 // pred_check
    _
  $region19: #{bottleneck_forward.10} parent=0 // pred_check_branch
    %288 = sbr.rel (0) target = $region21
  $region20: #{bottleneck_forward.10} parent=0 // pred_region
    _
  $region21: #{bottleneck_forward.10} parent=0 // pred_fallthru
    _
  // Predicated region
  $region22: #{bottleneck_forward.10} parent=0 // pred_check
    _
  $region23: #{bottleneck_forward.10} parent=0 // pred_check_branch
    %290 = sbr.rel (0) target = $region25
  $region24: #{bottleneck_forward.10} parent=0 // pred_region
    _
  $region25: #{bottleneck_forward.10} parent=0 // pred_fallthru
    _

// kernel: bottleneck_forward.11
$region0: #{bottleneck_forward.11}
  #allocation0 [shape = 'u32[]', space=smem, size = 0x4, offset = 0x4, fixed_abs, tag = 'smem constant byte address 0x4 - core index']
  #allocation1 [shape = 'u32[72,128]{1,0:T(1,128)}', space=vmem, size = 0x9000, scoped, tag = 'internal scratch']
  %s0 = inlined_call_operand.vmem [shape: bf16[128,128], index: 0, kind: input, shape index: {}]
  %s1 = inlined_call_operand.vmem [shape: f32[2,128], index: 1, kind: input, shape index: {}]
  %s2 = inlined_call_operand.vmem [shape: bf16[128,128], index: 2, kind: input, shape index: {}]
  %s3 = inlined_call_operand.vmem [shape: f32[2,128], index: 3, kind: input, shape index: {}]
  %s4 = inlined_call_operand.vmem [shape: f32[128,128], index: 4, kind: output, shape index: {0}]
  %s5 = inlined_call_operand.vmem [shape: f32[128,128], index: 5, kind: output, shape index: {1}]
  %6 = xla_tuple %s4, %s5
  %s7 = sld [smem:[#allocation0]]
  $region34: #{bottleneck_forward.11} parent=0
    _
  %s9 = ssub.s32 1, %s7
  %s10 = scalar_select 0, %s9, %s7
  // Predicated region
  $region2: #{bottleneck_forward.11} parent=0 // pred_check
    _
  $region3: #{bottleneck_forward.11} parent=0 // pred_check_branch
    %12 = sbr.rel (0) target = $region5
  $region4: #{bottleneck_forward.11} parent=0 // pred_region
    _
  $region5: #{bottleneck_forward.11} parent=0 // pred_fallthru
    _
  // Predicated region
  $region6: #{bottleneck_forward.11} parent=0 // pred_check
    _
  $region7: #{bottleneck_forward.11} parent=0 // pred_check_branch
    %14 = sbr.rel (0) target = $region9
  $region8: #{bottleneck_forward.11} parent=0 // pred_region
    _
  $region9: #{bottleneck_forward.11} parent=0 // pred_fallthru
    _
  // Predicated region
  $region10: #{bottleneck_forward.11} parent=0 // pred_check
    _
  $region11: #{bottleneck_forward.11} parent=0 // pred_check_branch
    %16 = sbr.rel (0) target = $region13
  $region12: #{bottleneck_forward.11} parent=0 // pred_region
    _
  $region13: #{bottleneck_forward.11} parent=0 // pred_fallthru
    _
  // Predicated region
  $region14: #{bottleneck_forward.11} parent=0 // pred_check
    _
  $region15: #{bottleneck_forward.11} parent=0 // pred_check_branch
    %18 = sbr.rel (0) target = $region17
  $region16: #{bottleneck_forward.11} parent=0 // pred_region
    _
  $region17: #{bottleneck_forward.11} parent=0 // pred_fallthru
    _
  %v19 = vld [vmem:[%s2] sm:$0xf]
  %v20 = vld [vmem:[%s2 + $0x4] sm:$0xf]
  %v21 = vld [vmem:[%s2 + $0x8] sm:$0xf]
  %v22 = vld [vmem:[%s2 + $0xc] sm:$0xf]
  %v23 = vld [vmem:[%s2 + $0x10] sm:$0xf]
  %v24 = vld [vmem:[%s2 + $0x14] sm:$0xf]
  %v25 = vld [vmem:[%s2 + $0x18] sm:$0xf]
  %v26 = vld [vmem:[%s2 + $0x1c] sm:$0xf]
  %v27 = vld [vmem:[%s2 + $0x20] sm:$0xf]
  %v28 = vld [vmem:[%s2 + $0x24] sm:$0xf]
  %v29 = vld [vmem:[%s2 + $0x28] sm:$0xf]
  %v30 = vld [vmem:[%s2 + $0x2c] sm:$0xf]
  %v31 = vld [vmem:[%s2 + $0x30] sm:$0xf]
  %v32 = vld [vmem:[%s2 + $0x34] sm:$0xf]
  %v33 = vld [vmem:[%s2 + $0x38] sm:$0xf]
  %v34 = vld [vmem:[%s2 + $0x3c] sm:$0xf]
  %v35 = vld [vmem:[%s3] sm:$0x1]
  %v36 = vunpack.c.l.bf16 %v19
  %v37 = vunpack.c.l.bf16 %v20
  %v38 = vunpack.c.l.bf16 %v21
  %v39 = vunpack.c.l.bf16 %v22
  %v40 = vunpack.c.l.bf16 %v23
  %v41 = vunpack.c.l.bf16 %v24
  %v42 = vunpack.c.l.bf16 %v25
  %v43 = vunpack.c.l.bf16 %v26
  %v44 = vunpack.c.l.bf16 %v27
  %v45 = vunpack.c.l.bf16 %v28
  %v46 = vunpack.c.l.bf16 %v29
  %v47 = vunpack.c.l.bf16 %v30
  %v48 = vunpack.c.l.bf16 %v31
  %v49 = vunpack.c.l.bf16 %v32
  %v50 = vunpack.c.l.bf16 %v33
  %v51 = vunpack.c.l.bf16 %v34
  %v52 = vperm.slane %v35, 0
  %v53 = vmul.f32 %v36, %v52
  %v54 = vmul.f32 %v37, %v52
  %v55 = vmul.f32 %v38, %v52
  %v56 = vmul.f32 %v39, %v52
  %v57 = vmul.f32 %v40, %v52
  %v58 = vmul.f32 %v41, %v52
  %v59 = vmul.f32 %v42, %v52
  %v60 = vmul.f32 %v43, %v52
  %v61 = vmul.f32 %v44, %v52
  %v62 = vmul.f32 %v45, %v52
  %v63 = vmul.f32 %v46, %v52
  %v64 = vmul.f32 %v47, %v52
  %v65 = vmul.f32 %v48, %v52
  %v66 = vmul.f32 %v49, %v52
  %v67 = vmul.f32 %v50, %v52
  %v68 = vmul.f32 %v51, %v52
  %v69 = vld [vmem:[%s3 + $0x1] sm:$0x1]
  %v70 = vperm.slane %v69, 0
  %v71 = vadd.f32 %v53, %v70
  %v72 = vadd.f32 %v54, %v70
  %v73 = vadd.f32 %v55, %v70
  %v74 = vadd.f32 %v56, %v70
  %v75 = vadd.f32 %v57, %v70
  %v76 = vadd.f32 %v58, %v70
  %v77 = vadd.f32 %v59, %v70
  %v78 = vadd.f32 %v60, %v70
  %v79 = vadd.f32 %v61, %v70
  %v80 = vadd.f32 %v62, %v70
  %v81 = vadd.f32 %v63, %v70
  %v82 = vadd.f32 %v64, %v70
  %v83 = vadd.f32 %v65, %v70
  %v84 = vadd.f32 %v66, %v70
  %v85 = vadd.f32 %v67, %v70
  %v86 = vadd.f32 %v68, %v70
  %v87 = vld [vmem:[%s0] sm:$0xf]
  %v88 = vld [vmem:[%s0 + $0x4] sm:$0xf]
  %v89 = vld [vmem:[%s0 + $0x8] sm:$0xf]
  %v90 = vld [vmem:[%s0 + $0xc] sm:$0xf]
  %v91 = vld [vmem:[%s0 + $0x10] sm:$0xf]
  %v92 = vld [vmem:[%s0 + $0x14] sm:$0xf]
  %v93 = vld [vmem:[%s0 + $0x18] sm:$0xf]
  %v94 = vld [vmem:[%s0 + $0x1c] sm:$0xf]
  %v95 = vld [vmem:[%s0 + $0x20] sm:$0xf]
  %v96 = vld [vmem:[%s0 + $0x24] sm:$0xf]
  %v97 = vld [vmem:[%s0 + $0x28] sm:$0xf]
  %v98 = vld [vmem:[%s0 + $0x2c] sm:$0xf]
  %v99 = vld [vmem:[%s0 + $0x30] sm:$0xf]
  %v100 = vld [vmem:[%s0 + $0x34] sm:$0xf]
  %v101 = vld [vmem:[%s0 + $0x38] sm:$0xf]
  %v102 = vld [vmem:[%s0 + $0x3c] sm:$0xf]
  %v103 = vld [vmem:[%s1] sm:$0x1]
  %v104 = vunpack.c.l.bf16 %v87
  %v105 = vunpack.c.l.bf16 %v88
  %v106 = vunpack.c.l.bf16 %v89
  %v107 = vunpack.c.l.bf16 %v90
  %v108 = vunpack.c.l.bf16 %v91
  %v109 = vunpack.c.l.bf16 %v92
  %v110 = vunpack.c.l.bf16 %v93
  %v111 = vunpack.c.l.bf16 %v94
  %v112 = vunpack.c.l.bf16 %v95
  %v113 = vunpack.c.l.bf16 %v96
  %v114 = vunpack.c.l.bf16 %v97
  %v115 = vunpack.c.l.bf16 %v98
  %v116 = vunpack.c.l.bf16 %v99
  %v117 = vunpack.c.l.bf16 %v100
  %v118 = vunpack.c.l.bf16 %v101
  %v119 = vunpack.c.l.bf16 %v102
  %v120 = vperm.slane %v103, 0
  %v121 = vmul.f32 %v104, %v120
  %v122 = vmul.f32 %v105, %v120
  %v123 = vmul.f32 %v106, %v120
  %v124 = vmul.f32 %v107, %v120
  %v125 = vmul.f32 %v108, %v120
  %v126 = vmul.f32 %v109, %v120
  %v127 = vmul.f32 %v110, %v120
  %v128 = vmul.f32 %v111, %v120
  %v129 = vmul.f32 %v112, %v120
  %v130 = vmul.f32 %v113, %v120
  %v131 = vmul.f32 %v114, %v120
  %v132 = vmul.f32 %v115, %v120
  %v133 = vmul.f32 %v116, %v120
  %v134 = vmul.f32 %v117, %v120
  %v135 = vmul.f32 %v118, %v120
  %v136 = vmul.f32 %v119, %v120
  %v137 = vld [vmem:[%s1 + $0x1] sm:$0x1]
  %v138 = vperm.slane %v137, 0
  %v139 = vadd.f32 %v121, %v138
  %v140 = vadd.f32 %v122, %v138
  %v141 = vadd.f32 %v123, %v138
  %v142 = vadd.f32 %v124, %v138
  %v143 = vadd.f32 %v125, %v138
  %v144 = vadd.f32 %v126, %v138
  %v145 = vadd.f32 %v127, %v138
  %v146 = vadd.f32 %v128, %v138
  %v147 = vadd.f32 %v129, %v138
  %v148 = vadd.f32 %v130, %v138
  %v149 = vadd.f32 %v131, %v138
  %v150 = vadd.f32 %v132, %v138
  %v151 = vadd.f32 %v133, %v138
  %v152 = vadd.f32 %v134, %v138
  %v153 = vadd.f32 %v135, %v138
  %v154 = vadd.f32 %v136, %v138
  %v155 = vadd.f32 %v139, %v71
  %v156 = vadd.f32 %v140, %v72
  %v157 = vadd.f32 %v141, %v73
  %v158 = vadd.f32 %v142, %v74
  %v159 = vadd.f32 %v143, %v75
  %v160 = vadd.f32 %v144, %v76
  %v161 = vadd.f32 %v145, %v77
  %v162 = vadd.f32 %v146, %v78
  %v163 = vadd.f32 %v147, %v79
  %v164 = vadd.f32 %v148, %v80
  %v165 = vadd.f32 %v149, %v81
  %v166 = vadd.f32 %v150, %v82
  %v167 = vadd.f32 %v151, %v83
  %v168 = vadd.f32 %v152, %v84
  %v169 = vadd.f32 %v153, %v85
  %v170 = vadd.f32 %v154, %v86
  %171 = vst [vmem:[%s5] sm:$0xff] %v155
  %172 = vst [vmem:[%s5 + $0x8] sm:$0xff] %v156
  %173 = vst [vmem:[%s5 + $0x10] sm:$0xff] %v157
  %174 = vst [vmem:[%s5 + $0x18] sm:$0xff] %v158
  %175 = vst [vmem:[%s5 + $0x20] sm:$0xff] %v159
  %176 = vst [vmem:[%s5 + $0x28] sm:$0xff] %v160
  %177 = vst [vmem:[%s5 + $0x30] sm:$0xff] %v161
  %178 = vst [vmem:[%s5 + $0x38] sm:$0xff] %v162
  %179 = vst [vmem:[%s5 + $0x40] sm:$0xff] %v163
  %180 = vst [vmem:[%s5 + $0x48] sm:$0xff] %v164
  %181 = vst [vmem:[%s5 + $0x50] sm:$0xff] %v165
  %182 = vst [vmem:[%s5 + $0x58] sm:$0xff] %v166
  %183 = vst [vmem:[%s5 + $0x60] sm:$0xff] %v167
  %184 = vst [vmem:[%s5 + $0x68] sm:$0xff] %v168
  %185 = vst [vmem:[%s5 + $0x70] sm:$0xff] %v169
  %186 = vst [vmem:[%s5 + $0x78] sm:$0xff] %v170
  %v187 = vmax.f32 %v155, 0.0
  %v188 = vmax.f32 %v156, 0.0
  %v189 = vmax.f32 %v157, 0.0
  %v190 = vmax.f32 %v158, 0.0
  %v191 = vmax.f32 %v159, 0.0
  %v192 = vmax.f32 %v160, 0.0
  %v193 = vmax.f32 %v161, 0.0
  %v194 = vmax.f32 %v162, 0.0
  %v195 = vmax.f32 %v163, 0.0
  %v196 = vmax.f32 %v164, 0.0
  %v197 = vmax.f32 %v165, 0.0
  %v198 = vmax.f32 %v166, 0.0
  %v199 = vmax.f32 %v167, 0.0
  %v200 = vmax.f32 %v168, 0.0
  %v201 = vmax.f32 %v169, 0.0
  %v202 = vmax.f32 %v170, 0.0
  %203 = vst [vmem:[%s4] sm:$0xff] %v187
  %204 = vst [vmem:[%s4 + $0x8] sm:$0xff] %v188
  %205 = vst [vmem:[%s4 + $0x10] sm:$0xff] %v189
  %206 = vst [vmem:[%s4 + $0x18] sm:$0xff] %v190
  %207 = vst [vmem:[%s4 + $0x20] sm:$0xff] %v191
  %208 = vst [vmem:[%s4 + $0x28] sm:$0xff] %v192
  %209 = vst [vmem:[%s4 + $0x30] sm:$0xff] %v193
  %210 = vst [vmem:[%s4 + $0x38] sm:$0xff] %v194
  %211 = vst [vmem:[%s4 + $0x40] sm:$0xff] %v195
  %212 = vst [vmem:[%s4 + $0x48] sm:$0xff] %v196
  %213 = vst [vmem:[%s4 + $0x50] sm:$0xff] %v197
  %214 = vst [vmem:[%s4 + $0x58] sm:$0xff] %v198
  %215 = vst [vmem:[%s4 + $0x60] sm:$0xff] %v199
  %216 = vst [vmem:[%s4 + $0x68] sm:$0xff] %v200
  %217 = vst [vmem:[%s4 + $0x70] sm:$0xff] %v201
  %218 = vst [vmem:[%s4 + $0x78] sm:$0xff] %v202
  // Predicated region
  $region18: #{bottleneck_forward.11} parent=0 // pred_check
    _
  $region19: #{bottleneck_forward.11} parent=0 // pred_check_branch
    %220 = sbr.rel (0) target = $region21
  $region20: #{bottleneck_forward.11} parent=0 // pred_region
    _
  $region21: #{bottleneck_forward.11} parent=0 // pred_fallthru
    _
  // Predicated region
  $region22: #{bottleneck_forward.11} parent=0 // pred_check
    _
  $region23: #{bottleneck_forward.11} parent=0 // pred_check_branch
    %222 = sbr.rel (0) target = $region25
  $region24: #{bottleneck_forward.11} parent=0 // pred_region
    _
  $region25: #{bottleneck_forward.11} parent=0 // pred_fallthru
    _
  // Predicated region
  $region26: #{bottleneck_forward.11} parent=0 // pred_check
    _
  $region27: #{bottleneck_forward.11} parent=0 // pred_check_branch
    %224 = sbr.rel (0) target = $region29
  $region28: #{bottleneck_forward.11} parent=0 // pred_region
    _
  $region29: #{bottleneck_forward.11} parent=0 // pred_fallthru
    _
  // Predicated region
  $region30: #{bottleneck_forward.11} parent=0 // pred_check
    _
  $region31: #{bottleneck_forward.11} parent=0 // pred_check_branch
    %226 = sbr.rel (0) target = $region33
  $region32: #{bottleneck_forward.11} parent=0 // pred_region
    _
  $region33: #{bottleneck_forward.11} parent=0 // pred_fallthru
    _

</llo_original>
